<compile_context>
chip_gen: v7x
topology: tpu7x:2x2x1
jax: 0.10.0
libtpu: 0.0.40
codegen_flags: <defaults>
</compile_context>

<pallas_src>
import functools

import jax
import jax.numpy as jnp
from jax import lax
from jax.experimental import pallas as pl
from jax.experimental.pallas import tpu as pltpu


# ---------------------------------------------------------------------------
# helpers
# ---------------------------------------------------------------------------
def _pick_tile(total, unit, target_elems):
    """Largest divisor d of `total` such that d*unit <= target_elems and the
    resulting block last-dim (d*unit) is lane-dense (multiple of 128).
    Falls back to the full extent (block == full array dim, always legal)."""
    best = None
    for d in range(1, total + 1):
        if total % d:
            continue
        size = d * unit
        if size <= target_elems and size % 128 == 0:
            best = d
    return best if best is not None else total


def _compiler_params(dim_sems, vmem_est_bytes):
    kwargs = dict(dimension_semantics=dim_sems)
    if vmem_est_bytes > (12 << 20):          # above conservative v5e default
        # leave headroom, stay below v7x's 64 MiB / TC physical VMEM
        kwargs["vmem_limit_bytes"] = int(min(vmem_est_bytes + (8 << 20), 60 << 20))
    return pltpu.CompilerParams(**kwargs)


# ---------------------------------------------------------------------------
# Pallas kernels
# ---------------------------------------------------------------------------
def _conv_relu_stats_kernel(x_ref, w_ref, b_ref, y_ref, sum_ref, sq_ref, *,
                            kh, kw, stride, th, wo):
    """One (batch, row-tile) grid step.

    x_ref   : (1, Hp, Wp, Cin)    bf16 padded NHWC image (resident across tiles)
    w_ref   : (kh, kw, Cout, Cin) bf16
    b_ref   : (Cout, 1)           f32
    y_ref   : (1, Cout, TH*Wo)    f32 conv+bias+ReLU output (lane-dense)
    sum_ref : (1, 1, Cout, 1)     f32 per-tile BN partial sum
    sq_ref  : (1, 1, Cout, 1)     f32 per-tile BN partial sum of squares
    """
    i = pl.program_id(1)
    row0 = i * (th * stride)
    cout = w_ref.shape[2]
    cin = x_ref.shape[3]
    two = th * wo

    acc = jnp.zeros((cout, two), jnp.float32)
    for ky in range(kh):                     # static 3x3 -> 9 unrolled MXU taps
        for kx in range(kw):
            if stride == 1:
                patch = x_ref[0, pl.ds(row0 + ky, th), pl.ds(kx, wo), :]
            else:
                patch = x_ref[0, pl.ds(row0 + ky, th, stride),
                              pl.ds(kx, wo, stride), :]
            patch = patch.reshape(two, cin)                    # (TH*Wo, Cin)
            # (Cout, Cin) x (TH*Wo, Cin)^T -> (Cout, TH*Wo), f32 accumulation
            acc = acc + lax.dot_general(
                w_ref[ky, kx], patch,
                dimension_numbers=(((1,), (1,)), ((), ())),
                preferred_element_type=jnp.float32)

    y = jnp.maximum(acc + b_ref[...], 0.0)                     # bias + ReLU (f32)
    y_ref[0] = y.astype(y_ref.dtype)
    sum_ref[0, 0] = jnp.sum(y, axis=1, keepdims=True)          # (Cout, 1)
    sq_ref[0, 0] = jnp.sum(y * y, axis=1, keepdims=True)


def _bn_apply_kernel(y_ref, scale_ref, shift_ref, o_ref):
    """Tiled BatchNorm apply: o = y * scale[c] + shift[c] (all f32)."""
    o_ref[0] = (y_ref[0] * scale_ref[...] + shift_ref[...]).astype(o_ref.dtype)


# ---------------------------------------------------------------------------
# Forward wrapper (Conv2d + optional pad + ReLU + BatchNorm2d, training stats)
# ---------------------------------------------------------------------------
def rbdn_conv_forward(x_nchw, weight, bias, gamma, beta, *,
                      stride=1, padding=1, eps=1e-5, output_size=None):
    N, Cin, H, W = x_nchw.shape
    Cout, _, kh, kw = weight.shape
    Ho = (H + 2 * padding - kh) // stride + 1
    Wo = (W + 2 * padding - kw) // stride + 1
    Hp, Wp = H + 2 * padding, W + 2 * padding

    # --- glue: NCHW -> padded NHWC, bf16 operands for the MXU -----------------
    x = jnp.transpose(x_nchw, (0, 2, 3, 1)).astype(jnp.bfloat16)
    xp = jnp.pad(x, ((0, 0), (padding, padding), (padding, padding), (0, 0)))
    # weight (Cout,Cin,kh,kw) -> (kh,kw,Cout,Cin): each tap is a ready (Cout,Cin)
    w_t = jnp.transpose(weight, (2, 3, 0, 1)).astype(jnp.bfloat16)
    b_col = bias.reshape(Cout, 1).astype(jnp.float32)

    # --- row tiling: TH output rows per grid step, lane-dense TH*Wo -----------
    target_two = max(128, min(Ho * Wo, (2 << 20) // max(1, 4 * Cout)))
    TH = _pick_tile(Ho, Wo, target_two)
    n_tiles = Ho // TH
    TWO = TH * Wo

    vmem_est1 = 2 * (Hp * Wp * Cin * 2 + kh * kw * Cout * Cin * 2
                     + Cout * 4 + Cout * TWO * 4 + 4 * Cout * 4)

    # --- kernel #1: fused conv + bias + ReLU + BN partial stats ---------------
    y_conv, tsum, tsq = pl.pallas_call(
        functools.partial(_conv_relu_stats_kernel,
                          kh=kh, kw=kw, stride=stride, th=TH, wo=Wo),
        out_shape=(
            jax.ShapeDtypeStruct((N, Cout, Ho * Wo), jnp.float32),
            jax.ShapeDtypeStruct((N, n_tiles, Cout, 1), jnp.float32),
            jax.ShapeDtypeStruct((N, n_tiles, Cout, 1), jnp.float32),
        ),
        grid_spec=pltpu.PrefetchScalarGridSpec(
            num_scalar_prefetch=0,
            grid=(N, n_tiles),
            in_specs=[
                # full padded image: constant index along the row-tile axis
                # -> fetched once per image, reused by every row tile.
                pl.BlockSpec((1, Hp, Wp, Cin), lambda n, i: (n, 0, 0, 0)),
                pl.BlockSpec((kh, kw, Cout, Cin), lambda n, i: (0, 0, 0, 0)),
                pl.BlockSpec((Cout, 1), lambda n, i: (0, 0)),
            ],
            out_specs=[
                pl.BlockSpec((1, Cout, TWO), lambda n, i: (n, 0, i)),
                pl.BlockSpec((1, 1, Cout, 1), lambda n, i: (n, i, 0, 0)),
                pl.BlockSpec((1, 1, Cout, 1), lambda n, i: (n, i, 0, 0)),
            ],
        ),
        compiler_params=_compiler_params(("parallel", "parallel"), vmem_est1),
    )(xp, w_t, b_col)

    # --- optional right/bottom pad to output_size (torch: conv->pad->relu->bn;
    #     ReLU(0)=0 so relu-before-pad is equivalent; pad zeros DO count in the
    #     BN statistics denominator and add 0 to the partial sums). ------------
    Ho_out, Wo_out = Ho, Wo
    if output_size is not None and (Ho, Wo) != tuple(output_size):
        Ho_out, Wo_out = output_size
        y4 = y_conv.reshape(N, Cout, Ho, Wo)
        y4 = jnp.pad(y4, ((0, 0), (0, 0), (0, Ho_out - Ho), (0, Wo_out - Wo)))
        y_conv = y4.reshape(N, Cout, Ho_out * Wo_out)
        # TODO(synk): fold this pad into the normalize kernel's out_spec
        # index_map to avoid the extra HBM copy of the activation.

    # --- BN stats from fused per-tile partials (tiny glue) --------------------
    count = N * Ho_out * Wo_out
    ch_sum = jnp.sum(tsum, axis=(0, 1))[:, 0]                    # (Cout,)
    ch_sq = jnp.sum(tsq, axis=(0, 1))[:, 0]
    mean = ch_sum / count
    var = jnp.maximum(ch_sq / count - mean * mean, 0.0)          # biased variance
    inv = lax.rsqrt(var + eps)
    g32 = gamma.astype(jnp.float32)
    scale = (g32 * inv).reshape(Cout, 1)
    shift = (beta.astype(jnp.float32) - mean * g32 * inv).reshape(Cout, 1)

    # --- kernel #2: tiled, lane-dense BatchNorm apply --------------------------
    L = Ho_out * Wo_out
    target_tl = max(128, min(L, (4 << 20) // max(1, 8 * Cout)))
    TL = _pick_tile(L, 1, target_tl)
    vmem_est2 = 2 * (2 * Cout * TL * 4 + 2 * Cout * 4)
    out = pl.pallas_call(
        _bn_apply_kernel,
        out_shape=jax.ShapeDtypeStruct((N, Cout, L), jnp.float32),
        grid_spec=pltpu.PrefetchScalarGridSpec(
            num_scalar_prefetch=0,
            grid=(N, L // TL),
            in_specs=[
                pl.BlockSpec((1, Cout, TL), lambda n, j: (n, 0, j)),
                pl.BlockSpec((Cout, 1), lambda n, j: (0, 0)),
                pl.BlockSpec((Cout, 1), lambda n, j: (0, 0)),
            ],
            out_specs=pl.BlockSpec((1, Cout, TL), lambda n, j: (n, 0, j)),
        ),
        compiler_params=_compiler_params(("parallel", "parallel"), vmem_est2),
    )(y_conv, scale, shift)

    return out.reshape(N, Cout, Ho_out, Wo_out)                  # NCHW, no transpose


# ---------------------------------------------------------------------------
# Pure-JAX reference (mirrors the PyTorch module)
# ---------------------------------------------------------------------------
def rbdn_conv_reference(x, weight, bias, gamma, beta, *, stride, padding,
                        eps=1e-5, output_size=None):
    y = lax.conv_general_dilated(
        x.astype(jnp.float32), weight.astype(jnp.float32),
        window_strides=(stride, stride),
        padding=[(padding, padding), (padding, padding)],
        dimension_numbers=("NCHW", "OIHW", "NCHW"))
    y = y + bias.reshape(1, -1, 1, 1).astype(jnp.float32)
    if output_size is not None and tuple(y.shape[-2:]) != tuple(output_size):
        y = jnp.pad(y, ((0, 0), (0, 0),
                        (0, output_size[0] - y.shape[-2]),
                        (0, output_size[1] - y.shape[-1])))
    y = jnp.maximum(y, 0.0)                                      # ReLU
    mean = jnp.mean(y, axis=(0, 2, 3), keepdims=True)
    var = jnp.mean((y - mean) ** 2, axis=(0, 2, 3), keepdims=True)   # biased
    return (y - mean) * lax.rsqrt(var + eps) * gamma.reshape(1, -1, 1, 1) \
        + beta.reshape(1, -1, 1, 1)


# ---------------------------------------------------------------------------
if __name__ == "__main__":
    # RBDNConv(in_channels=4, out_channels=8, kernel_size=3, stride=1, padding=1,
    #          activation='relu', batch_norm=True, transposed=False)
    N, Cin, H, W = 2, 4, 16, 16
    Cout, k, stride, padding = 8, 3, 1, 1

    key = jax.random.PRNGKey(0)
    kx, kw_, kb, kg, kbe = jax.random.split(key, 5)
    x = jax.random.normal(kx, (N, Cin, H, W), dtype=jnp.float32)
    fan_in = Cin * k * k
    bound = 1.0 / (fan_in ** 0.5)
    weight = jax.random.uniform(kw_, (Cout, Cin, k, k), jnp.float32, -bound, bound)
    bias = jax.random.uniform(kb, (Cout,), jnp.float32, -bound, bound)
    gamma = 1.0 + 0.1 * jax.random.normal(kg, (Cout,), jnp.float32)
    beta = 0.1 * jax.random.normal(kbe, (Cout,), jnp.float32)

    fwd = jax.jit(functools.partial(rbdn_conv_forward,
                                    stride=stride, padding=padding,
                                    output_size=None))
    out = jax.block_until_ready(fwd(x, weight, bias, gamma, beta))
    assert out.shape == (N, Cout, H, W), out.shape

    # Compare against an f32 reference fed with the same bf16-rounded matmul
    # operands the kernel uses (bias / ReLU / BN math is f32 in both paths).
    x_q = x.astype(jnp.bfloat16).astype(jnp.float32)
    w_q = weight.astype(jnp.bfloat16).astype(jnp.float32)
    ref = jax.block_until_ready(
        rbdn_conv_reference(x_q, w_q, bias, gamma, beta,
                            stride=stride, padding=padding))
    max_err = float(jnp.max(jnp.abs(out - ref)))
    assert jnp.allclose(out, ref, rtol=2e-3, atol=2e-3), max_err

    # TODO(synk): transposed=True (ConvTranspose2d) branch not implemented;
    # this script covers the Conv2d + ReLU + BatchNorm2d configuration.
    print("KERNEL_OK")
</pallas_src>

<mosaic_0001>
module attributes {stable_mosaic.version = 11 : i64} {
  func.func @_conv_relu_stats_kernel(%arg0: i32, %arg1: i32, %arg2: memref<1x18x18x4xbf16, #tpu.memory_space<vmem>>, %arg3: memref<3x3x8x4xbf16, #tpu.memory_space<vmem>>, %arg4: memref<8x1xf32, #tpu.memory_space<vmem>>, %arg5: memref<1x8x256xf32, #tpu.memory_space<vmem>>, %arg6: memref<1x1x8x1xf32, #tpu.memory_space<vmem>>, %arg7: memref<1x1x8x1xf32, #tpu.memory_space<vmem>>) attributes {dimension_semantics = [#tpu.dimension_semantics<parallel>, #tpu.dimension_semantics<parallel>], iteration_bounds = array<i64: 2, 1>, scalar_prefetch = 0 : i64, scratch_operands = 0 : i64, tpu.core_type = #tpu.core_type<tc>, window_params = [{transform_indices = @transform_0, window_bounds = array<i64: 1, 18, 18, 4>}, {pipeline_mode = #tpu.pipeline_mode<synchronous>, transform_indices = @transform_1, window_bounds = array<i64: 3, 3, 8, 4>}, {pipeline_mode = #tpu.pipeline_mode<synchronous>, transform_indices = @transform_2, window_bounds = array<i64: 8, 1>}, {transform_indices = @transform_3, window_bounds = array<i64: 1, 8, 256>}, {transform_indices = @transform_4, window_bounds = array<i64: 1, 1, 8, 1>}, {transform_indices = @transform_5, window_bounds = array<i64: 1, 1, 8, 1>}]} {
    %c16_i32 = arith.constant 16 : i32
    %0 = arith.muli %arg1, %c16_i32 : i32
    %cst = arith.constant 0.000000e+00 : f32
    %1 = vector.broadcast %cst : f32 to vector<8x256xf32>
    %c0_i32 = arith.constant 0 : i32
    %2 = arith.addi %0, %c0_i32 : i32
    %c0 = arith.constant 0 : index
    %3 = arith.index_cast %2 : i32 to index
    %c0_0 = arith.constant 0 : index
    %c0_1 = arith.constant 0 : index
    %4 = vector.load %arg2[%c0, %3, %c0_0, %c0_1] : memref<1x18x18x4xbf16, #tpu.memory_space<vmem>>, vector<1x16x16x4xbf16>
    %5 = vector.shape_cast %4 : vector<1x16x16x4xbf16> to vector<16x16x4xbf16>
    %6 = vector.shape_cast %5 : vector<16x16x4xbf16> to vector<256x4xbf16>
    %c0_2 = arith.constant 0 : index
    %c0_3 = arith.constant 0 : index
    %c0_4 = arith.constant 0 : index
    %c0_5 = arith.constant 0 : index
    %7 = vector.load %arg3[%c0_2, %c0_3, %c0_4, %c0_5] : memref<3x3x8x4xbf16, #tpu.memory_space<vmem>>, vector<1x1x8x4xbf16>
    %8 = vector.shape_cast %7 : vector<1x1x8x4xbf16> to vector<8x4xbf16>
    %cst_6 = arith.constant dense<0.000000e+00> : vector<8x256xf32>
    %9 = tpu.matmul %8, %6, %cst_6 {dimension_numbers = #tpu.dot_dimension_numbers<[1], [1], [0], [0], [0, 0, 1, 0], [], []>} : vector<8x4xbf16>, vector<256x4xbf16>, vector<8x256xf32> -> vector<8x256xf32>
    %10 = arith.addf %1, %9 : vector<8x256xf32>
    %c0_i32_7 = arith.constant 0 : i32
    %11 = arith.addi %0, %c0_i32_7 : i32
    %c0_8 = arith.constant 0 : index
    %12 = arith.index_cast %11 : i32 to index
    %c1 = arith.constant 1 : index
    %c0_9 = arith.constant 0 : index
    %13 = vector.load %arg2[%c0_8, %12, %c1, %c0_9] : memref<1x18x18x4xbf16, #tpu.memory_space<vmem>>, vector<1x16x16x4xbf16>
    %14 = vector.shape_cast %13 : vector<1x16x16x4xbf16> to vector<16x16x4xbf16>
    %15 = vector.shape_cast %14 : vector<16x16x4xbf16> to vector<256x4xbf16>
    %c0_10 = arith.constant 0 : index
    %c1_11 = arith.constant 1 : index
    %c0_12 = arith.constant 0 : index
    %c0_13 = arith.constant 0 : index
    %16 = vector.load %arg3[%c0_10, %c1_11, %c0_12, %c0_13] : memref<3x3x8x4xbf16, #tpu.memory_space<vmem>>, vector<1x1x8x4xbf16>
    %17 = vector.shape_cast %16 : vector<1x1x8x4xbf16> to vector<8x4xbf16>
    %cst_14 = arith.constant dense<0.000000e+00> : vector<8x256xf32>
    %18 = tpu.matmul %17, %15, %cst_14 {dimension_numbers = #tpu.dot_dimension_numbers<[1], [1], [0], [0], [0, 0, 1, 0], [], []>} : vector<8x4xbf16>, vector<256x4xbf16>, vector<8x256xf32> -> vector<8x256xf32>
    %19 = arith.addf %10, %18 : vector<8x256xf32>
    %c0_i32_15 = arith.constant 0 : i32
    %20 = arith.addi %0, %c0_i32_15 : i32
    %c0_16 = arith.constant 0 : index
    %21 = arith.index_cast %20 : i32 to index
    %c2 = arith.constant 2 : index
    %c0_17 = arith.constant 0 : index
    %22 = vector.load %arg2[%c0_16, %21, %c2, %c0_17] : memref<1x18x18x4xbf16, #tpu.memory_space<vmem>>, vector<1x16x16x4xbf16>
    %23 = vector.shape_cast %22 : vector<1x16x16x4xbf16> to vector<16x16x4xbf16>
    %24 = vector.shape_cast %23 : vector<16x16x4xbf16> to vector<256x4xbf16>
    %c0_18 = arith.constant 0 : index
    %c2_19 = arith.constant 2 : index
    %c0_20 = arith.constant 0 : index
    %c0_21 = arith.constant 0 : index
    %25 = vector.load %arg3[%c0_18, %c2_19, %c0_20, %c0_21] : memref<3x3x8x4xbf16, #tpu.memory_space<vmem>>, vector<1x1x8x4xbf16>
    %26 = vector.shape_cast %25 : vector<1x1x8x4xbf16> to vector<8x4xbf16>
    %cst_22 = arith.constant dense<0.000000e+00> : vector<8x256xf32>
    %27 = tpu.matmul %26, %24, %cst_22 {dimension_numbers = #tpu.dot_dimension_numbers<[1], [1], [0], [0], [0, 0, 1, 0], [], []>} : vector<8x4xbf16>, vector<256x4xbf16>, vector<8x256xf32> -> vector<8x256xf32>
    %28 = arith.addf %19, %27 : vector<8x256xf32>
    %c1_i32 = arith.constant 1 : i32
    %29 = arith.addi %0, %c1_i32 : i32
    %c0_23 = arith.constant 0 : index
    %30 = arith.index_cast %29 : i32 to index
    %c0_24 = arith.constant 0 : index
    %c0_25 = arith.constant 0 : index
    %31 = vector.load %arg2[%c0_23, %30, %c0_24, %c0_25] : memref<1x18x18x4xbf16, #tpu.memory_space<vmem>>, vector<1x16x16x4xbf16>
    %32 = vector.shape_cast %31 : vector<1x16x16x4xbf16> to vector<16x16x4xbf16>
    %33 = vector.shape_cast %32 : vector<16x16x4xbf16> to vector<256x4xbf16>
    %c1_26 = arith.constant 1 : index
    %c0_27 = arith.constant 0 : index
    %c0_28 = arith.constant 0 : index
    %c0_29 = arith.constant 0 : index
    %34 = vector.load %arg3[%c1_26, %c0_27, %c0_28, %c0_29] : memref<3x3x8x4xbf16, #tpu.memory_space<vmem>>, vector<1x1x8x4xbf16>
    %35 = vector.shape_cast %34 : vector<1x1x8x4xbf16> to vector<8x4xbf16>
    %cst_30 = arith.constant dense<0.000000e+00> : vector<8x256xf32>
    %36 = tpu.matmul %35, %33, %cst_30 {dimension_numbers = #tpu.dot_dimension_numbers<[1], [1], [0], [0], [0, 0, 1, 0], [], []>} : vector<8x4xbf16>, vector<256x4xbf16>, vector<8x256xf32> -> vector<8x256xf32>
    %37 = arith.addf %28, %36 : vector<8x256xf32>
    %c1_i32_31 = arith.constant 1 : i32
    %38 = arith.addi %0, %c1_i32_31 : i32
    %c0_32 = arith.constant 0 : index
    %39 = arith.index_cast %38 : i32 to index
    %c1_33 = arith.constant 1 : index
    %c0_34 = arith.constant 0 : index
    %40 = vector.load %arg2[%c0_32, %39, %c1_33, %c0_34] : memref<1x18x18x4xbf16, #tpu.memory_space<vmem>>, vector<1x16x16x4xbf16>
    %41 = vector.shape_cast %40 : vector<1x16x16x4xbf16> to vector<16x16x4xbf16>
    %42 = vector.shape_cast %41 : vector<16x16x4xbf16> to vector<256x4xbf16>
    %c1_35 = arith.constant 1 : index
    %c1_36 = arith.constant 1 : index
    %c0_37 = arith.constant 0 : index
    %c0_38 = arith.constant 0 : index
    %43 = vector.load %arg3[%c1_35, %c1_36, %c0_37, %c0_38] : memref<3x3x8x4xbf16, #tpu.memory_space<vmem>>, vector<1x1x8x4xbf16>
    %44 = vector.shape_cast %43 : vector<1x1x8x4xbf16> to vector<8x4xbf16>
    %cst_39 = arith.constant dense<0.000000e+00> : vector<8x256xf32>
    %45 = tpu.matmul %44, %42, %cst_39 {dimension_numbers = #tpu.dot_dimension_numbers<[1], [1], [0], [0], [0, 0, 1, 0], [], []>} : vector<8x4xbf16>, vector<256x4xbf16>, vector<8x256xf32> -> vector<8x256xf32>
    %46 = arith.addf %37, %45 : vector<8x256xf32>
    %c1_i32_40 = arith.constant 1 : i32
    %47 = arith.addi %0, %c1_i32_40 : i32
    %c0_41 = arith.constant 0 : index
    %48 = arith.index_cast %47 : i32 to index
    %c2_42 = arith.constant 2 : index
    %c0_43 = arith.constant 0 : index
    %49 = vector.load %arg2[%c0_41, %48, %c2_42, %c0_43] : memref<1x18x18x4xbf16, #tpu.memory_space<vmem>>, vector<1x16x16x4xbf16>
    %50 = vector.shape_cast %49 : vector<1x16x16x4xbf16> to vector<16x16x4xbf16>
    %51 = vector.shape_cast %50 : vector<16x16x4xbf16> to vector<256x4xbf16>
    %c1_44 = arith.constant 1 : index
    %c2_45 = arith.constant 2 : index
    %c0_46 = arith.constant 0 : index
    %c0_47 = arith.constant 0 : index
    %52 = vector.load %arg3[%c1_44, %c2_45, %c0_46, %c0_47] : memref<3x3x8x4xbf16, #tpu.memory_space<vmem>>, vector<1x1x8x4xbf16>
    %53 = vector.shape_cast %52 : vector<1x1x8x4xbf16> to vector<8x4xbf16>
    %cst_48 = arith.constant dense<0.000000e+00> : vector<8x256xf32>
    %54 = tpu.matmul %53, %51, %cst_48 {dimension_numbers = #tpu.dot_dimension_numbers<[1], [1], [0], [0], [0, 0, 1, 0], [], []>} : vector<8x4xbf16>, vector<256x4xbf16>, vector<8x256xf32> -> vector<8x256xf32>
    %55 = arith.addf %46, %54 : vector<8x256xf32>
    %c2_i32 = arith.constant 2 : i32
    %56 = arith.addi %0, %c2_i32 : i32
    %c0_49 = arith.constant 0 : index
    %57 = arith.index_cast %56 : i32 to index
    %c0_50 = arith.constant 0 : index
    %c0_51 = arith.constant 0 : index
    %58 = vector.load %arg2[%c0_49, %57, %c0_50, %c0_51] : memref<1x18x18x4xbf16, #tpu.memory_space<vmem>>, vector<1x16x16x4xbf16>
    %59 = vector.shape_cast %58 : vector<1x16x16x4xbf16> to vector<16x16x4xbf16>
    %60 = vector.shape_cast %59 : vector<16x16x4xbf16> to vector<256x4xbf16>
    %c2_52 = arith.constant 2 : index
    %c0_53 = arith.constant 0 : index
    %c0_54 = arith.constant 0 : index
    %c0_55 = arith.constant 0 : index
    %61 = vector.load %arg3[%c2_52, %c0_53, %c0_54, %c0_55] : memref<3x3x8x4xbf16, #tpu.memory_space<vmem>>, vector<1x1x8x4xbf16>
    %62 = vector.shape_cast %61 : vector<1x1x8x4xbf16> to vector<8x4xbf16>
    %cst_56 = arith.constant dense<0.000000e+00> : vector<8x256xf32>
    %63 = tpu.matmul %62, %60, %cst_56 {dimension_numbers = #tpu.dot_dimension_numbers<[1], [1], [0], [0], [0, 0, 1, 0], [], []>} : vector<8x4xbf16>, vector<256x4xbf16>, vector<8x256xf32> -> vector<8x256xf32>
    %64 = arith.addf %55, %63 : vector<8x256xf32>
    %c2_i32_57 = arith.constant 2 : i32
    %65 = arith.addi %0, %c2_i32_57 : i32
    %c0_58 = arith.constant 0 : index
    %66 = arith.index_cast %65 : i32 to index
    %c1_59 = arith.constant 1 : index
    %c0_60 = arith.constant 0 : index
    %67 = vector.load %arg2[%c0_58, %66, %c1_59, %c0_60] : memref<1x18x18x4xbf16, #tpu.memory_space<vmem>>, vector<1x16x16x4xbf16>
    %68 = vector.shape_cast %67 : vector<1x16x16x4xbf16> to vector<16x16x4xbf16>
    %69 = vector.shape_cast %68 : vector<16x16x4xbf16> to vector<256x4xbf16>
    %c2_61 = arith.constant 2 : index
    %c1_62 = arith.constant 1 : index
    %c0_63 = arith.constant 0 : index
    %c0_64 = arith.constant 0 : index
    %70 = vector.load %arg3[%c2_61, %c1_62, %c0_63, %c0_64] : memref<3x3x8x4xbf16, #tpu.memory_space<vmem>>, vector<1x1x8x4xbf16>
    %71 = vector.shape_cast %70 : vector<1x1x8x4xbf16> to vector<8x4xbf16>
    %cst_65 = arith.constant dense<0.000000e+00> : vector<8x256xf32>
    %72 = tpu.matmul %71, %69, %cst_65 {dimension_numbers = #tpu.dot_dimension_numbers<[1], [1], [0], [0], [0, 0, 1, 0], [], []>} : vector<8x4xbf16>, vector<256x4xbf16>, vector<8x256xf32> -> vector<8x256xf32>
    %73 = arith.addf %64, %72 : vector<8x256xf32>
    %c2_i32_66 = arith.constant 2 : i32
    %74 = arith.addi %0, %c2_i32_66 : i32
    %c0_67 = arith.constant 0 : index
    %75 = arith.index_cast %74 : i32 to index
    %c2_68 = arith.constant 2 : index
    %c0_69 = arith.constant 0 : index
    %76 = vector.load %arg2[%c0_67, %75, %c2_68, %c0_69] : memref<1x18x18x4xbf16, #tpu.memory_space<vmem>>, vector<1x16x16x4xbf16>
    %77 = vector.shape_cast %76 : vector<1x16x16x4xbf16> to vector<16x16x4xbf16>
    %78 = vector.shape_cast %77 : vector<16x16x4xbf16> to vector<256x4xbf16>
    %c2_70 = arith.constant 2 : index
    %c2_71 = arith.constant 2 : index
    %c0_72 = arith.constant 0 : index
    %c0_73 = arith.constant 0 : index
    %79 = vector.load %arg3[%c2_70, %c2_71, %c0_72, %c0_73] : memref<3x3x8x4xbf16, #tpu.memory_space<vmem>>, vector<1x1x8x4xbf16>
    %80 = vector.shape_cast %79 : vector<1x1x8x4xbf16> to vector<8x4xbf16>
    %cst_74 = arith.constant dense<0.000000e+00> : vector<8x256xf32>
    %81 = tpu.matmul %80, %78, %cst_74 {dimension_numbers = #tpu.dot_dimension_numbers<[1], [1], [0], [0], [0, 0, 1, 0], [], []>} : vector<8x4xbf16>, vector<256x4xbf16>, vector<8x256xf32> -> vector<8x256xf32>
    %82 = arith.addf %73, %81 : vector<8x256xf32>
    %c0_75 = arith.constant 0 : index
    %c0_76 = arith.constant 0 : index
    %83 = vector.load %arg4[%c0_75, %c0_76] : memref<8x1xf32, #tpu.memory_space<vmem>>, vector<8x1xf32>
    %84 = vector.broadcast %83 : vector<8x1xf32> to vector<8x256xf32>
    %85 = arith.addf %82, %84 : vector<8x256xf32>
    %cst_77 = arith.constant 0.000000e+00 : f32
    %86 = vector.broadcast %cst_77 : f32 to vector<8x256xf32>
    %87 = arith.maximumf %85, %86 : vector<8x256xf32>
    %c0_78 = arith.constant 0 : index
    %c0_79 = arith.constant 0 : index
    %c0_80 = arith.constant 0 : index
    %88 = vector.load %arg5[%c0_78, %c0_79, %c0_80] : memref<1x8x256xf32, #tpu.memory_space<vmem>>, vector<1x8x256xf32>
    %89 = vector.shape_cast %88 : vector<1x8x256xf32> to vector<8x256xf32>
    %90 = vector.shape_cast %87 : vector<8x256xf32> to vector<1x8x256xf32>
    tpu.vector_store %arg5[%c0_78, %c0_79, %c0_80], %90 {strides = array<i32>} : memref<1x8x256xf32, #tpu.memory_space<vmem>>, vector<1x8x256xf32>,
    %cst_81 = arith.constant dense<0.000000e+00> : vector<8xf32>
    %91 = vector.multi_reduction <add>, %87, %cst_81 [1] : vector<8x256xf32> to vector<8xf32>
    %92 = vector.shape_cast %91 : vector<8xf32> to vector<8x1xf32>
    %c0_82 = arith.constant 0 : index
    %c0_83 = arith.constant 0 : index
    %c0_84 = arith.constant 0 : index
    %c0_85 = arith.constant 0 : index
    %93 = vector.load %arg6[%c0_82, %c0_83, %c0_84, %c0_85] : memref<1x1x8x1xf32, #tpu.memory_space<vmem>>, vector<1x1x8x1xf32>
    %94 = vector.shape_cast %93 : vector<1x1x8x1xf32> to vector<8x1xf32>
    %95 = vector.shape_cast %92 : vector<8x1xf32> to vector<1x1x8x1xf32>
    tpu.vector_store %arg6[%c0_82, %c0_83, %c0_84, %c0_85], %95 {strides = array<i32>} : memref<1x1x8x1xf32, #tpu.memory_space<vmem>>, vector<1x1x8x1xf32>,
    %96 = arith.mulf %87, %87 : vector<8x256xf32>
    %cst_86 = arith.constant dense<0.000000e+00> : vector<8xf32>
    %97 = vector.multi_reduction <add>, %96, %cst_86 [1] : vector<8x256xf32> to vector<8xf32>
    %98 = vector.shape_cast %97 : vector<8xf32> to vector<8x1xf32>
    %c0_87 = arith.constant 0 : index
    %c0_88 = arith.constant 0 : index
    %c0_89 = arith.constant 0 : index
    %c0_90 = arith.constant 0 : index
    %99 = vector.load %arg7[%c0_87, %c0_88, %c0_89, %c0_90] : memref<1x1x8x1xf32, #tpu.memory_space<vmem>>, vector<1x1x8x1xf32>
    %100 = vector.shape_cast %99 : vector<1x1x8x1xf32> to vector<8x1xf32>
    %101 = vector.shape_cast %98 : vector<8x1xf32> to vector<1x1x8x1xf32>
    tpu.vector_store %arg7[%c0_87, %c0_88, %c0_89, %c0_90], %101 {strides = array<i32>} : memref<1x1x8x1xf32, #tpu.memory_space<vmem>>, vector<1x1x8x1xf32>,
    return
  }
  func.func @transform_0(%arg0: i32, %arg1: i32) -> (i32, i32, i32, i32) {
    %c0_i32 = arith.constant 0 : i32
    %c0_i32_0 = arith.constant 0 : i32
    %c0_i32_1 = arith.constant 0 : i32
    %c0_i32_2 = arith.constant 0 : i32
    return %arg0, %c0_i32, %c0_i32_0, %c0_i32_1 : i32, i32, i32, i32
  }
  func.func @transform_1(%arg0: i32, %arg1: i32) -> (i32, i32, i32, i32) {
    %c0_i32 = arith.constant 0 : i32
    %c0_i32_0 = arith.constant 0 : i32
    %c0_i32_1 = arith.constant 0 : i32
    %c0_i32_2 = arith.constant 0 : i32
    %c0_i32_3 = arith.constant 0 : i32
    return %c0_i32, %c0_i32_0, %c0_i32_1, %c0_i32_2 : i32, i32, i32, i32
  }
  func.func @transform_2(%arg0: i32, %arg1: i32) -> (i32, i32) {
    %c0_i32 = arith.constant 0 : i32
    %c0_i32_0 = arith.constant 0 : i32
    %c0_i32_1 = arith.constant 0 : i32
    return %c0_i32, %c0_i32_0 : i32, i32
  }
  func.func @transform_3(%arg0: i32, %arg1: i32) -> (i32, i32, i32) {
    %c0_i32 = arith.constant 0 : i32
    %c0_i32_0 = arith.constant 0 : i32
    return %arg0, %c0_i32, %arg1 : i32, i32, i32
  }
  func.func @transform_4(%arg0: i32, %arg1: i32) -> (i32, i32, i32, i32) {
    %c0_i32 = arith.constant 0 : i32
    %c0_i32_0 = arith.constant 0 : i32
    %c0_i32_1 = arith.constant 0 : i32
    return %arg0, %arg1, %c0_i32, %c0_i32_0 : i32, i32, i32, i32
  }
  func.func @transform_5(%arg0: i32, %arg1: i32) -> (i32, i32, i32, i32) {
    %c0_i32 = arith.constant 0 : i32
    %c0_i32_0 = arith.constant 0 : i32
    %c0_i32_1 = arith.constant 0 : i32
    return %arg0, %arg1, %c0_i32, %c0_i32_0 : i32, i32, i32, i32
  }
}

module attributes {stable_mosaic.version = 11 : i64} {
  func.func @_bn_apply_kernel(%arg0: i32, %arg1: i32, %arg2: memref<1x8x256xf32, #tpu.memory_space<vmem>>, %arg3: memref<8x1xf32, #tpu.memory_space<vmem>>, %arg4: memref<8x1xf32, #tpu.memory_space<vmem>>, %arg5: memref<1x8x256xf32, #tpu.memory_space<vmem>>) attributes {dimension_semantics = [#tpu.dimension_semantics<parallel>, #tpu.dimension_semantics<parallel>], iteration_bounds = array<i64: 2, 1>, scalar_prefetch = 0 : i64, scratch_operands = 0 : i64, tpu.core_type = #tpu.core_type<tc>, window_params = [{transform_indices = @transform_0, window_bounds = array<i64: 1, 8, 256>}, {pipeline_mode = #tpu.pipeline_mode<synchronous>, transform_indices = @transform_1, window_bounds = array<i64: 8, 1>}, {pipeline_mode = #tpu.pipeline_mode<synchronous>, transform_indices = @transform_2, window_bounds = array<i64: 8, 1>}, {transform_indices = @transform_3, window_bounds = array<i64: 1, 8, 256>}]} {
    %c0 = arith.constant 0 : index
    %c0_0 = arith.constant 0 : index
    %c0_1 = arith.constant 0 : index
    %0 = vector.load %arg2[%c0, %c0_0, %c0_1] : memref<1x8x256xf32, #tpu.memory_space<vmem>>, vector<1x8x256xf32>
    %1 = vector.shape_cast %0 : vector<1x8x256xf32> to vector<8x256xf32>
    %c0_2 = arith.constant 0 : index
    %c0_3 = arith.constant 0 : index
    %2 = vector.load %arg3[%c0_2, %c0_3] : memref<8x1xf32, #tpu.memory_space<vmem>>, vector<8x1xf32>
    %3 = vector.broadcast %2 : vector<8x1xf32> to vector<8x256xf32>
    %4 = arith.mulf %1, %3 : vector<8x256xf32>
    %c0_4 = arith.constant 0 : index
    %c0_5 = arith.constant 0 : index
    %5 = vector.load %arg4[%c0_4, %c0_5] : memref<8x1xf32, #tpu.memory_space<vmem>>, vector<8x1xf32>
    %6 = vector.broadcast %5 : vector<8x1xf32> to vector<8x256xf32>
    %7 = arith.addf %4, %6 : vector<8x256xf32>
    %c0_6 = arith.constant 0 : index
    %c0_7 = arith.constant 0 : index
    %c0_8 = arith.constant 0 : index
    %8 = vector.load %arg5[%c0_6, %c0_7, %c0_8] : memref<1x8x256xf32, #tpu.memory_space<vmem>>, vector<1x8x256xf32>
    %9 = vector.shape_cast %8 : vector<1x8x256xf32> to vector<8x256xf32>
    %10 = vector.shape_cast %7 : vector<8x256xf32> to vector<1x8x256xf32>
    tpu.vector_store %arg5[%c0_6, %c0_7, %c0_8], %10 {strides = array<i32>} : memref<1x8x256xf32, #tpu.memory_space<vmem>>, vector<1x8x256xf32>,
    return
  }
  func.func @transform_0(%arg0: i32, %arg1: i32) -> (i32, i32, i32) {
    %c0_i32 = arith.constant 0 : i32
    %c0_i32_0 = arith.constant 0 : i32
    return %arg0, %c0_i32, %arg1 : i32, i32, i32
  }
  func.func @transform_1(%arg0: i32, %arg1: i32) -> (i32, i32) {
    %c0_i32 = arith.constant 0 : i32
    %c0_i32_0 = arith.constant 0 : i32
    %c0_i32_1 = arith.constant 0 : i32
    return %c0_i32, %c0_i32_0 : i32, i32
  }
  func.func @transform_2(%arg0: i32, %arg1: i32) -> (i32, i32) {
    %c0_i32 = arith.constant 0 : i32
    %c0_i32_0 = arith.constant 0 : i32
    %c0_i32_1 = arith.constant 0 : i32
    return %c0_i32, %c0_i32_0 : i32, i32
  }
  func.func @transform_3(%arg0: i32, %arg1: i32) -> (i32, i32, i32) {
    %c0_i32 = arith.constant 0 : i32
    %c0_i32_0 = arith.constant 0 : i32
    return %arg0, %c0_i32, %arg1 : i32, i32, i32
  }
}

</mosaic_0001>

<llo_original>
// kernel: rbdn_conv_forward.3
$region0: #{rbdn_conv_forward.3}
  #allocation0 [shape = 'u32[]', space=smem, size = 0x4, offset = 0x4, fixed_abs, tag = 'smem constant byte address 0x4 - core index']
  #allocation1 [shape = 'u32[144,128]{1,0:T(1,128)}', space=vmem, size = 0x12000, scoped, tag = 'internal scratch']
  %s0 = inlined_call_operand.vmem [shape: f32[2,8,256], index: 0, kind: input, shape index: {}]
  %s1 = inlined_call_operand.vmem [shape: f32[8,1], index: 1, kind: input, shape index: {}]
  %s2 = inlined_call_operand.vmem [shape: f32[8,1], index: 2, kind: input, shape index: {}]
  %s3 = inlined_call_operand.vmem [shape: f32[2,8,256], index: 3, kind: output, shape index: {}]
  %s4 = sld [smem:[#allocation0]]
  $region45: #{rbdn_conv_forward.3} parent=0
    _
  %s6 = ssub.s32 1, %s4
  %s7 = scalar_select 0, %s6, %s4
  loop: start=0, step=1, limit=4
  $region2: #{rbdn_conv_forward.3} parent=0 // loop_pre_header
    _
  $region3: #{rbdn_conv_forward.3} parent=0 // loop_header
    %s9 = sphi 0, %s13
    %p10 = scmp.ge.s32.totalorder %s9, 4
    %s16 = sphi 0, %s28
    %s17 = sphi 0, %s24
    %s18 = sphi 0, %s16
    %s19 = sphi 0, %s17
    %s20 = sphi 0, %s18
    %s21 = sphi 0, %s19
    %s33 = sphi 0, %s35
    %s36 = sphi 0, %s33
    %s37 = sphi 0, %s36
    %s53 = sphi 0, %s37
    %s57 = sphi 0, %s57
    %s59 = sphi 0, %s57
    %s60 = sphi 0, %s59
    %s74 = sphi 0, %s60
    %s78 = sphi 0, %s78
    %s80 = sphi 0, %s78
    %s81 = sphi 0, %s80
    %s95 = sphi 0, %s81
    %s103 = sphi 0, %s105
    %s106 = sphi 0, %s103
    %s107 = sphi 0, %s106
    %s123 = sphi 0, %s107
  $region4: #{rbdn_conv_forward.3} parent=0 // loop_header_branch
    %12 = sbr.rel (%p10) target = $region8
  $region5: #{rbdn_conv_forward.3} parent=0 // loop_body
    %s14 = ssub.s32 %s9, 1
    %s15 = ssub.s32 %s9, 2
    %s22 = sadd.s32 1, %s17
    %p23 = scmp.ge.s32.totalorder %s22, 1
    %s24 = scalar_select %p23, 0, %s22
    %s25 = sadd.s32 1, %s16
    %s26 = scalar_select %p23, %s25, %s16
    %p27 = scmp.ge.s32.totalorder %s26, 2
    %s28 = scalar_select %p27, 0, %s26
    %s29 = ssub.s32 %s16, %s28
    %s30 = ssub.s32 %s17, %s24
    %s31 = sor.u32 %s29, %s30
    %p32 = scmp.eq.s32.totalorder %s31, 0
    %s34 = sadd.s32 %s33, 1
    %s35 = scalar_select %p32, %s33, %s34
    %p38 = pneg %p32
    %p39 = scmp.eq.s32.totalorder %s9, 1
    %p40 = por %p38, %p39
    %p41 = scmp.ne.s32.totalorder %s33, %s36
    %p42 = scmp.eq.s32.totalorder %s9, 0
    %p43 = por %p41, %p42
    %p44 = scmp.ne.s32.totalorder %s33, %s36
    %p45 = scmp.eq.s32.totalorder %s14, 1
    %p46 = por %p44, %p45
    %p47 = scmp.ne.s32.totalorder %s36, %s37
    %p48 = scmp.eq.s32.totalorder %s14, 0
    %p49 = por %p47, %p48
    %p50 = scmp.ne.s32.totalorder %s36, %s37
    %p51 = scmp.eq.s32.totalorder %s15, 1
    %p52 = por %p50, %p51
    %p54 = scmp.ne.s32.totalorder %s37, %s53
    %p55 = scmp.eq.s32.totalorder %s15, 0
    %p56 = por %p54, %p55
    %s58 = sadd.s32 %s57, 1
    %p61 = scmp.eq.s32.totalorder %s9, 1
    %p62 = scmp.ne.s32.totalorder %s57, %s59
    %p63 = scmp.eq.s32.totalorder %s9, 0
    %p64 = por %p62, %p63
    %p65 = scmp.ne.s32.totalorder %s57, %s59
    %p66 = scmp.eq.s32.totalorder %s14, 1
    %p67 = por %p65, %p66
    %p68 = scmp.ne.s32.totalorder %s59, %s60
    %p69 = scmp.eq.s32.totalorder %s14, 0
    %p70 = por %p68, %p69
    %p71 = scmp.ne.s32.totalorder %s59, %s60
    %p72 = scmp.eq.s32.totalorder %s15, 1
    %p73 = por %p71, %p72
    %p75 = scmp.ne.s32.totalorder %s60, %s74
    %p76 = scmp.eq.s32.totalorder %s15, 0
    %p77 = por %p75, %p76
    %s79 = sadd.s32 %s78, 1
    %p82 = scmp.eq.s32.totalorder %s9, 1
    %p83 = scmp.ne.s32.totalorder %s78, %s80
    %p84 = scmp.eq.s32.totalorder %s9, 0
    %p85 = por %p83, %p84
    %p86 = scmp.ne.s32.totalorder %s78, %s80
    %p87 = scmp.eq.s32.totalorder %s14, 1
    %p88 = por %p86, %p87
    %p89 = scmp.ne.s32.totalorder %s80, %s81
    %p90 = scmp.eq.s32.totalorder %s14, 0
    %p91 = por %p89, %p90
    %p92 = scmp.ne.s32.totalorder %s80, %s81
    %p93 = scmp.eq.s32.totalorder %s15, 1
    %p94 = por %p92, %p93
    %p96 = scmp.ne.s32.totalorder %s81, %s95
    %p97 = scmp.eq.s32.totalorder %s15, 0
    %p98 = por %p96, %p97
    %s99 = ssub.s32 %s16, %s28
    %s100 = ssub.s32 %s17, %s24
    %s101 = sor.u32 %s99, %s100
    %p102 = scmp.eq.s32.totalorder %s101, 0
    %s104 = sadd.s32 %s103, 1
    %s105 = scalar_select %p102, %s103, %s104
    %p108 = pneg %p102
    %p109 = scmp.eq.s32.totalorder %s9, 1
    %p110 = por %p108, %p109
    %p111 = scmp.ne.s32.totalorder %s103, %s106
    %p112 = scmp.eq.s32.totalorder %s9, 0
    %p113 = por %p111, %p112
    %p114 = scmp.ne.s32.totalorder %s103, %s106
    %p115 = scmp.eq.s32.totalorder %s14, 1
    %p116 = por %p114, %p115
    %p117 = scmp.ne.s32.totalorder %s106, %s107
    %p118 = scmp.eq.s32.totalorder %s14, 0
    %p119 = por %p117, %p118
    %p120 = scmp.ne.s32.totalorder %s106, %s107
    %p121 = scmp.eq.s32.totalorder %s15, 1
    %p122 = por %p120, %p121
    %p124 = scmp.ne.s32.totalorder %s107, %s123
    %p125 = scmp.eq.s32.totalorder %s15, 0
    %p126 = por %p124, %p125
    %p127 = scmp.le.s32.totalorder 1, %s9
    %p128 = scmp.lt.s32.totalorder %s9, 3
    %p129 = pnand %p127, %p128
    %p130 = pneg %p129
    // Predicated region
    $region9: #{rbdn_conv_forward.3} parent=5 // pred_check
      _
    $region10: #{rbdn_conv_forward.3} parent=5 // pred_check_branch
      %132 = sbr.rel (%p129) target = $region12
    $region11: #{rbdn_conv_forward.3} parent=5 // pred_region
      %s133 = ssub.s32 %s9, 1
      // Predicated region
      $region13: #{rbdn_conv_forward.3} parent=11 // pred_check
        %p134 = pneg %p70
      $region14: #{rbdn_conv_forward.3} parent=11 // pred_check_branch
        %136 = sbr.rel (%p134) target = $region16
      $region15: #{rbdn_conv_forward.3} parent=11 // pred_region
        _
      $region16: #{rbdn_conv_forward.3} parent=11 // pred_fallthru
        _
      // Predicated region
      $region17: #{rbdn_conv_forward.3} parent=11 // pred_check
        %p137 = pneg %p91
      $region18: #{rbdn_conv_forward.3} parent=11 // pred_check_branch
        %139 = sbr.rel (%p137) target = $region20
      $region19: #{rbdn_conv_forward.3} parent=11 // pred_region
        _
      $region20: #{rbdn_conv_forward.3} parent=11 // pred_fallthru
        _
    $region12: #{rbdn_conv_forward.3} parent=5 // pred_fallthru
      _
    %p140 = scmp.lt.s32.totalorder %s9, 2
    // Predicated region
    $region21: #{rbdn_conv_forward.3} parent=5 // pred_check
      %p141 = pneg %p140
    $region22: #{rbdn_conv_forward.3} parent=5 // pred_check_branch
      %143 = sbr.rel (%p141) target = $region24
    $region23: #{rbdn_conv_forward.3} parent=5 // pred_region
      // Predicated region
      $region25: #{rbdn_conv_forward.3} parent=23 // pred_check
        %p144 = pneg %p43
      $region26: #{rbdn_conv_forward.3} parent=23 // pred_check_branch
        %146 = sbr.rel (%p144) target = $region28
      $region27: #{rbdn_conv_forward.3} parent=23 // pred_region
        %s147 = smul.u32 2, %s17
        %p148 = scmp.lt.s32.totalorder %s16, 1
        %s149 = scalar_select %p148, %s16, 1
        %p150 = scmp.lt.s32.totalorder %s147, 1
        %s151 = scalar_select %p150, %s147, 1
        %s152 = smul.addr %s149, 2
        %s153 = sadd.s32 %s151, %s152
        %s154 = smul.addr %s153, 8
        %s155 = scalar_lea.vmem %s0, %s154
        %s156 = smul.u32 2, %s17
      $region28: #{rbdn_conv_forward.3} parent=23 // pred_fallthru
        _
    $region24: #{rbdn_conv_forward.3} parent=5 // pred_fallthru
      _
    %p157 = scmp.le.s32.totalorder 1, %s9
    %p158 = scmp.lt.s32.totalorder %s9, 3
    %p159 = pnand %p157, %p158
    %p160 = pneg %p159
    // Predicated region
    $region29: #{rbdn_conv_forward.3} parent=5 // pred_check
      _
    $region30: #{rbdn_conv_forward.3} parent=5 // pred_check_branch
      %162 = sbr.rel (%p159) target = $region32
    $region31: #{rbdn_conv_forward.3} parent=5 // pred_region
      %s163 = ssub.s32 %s9, 1
      %s164 = smul.u32 2, %s19
      %p165 = scmp.lt.s32.totalorder %s18, 1
      %s166 = scalar_select %p165, %s18, 1
      %p167 = scmp.lt.s32.totalorder %s164, 1
      %s168 = scalar_select %p167, %s164, 1
      %s169 = smul.addr %s166, 2
      %s170 = sadd.s32 %s168, %s169
      %s171 = smul.addr %s170, 8
      %s172 = scalar_lea.vmem %s0, %s171
      %p173 = pneg %p49
      %p174 = pneg %p46
      %p175 = pneg %p70
      %p176 = pneg %p67
      %p177 = pneg %p91
      %p178 = pneg %p88
      %p179 = pneg %p119
      %p180 = pneg %p116
      %s181 = smul.u32 2, %s19
      %p182 = scmp.lt.s32.totalorder %s18, 1
      %s183 = scalar_select %p182, %s18, 1
      %p184 = scmp.lt.s32.totalorder %s181, 1
      %s185 = scalar_select %p184, %s181, 1
      %s186 = smul.addr %s183, 2
      %s187 = sadd.s32 %s185, %s186
      %s188 = smul.addr %s187, 8
      %s189 = scalar_lea.vmem %s3, %s188
      %s190 = smul.u32 2, %s19
      %p191 = scmp.lt.s32.totalorder %s18, 1
      %s192 = scalar_select %p191, %s18, 1
      %p193 = scmp.lt.s32.totalorder %s190, 1
      %s194 = scalar_select %p193, %s190, 1
      %s195 = smul.addr %s192, 2
      %s196 = sadd.s32 %s194, %s195
      %s197 = smul.addr %s196, 8
      %s198 = scalar_lea.vmem %s0, %s197
      %s199 = smul.u32 2, %s19
      %s200 = smul.u32 2, %s19
      %p201 = scmp.lt.s32.totalorder %s18, 1
      %s202 = scalar_select %p201, %s18, 1
      %p203 = scmp.lt.s32.totalorder %s200, 1
      %s204 = scalar_select %p203, %s200, 1
      %s205 = smul.addr %s202, 2
      %s206 = sadd.s32 %s204, %s205
      %s207 = smul.addr %s206, 8
      %s208 = scalar_lea.vmem %s3, %s207
      %s209 = smul.u32 2, %s19
      %v210 = vld [vmem:[%s198] sm:$0xff]
      %v211 = vld [vmem:[%s198 + $0x8] sm:$0xff]
      %v212 = vld [vmem:[%s1] sm:$0xff]
      %214 = vset.pattern.permute.xlu0 0
      %215 = vperm.xlu0 %214, %v212
      %v216 = vpop.permute.xlu0 %215
      %v218 = vmul.f32 %v210, %v216
      %v219 = vmul.f32 %v211, %v216
      %v220 = vld [vmem:[%s2] sm:$0xff]
      %222 = vset.pattern.permute.xlu0 0
      %223 = vperm.xlu0 %222, %v220
      %v224 = vpop.permute.xlu0 %223
      %v226 = vadd.f32 %v218, %v224
      %v227 = vadd.f32 %v219, %v224
      %228 = vst [vmem:[%s208] sm:$0xff] %v226
      %229 = vst [vmem:[%s208 + $0x8] sm:$0xff] %v227
      %s230 = smul.u32 2, %s19
      %p231 = scmp.lt.s32.totalorder %s18, 1
      %s232 = scalar_select %p231, %s18, 1
      %p233 = scmp.lt.s32.totalorder %s230, 1
      %s234 = scalar_select %p233, %s230, 1
      %s235 = smul.addr %s232, 2
      %s236 = sadd.s32 %s234, %s235
      %s237 = smul.addr %s236, 8
      %s238 = scalar_lea.vmem %s3, %s237
      // Predicated region
      $region33: #{rbdn_conv_forward.3} parent=31 // pred_check
        %p239 = pneg %p116
      $region34: #{rbdn_conv_forward.3} parent=31 // pred_check_branch
        %241 = sbr.rel (%p239) target = $region36
      $region35: #{rbdn_conv_forward.3} parent=31 // pred_region
        %s242 = smul.u32 2, %s19
      $region36: #{rbdn_conv_forward.3} parent=31 // pred_fallthru
        _
    $region32: #{rbdn_conv_forward.3} parent=5 // pred_fallthru
      _
    %p243 = scmp.le.s32.totalorder 2, %s9
    // Predicated region
    $region37: #{rbdn_conv_forward.3} parent=5 // pred_check
      %p244 = pneg %p243
    $region38: #{rbdn_conv_forward.3} parent=5 // pred_check_branch
      %246 = sbr.rel (%p244) target = $region40
    $region39: #{rbdn_conv_forward.3} parent=5 // pred_region
      %s247 = ssub.s32 %s9, 2
      // Predicated region
      $region41: #{rbdn_conv_forward.3} parent=39 // pred_check
        %p248 = pneg %p122
      $region42: #{rbdn_conv_forward.3} parent=39 // pred_check_branch
        %250 = sbr.rel (%p248) target = $region44
      $region43: #{rbdn_conv_forward.3} parent=39 // pred_region
        %s251 = smul.u32 2, %s21
        %p252 = scmp.lt.s32.totalorder %s20, 1
        %s253 = scalar_select %p252, %s20, 1
        %p254 = scmp.lt.s32.totalorder %s251, 1
        %s255 = scalar_select %p254, %s251, 1
        %s256 = smul.addr %s253, 2
        %s257 = sadd.s32 %s255, %s256
        %s258 = smul.addr %s257, 8
        %s259 = scalar_lea.vmem %s3, %s258
      $region44: #{rbdn_conv_forward.3} parent=39 // pred_fallthru
        _
    $region40: #{rbdn_conv_forward.3} parent=5 // pred_fallthru
      _
  $region6: #{rbdn_conv_forward.3} parent=0 // loop_footer
    %s13 = sadd.s32 1, %s9
  $region7: #{rbdn_conv_forward.3} parent=0 // loop_footer_branch
    %8 = sbr.rel target = $region3
  $region8: #{rbdn_conv_forward.3} parent=0 // loop_exit
    _

// kernel: rbdn_conv_forward.2
$region0: #{rbdn_conv_forward.2}
  #allocation0 [shape = 'u32[]', space=smem, size = 0x4, offset = 0x4, fixed_abs, tag = 'smem constant byte address 0x4 - core index']
  #allocation1 [shape = 'u32[144,128]{1,0:T(1,128)}', space=vmem, size = 0x12000, scoped, tag = 'internal scratch']
  %s0 = inlined_call_operand.vmem [shape: bf16[2,18,18,4], index: 0, kind: input, shape index: {}]
  %s1 = inlined_call_operand.vmem [shape: bf16[3,3,8,4], index: 1, kind: input, shape index: {}]
  %s2 = inlined_call_operand.vmem [shape: f32[8,1], index: 2, kind: input, shape index: {}]
  %s3 = inlined_call_operand.vmem [shape: f32[2,8,256], index: 3, kind: output, shape index: {0}]
  %s4 = inlined_call_operand.vmem [shape: f32[2,1,8,1], index: 4, kind: output, shape index: {1}]
  %s5 = inlined_call_operand.vmem [shape: f32[2,1,8,1], index: 5, kind: output, shape index: {2}]
  %6 = xla_tuple %s3, %s4, %s5
  %s7 = sld [smem:[#allocation0]]
  $region61: #{rbdn_conv_forward.2} parent=0
    _
  %s9 = ssub.s32 1, %s7
  %s10 = scalar_select 0, %s9, %s7
  loop: start=0, step=1, limit=4
  $region2: #{rbdn_conv_forward.2} parent=0 // loop_pre_header
    _
  $region3: #{rbdn_conv_forward.2} parent=0 // loop_header
    %s12 = sphi 0, %s16
    %p13 = scmp.ge.s32.totalorder %s12, 4
    %s19 = sphi 0, %s31
    %s20 = sphi 0, %s27
    %s21 = sphi 0, %s19
    %s22 = sphi 0, %s20
    %s23 = sphi 0, %s21
    %s24 = sphi 0, %s22
    %s34 = sphi 0, %s36
    %s37 = sphi 0, %s34
    %s38 = sphi 0, %s37
    %s54 = sphi 0, %s38
    %s58 = sphi 0, %s58
    %s60 = sphi 0, %s58
    %s61 = sphi 0, %s60
    %s75 = sphi 0, %s61
    %s79 = sphi 0, %s79
    %s81 = sphi 0, %s79
    %s82 = sphi 0, %s81
    %s96 = sphi 0, %s82
    %s104 = sphi 0, %s106
    %s107 = sphi 0, %s104
    %s108 = sphi 0, %s107
    %s124 = sphi 0, %s108
    %s132 = sphi 0, %s134
    %s135 = sphi 0, %s132
    %s136 = sphi 0, %s135
    %s152 = sphi 0, %s136
    %s160 = sphi 0, %s162
    %s163 = sphi 0, %s160
    %s164 = sphi 0, %s163
    %s180 = sphi 0, %s164
  $region4: #{rbdn_conv_forward.2} parent=0 // loop_header_branch
    %15 = sbr.rel (%p13) target = $region8
  $region5: #{rbdn_conv_forward.2} parent=0 // loop_body
    %s17 = ssub.s32 %s12, 1
    %s18 = ssub.s32 %s12, 2
    %s25 = sadd.s32 1, %s20
    %p26 = scmp.ge.s32.totalorder %s25, 1
    %s27 = scalar_select %p26, 0, %s25
    %s28 = sadd.s32 1, %s19
    %s29 = scalar_select %p26, %s28, %s19
    %p30 = scmp.ge.s32.totalorder %s29, 2
    %s31 = scalar_select %p30, 0, %s29
    %s32 = ssub.s32 %s19, %s31
    %p33 = scmp.eq.s32.totalorder %s32, 0
    %s35 = sadd.s32 %s34, 1
    %s36 = scalar_select %p33, %s34, %s35
    %p39 = pneg %p33
    %p40 = scmp.eq.s32.totalorder %s12, 1
    %p41 = por %p39, %p40
    %p42 = scmp.ne.s32.totalorder %s34, %s37
    %p43 = scmp.eq.s32.totalorder %s12, 0
    %p44 = por %p42, %p43
    %p45 = scmp.ne.s32.totalorder %s34, %s37
    %p46 = scmp.eq.s32.totalorder %s17, 1
    %p47 = por %p45, %p46
    %p48 = scmp.ne.s32.totalorder %s37, %s38
    %p49 = scmp.eq.s32.totalorder %s17, 0
    %p50 = por %p48, %p49
    %p51 = scmp.ne.s32.totalorder %s37, %s38
    %p52 = scmp.eq.s32.totalorder %s18, 1
    %p53 = por %p51, %p52
    %p55 = scmp.ne.s32.totalorder %s38, %s54
    %p56 = scmp.eq.s32.totalorder %s18, 0
    %p57 = por %p55, %p56
    %s59 = sadd.s32 %s58, 1
    %p62 = scmp.eq.s32.totalorder %s12, 1
    %p63 = scmp.ne.s32.totalorder %s58, %s60
    %p64 = scmp.eq.s32.totalorder %s12, 0
    %p65 = por %p63, %p64
    %p66 = scmp.ne.s32.totalorder %s58, %s60
    %p67 = scmp.eq.s32.totalorder %s17, 1
    %p68 = por %p66, %p67
    %p69 = scmp.ne.s32.totalorder %s60, %s61
    %p70 = scmp.eq.s32.totalorder %s17, 0
    %p71 = por %p69, %p70
    %p72 = scmp.ne.s32.totalorder %s60, %s61
    %p73 = scmp.eq.s32.totalorder %s18, 1
    %p74 = por %p72, %p73
    %p76 = scmp.ne.s32.totalorder %s61, %s75
    %p77 = scmp.eq.s32.totalorder %s18, 0
    %p78 = por %p76, %p77
    %s80 = sadd.s32 %s79, 1
    %p83 = scmp.eq.s32.totalorder %s12, 1
    %p84 = scmp.ne.s32.totalorder %s79, %s81
    %p85 = scmp.eq.s32.totalorder %s12, 0
    %p86 = por %p84, %p85
    %p87 = scmp.ne.s32.totalorder %s79, %s81
    %p88 = scmp.eq.s32.totalorder %s17, 1
    %p89 = por %p87, %p88
    %p90 = scmp.ne.s32.totalorder %s81, %s82
    %p91 = scmp.eq.s32.totalorder %s17, 0
    %p92 = por %p90, %p91
    %p93 = scmp.ne.s32.totalorder %s81, %s82
    %p94 = scmp.eq.s32.totalorder %s18, 1
    %p95 = por %p93, %p94
    %p97 = scmp.ne.s32.totalorder %s82, %s96
    %p98 = scmp.eq.s32.totalorder %s18, 0
    %p99 = por %p97, %p98
    %s100 = ssub.s32 %s19, %s31
    %s101 = ssub.s32 %s20, %s27
    %s102 = sor.u32 %s100, %s101
    %p103 = scmp.eq.s32.totalorder %s102, 0
    %s105 = sadd.s32 %s104, 1
    %s106 = scalar_select %p103, %s104, %s105
    %p109 = pneg %p103
    %p110 = scmp.eq.s32.totalorder %s12, 1
    %p111 = por %p109, %p110
    %p112 = scmp.ne.s32.totalorder %s104, %s107
    %p113 = scmp.eq.s32.totalorder %s12, 0
    %p114 = por %p112, %p113
    %p115 = scmp.ne.s32.totalorder %s104, %s107
    %p116 = scmp.eq.s32.totalorder %s17, 1
    %p117 = por %p115, %p116
    %p118 = scmp.ne.s32.totalorder %s107, %s108
    %p119 = scmp.eq.s32.totalorder %s17, 0
    %p120 = por %p118, %p119
    %p121 = scmp.ne.s32.totalorder %s107, %s108
    %p122 = scmp.eq.s32.totalorder %s18, 1
    %p123 = por %p121, %p122
    %p125 = scmp.ne.s32.totalorder %s108, %s124
    %p126 = scmp.eq.s32.totalorder %s18, 0
    %p127 = por %p125, %p126
    %s128 = ssub.s32 %s19, %s31
    %s129 = ssub.s32 %s20, %s27
    %s130 = sor.u32 %s128, %s129
    %p131 = scmp.eq.s32.totalorder %s130, 0
    %s133 = sadd.s32 %s132, 1
    %s134 = scalar_select %p131, %s132, %s133
    %p137 = pneg %p131
    %p138 = scmp.eq.s32.totalorder %s12, 1
    %p139 = por %p137, %p138
    %p140 = scmp.ne.s32.totalorder %s132, %s135
    %p141 = scmp.eq.s32.totalorder %s12, 0
    %p142 = por %p140, %p141
    %p143 = scmp.ne.s32.totalorder %s132, %s135
    %p144 = scmp.eq.s32.totalorder %s17, 1
    %p145 = por %p143, %p144
    %p146 = scmp.ne.s32.totalorder %s135, %s136
    %p147 = scmp.eq.s32.totalorder %s17, 0
    %p148 = por %p146, %p147
    %p149 = scmp.ne.s32.totalorder %s135, %s136
    %p150 = scmp.eq.s32.totalorder %s18, 1
    %p151 = por %p149, %p150
    %p153 = scmp.ne.s32.totalorder %s136, %s152
    %p154 = scmp.eq.s32.totalorder %s18, 0
    %p155 = por %p153, %p154
    %s156 = ssub.s32 %s19, %s31
    %s157 = ssub.s32 %s20, %s27
    %s158 = sor.u32 %s156, %s157
    %p159 = scmp.eq.s32.totalorder %s158, 0
    %s161 = sadd.s32 %s160, 1
    %s162 = scalar_select %p159, %s160, %s161
    %p165 = pneg %p159
    %p166 = scmp.eq.s32.totalorder %s12, 1
    %p167 = por %p165, %p166
    %p168 = scmp.ne.s32.totalorder %s160, %s163
    %p169 = scmp.eq.s32.totalorder %s12, 0
    %p170 = por %p168, %p169
    %p171 = scmp.ne.s32.totalorder %s160, %s163
    %p172 = scmp.eq.s32.totalorder %s17, 1
    %p173 = por %p171, %p172
    %p174 = scmp.ne.s32.totalorder %s163, %s164
    %p175 = scmp.eq.s32.totalorder %s17, 0
    %p176 = por %p174, %p175
    %p177 = scmp.ne.s32.totalorder %s163, %s164
    %p178 = scmp.eq.s32.totalorder %s18, 1
    %p179 = por %p177, %p178
    %p181 = scmp.ne.s32.totalorder %s164, %s180
    %p182 = scmp.eq.s32.totalorder %s18, 0
    %p183 = por %p181, %p182
    %p184 = scmp.le.s32.totalorder 1, %s12
    %p185 = scmp.lt.s32.totalorder %s12, 3
    %p186 = pnand %p184, %p185
    %p187 = pneg %p186
    // Predicated region
    $region9: #{rbdn_conv_forward.2} parent=5 // pred_check
      _
    $region10: #{rbdn_conv_forward.2} parent=5 // pred_check_branch
      %189 = sbr.rel (%p186) target = $region12
    $region11: #{rbdn_conv_forward.2} parent=5 // pred_region
      %s190 = ssub.s32 %s12, 1
      // Predicated region
      $region13: #{rbdn_conv_forward.2} parent=11 // pred_check
        %p191 = pneg %p71
      $region14: #{rbdn_conv_forward.2} parent=11 // pred_check_branch
        %193 = sbr.rel (%p191) target = $region16
      $region15: #{rbdn_conv_forward.2} parent=11 // pred_region
        _
      $region16: #{rbdn_conv_forward.2} parent=11 // pred_fallthru
        _
      // Predicated region
      $region17: #{rbdn_conv_forward.2} parent=11 // pred_check
        %p194 = pneg %p92
      $region18: #{rbdn_conv_forward.2} parent=11 // pred_check_branch
        %196 = sbr.rel (%p194) target = $region20
      $region19: #{rbdn_conv_forward.2} parent=11 // pred_region
        _
      $region20: #{rbdn_conv_forward.2} parent=11 // pred_fallthru
        _
    $region12: #{rbdn_conv_forward.2} parent=5 // pred_fallthru
      _
    %p197 = scmp.lt.s32.totalorder %s12, 2
    // Predicated region
    $region21: #{rbdn_conv_forward.2} parent=5 // pred_check
      %p198 = pneg %p197
    $region22: #{rbdn_conv_forward.2} parent=5 // pred_check_branch
      %200 = sbr.rel (%p198) target = $region24
    $region23: #{rbdn_conv_forward.2} parent=5 // pred_region
      // Predicated region
      $region25: #{rbdn_conv_forward.2} parent=23 // pred_check
        %p201 = pneg %p44
      $region26: #{rbdn_conv_forward.2} parent=23 // pred_check_branch
        %203 = sbr.rel (%p201) target = $region28
      $region27: #{rbdn_conv_forward.2} parent=23 // pred_region
        %p204 = scmp.lt.s32.totalorder %s19, 1
        %s205 = scalar_select %p204, %s19, 1
        %s206 = smul.addr %s205, 54
        %s207 = smul.addr %s206, 4
        %s208 = scalar_lea.vmem %s0, %s207
      $region28: #{rbdn_conv_forward.2} parent=23 // pred_fallthru
        _
    $region24: #{rbdn_conv_forward.2} parent=5 // pred_fallthru
      _
    %p209 = scmp.le.s32.totalorder 1, %s12
    %p210 = scmp.lt.s32.totalorder %s12, 3
    %p211 = pnand %p209, %p210
    %p212 = pneg %p211
    // Predicated region
    $region29: #{rbdn_conv_forward.2} parent=5 // pred_check
      _
    $region30: #{rbdn_conv_forward.2} parent=5 // pred_check_branch
      %214 = sbr.rel (%p211) target = $region32
    $region31: #{rbdn_conv_forward.2} parent=5 // pred_region
      %s215 = ssub.s32 %s12, 1
      %p216 = scmp.lt.s32.totalorder %s21, 1
      %s217 = scalar_select %p216, %s21, 1
      %s218 = smul.addr %s217, 54
      %s219 = smul.addr %s218, 4
      %s220 = scalar_lea.vmem %s0, %s219
      %p221 = pneg %p50
      %p222 = pneg %p47
      %p223 = pneg %p71
      %p224 = pneg %p68
      %p225 = pneg %p92
      %p226 = pneg %p89
      %p227 = pneg %p120
      %p228 = pneg %p117
      %s229 = smul.u32 2, %s22
      %p230 = scmp.lt.s32.totalorder %s21, 1
      %s231 = scalar_select %p230, %s21, 1
      %p232 = scmp.lt.s32.totalorder %s229, 1
      %s233 = scalar_select %p232, %s229, 1
      %s234 = smul.addr %s231, 2
      %s235 = sadd.s32 %s233, %s234
      %s236 = smul.addr %s235, 8
      %s237 = scalar_lea.vmem %s3, %s236
      %p238 = pneg %p148
      %p239 = pneg %p145
      %p240 = scmp.lt.s32.totalorder %s21, 1
      %s241 = scalar_select %p240, %s21, 1
      %p242 = scmp.lt.s32.totalorder %s22, 0
      %s243 = scalar_select %p242, %s22, 0
      %s244 = sadd.s32 %s243, %s241
      %s245 = smul.addr %s244, 8
      %s246 = scalar_lea.vmem %s4, %s245
      %p247 = pneg %p176
      %p248 = pneg %p173
      %p249 = scmp.lt.s32.totalorder %s21, 1
      %s250 = scalar_select %p249, %s21, 1
      %p251 = scmp.lt.s32.totalorder %s22, 0
      %s252 = scalar_select %p251, %s22, 0
      %s253 = sadd.s32 %s252, %s250
      %s254 = smul.addr %s253, 8
      %s255 = scalar_lea.vmem %s5, %s254
      %p256 = scmp.lt.s32.totalorder %s21, 1
      %s257 = scalar_select %p256, %s21, 1
      %s258 = smul.addr %s257, 54
      %s259 = smul.addr %s258, 4
      %s260 = scalar_lea.vmem %s0, %s259
      %s261 = smul.u32 2, %s22
      %p262 = scmp.lt.s32.totalorder %s21, 1
      %s263 = scalar_select %p262, %s21, 1
      %p264 = scmp.lt.s32.totalorder %s261, 1
      %s265 = scalar_select %p264, %s261, 1
      %s266 = smul.addr %s263, 2
      %s267 = sadd.s32 %s265, %s266
      %s268 = smul.addr %s267, 8
      %s269 = scalar_lea.vmem %s3, %s268
      %s270 = smul.u32 2, %s22
      %p271 = scmp.lt.s32.totalorder %s21, 1
      %s272 = scalar_select %p271, %s21, 1
      %p273 = scmp.lt.s32.totalorder %s22, 0
      %s274 = scalar_select %p273, %s22, 0
      %s275 = sadd.s32 %s274, %s272
      %s276 = smul.addr %s275, 8
      %s277 = scalar_lea.vmem %s4, %s276
      %p278 = scmp.lt.s32.totalorder %s21, 1
      %s279 = scalar_select %p278, %s21, 1
      %p280 = scmp.lt.s32.totalorder %s22, 0
      %s281 = scalar_select %p280, %s22, 0
      %s282 = sadd.s32 %s281, %s279
      %s283 = smul.addr %s282, 8
      %s284 = scalar_lea.vmem %s5, %s283
      %s286 = smul.u32 %s22, 16
      %s287 = smul.u32 %s286, 3
      %s288 = smul.addr %s287, 4
      %s289 = scalar_lea.vmem %s260, %s288
      %v290 = vld [vmem:[%s289] sm:$0xf]
      %v291 = vld [vmem:[%s289 + $0x4] sm:$0xf]
      %v292 = vld [vmem:[%s289 + $0xc] sm:$0xf]
      %v293 = vld [vmem:[%s289 + $0x10] sm:$0xf]
      %v294 = vld [vmem:[%s289 + $0x18] sm:$0xf]
      %v295 = vld [vmem:[%s289 + $0x1c] sm:$0xf]
      %v296 = vld [vmem:[%s289 + $0x24] sm:$0xf]
      %v297 = vld [vmem:[%s289 + $0x28] sm:$0xf]
      %v298 = vld [vmem:[%s289 + $0x30] sm:$0xf]
      %v299 = vld [vmem:[%s289 + $0x34] sm:$0xf]
      %v300 = vld [vmem:[%s289 + $0x3c] sm:$0xf]
      %v301 = vld [vmem:[%s289 + $0x40] sm:$0xf]
      %v302 = vld [vmem:[%s289 + $0x48] sm:$0xf]
      %v303 = vld [vmem:[%s289 + $0x4c] sm:$0xf]
      %v304 = vld [vmem:[%s289 + $0x54] sm:$0xf]
      %v305 = vld [vmem:[%s289 + $0x58] sm:$0xf]
      %v306 = vld [vmem:[%s289 + $0x60] sm:$0xf]
      %v307 = vld [vmem:[%s289 + $0x64] sm:$0xf]
      %v308 = vld [vmem:[%s289 + $0x6c] sm:$0xf]
      %v309 = vld [vmem:[%s289 + $0x70] sm:$0xf]
      %v310 = vld [vmem:[%s289 + $0x78] sm:$0xf]
      %v311 = vld [vmem:[%s289 + $0x7c] sm:$0xf]
      %v312 = vld [vmem:[%s289 + $0x84] sm:$0xf]
      %v313 = vld [vmem:[%s289 + $0x88] sm:$0xf]
      %v314 = vld [vmem:[%s289 + $0x90] sm:$0xf]
      %v315 = vld [vmem:[%s289 + $0x94] sm:$0xf]
      %v316 = vld [vmem:[%s289 + $0x9c] sm:$0xf]
      %v317 = vld [vmem:[%s289 + $0xa0] sm:$0xf]
      %v318 = vld [vmem:[%s289 + $0xa8] sm:$0xf]
      %v319 = vld [vmem:[%s289 + $0xac] sm:$0xf]
      %v320 = vld [vmem:[%s289 + $0xb4] sm:$0xf]
      %v321 = vld [vmem:[%s289 + $0xb8] sm:$0xf]
      %v322 = vld [vmem:[%s1] sm:$0xf]
      %v323 = vld [vmem:[%s289 + $0x8] sm:$0x1]
      %v324 = vld [vmem:[%s289 + $0x14] sm:$0x1]
      %v325 = vld [vmem:[%s289 + $0x20] sm:$0x1]
      %v326 = vld [vmem:[%s289 + $0x2c] sm:$0x1]
      %v327 = vld [vmem:[%s289 + $0x38] sm:$0x1]
      %v328 = vld [vmem:[%s289 + $0x44] sm:$0x1]
      %v329 = vld [vmem:[%s289 + $0x50] sm:$0x1]
      %v330 = vld [vmem:[%s289 + $0x5c] sm:$0x1]
      %v331 = vld [vmem:[%s289 + $0x68] sm:$0x1]
      %v332 = vld [vmem:[%s289 + $0x74] sm:$0x1]
      %v333 = vld [vmem:[%s289 + $0x80] sm:$0x1]
      %v334 = vld [vmem:[%s289 + $0x8c] sm:$0x1]
      %v335 = vld [vmem:[%s289 + $0x98] sm:$0x1]
      %v336 = vld [vmem:[%s289 + $0xa4] sm:$0x1]
      %v337 = vld [vmem:[%s289 + $0xb0] sm:$0x1]
      %v338 = vld [vmem:[%s289 + $0xbc] sm:$0x1]
      %vm339 = vsmask.f32 3328
      %vm340 = vsmask.f32 7440
      %vm341 = vmor %vm339, %vm340
      %v343 = vshrl.u32 %v290, 16
      %v345 = vrot.slane %v343, 4
      %v346 = vshll.u32 %v290, 16
      %v348 = vrot.slane %v346, 5
      %v349 = vor.u32 %v345, %v348
      %v350 = vrot.slane %v349, 4
      %v352 = vshll.u32 %v291, 16
      %v354 = vrot.slane %v352, 5
      %v355 = vsel %vm341, %v350, %v354
      %v356 = vshrl.u32 %v291, 16
      %v358 = vrot.slane %v356, 4
      %v359 = vor.u32 %v358, %v354
      %v360 = vrot.slane %v359, 4
      %v362 = vshll.u32 %v323, 16
      %v364 = vrot.slane %v362, 5
      %v365 = vsel %vm341, %v360, %v364
      %v367 = vshrl.u32 %v292, 16
      %v369 = vrot.slane %v367, 4
      %v370 = vshll.u32 %v292, 16
      %v372 = vrot.slane %v370, 5
      %v373 = vor.u32 %v369, %v372
      %v374 = vrot.slane %v373, 4
      %v376 = vshll.u32 %v293, 16
      %v378 = vrot.slane %v376, 5
      %v379 = vsel %vm341, %v374, %v378
      %v380 = vshrl.u32 %v293, 16
      %v382 = vrot.slane %v380, 4
      %v383 = vor.u32 %v382, %v378
      %v384 = vrot.slane %v383, 4
      %v386 = vshll.u32 %v324, 16
      %v388 = vrot.slane %v386, 5
      %v389 = vsel %vm341, %v384, %v388
      %v391 = vshrl.u32 %v294, 16
      %v393 = vrot.slane %v391, 4
      %v394 = vshll.u32 %v294, 16
      %v396 = vrot.slane %v394, 5
      %v397 = vor.u32 %v393, %v396
      %v398 = vrot.slane %v397, 4
      %v400 = vshll.u32 %v295, 16
      %v402 = vrot.slane %v400, 5
      %v403 = vsel %vm341, %v398, %v402
      %v404 = vshrl.u32 %v295, 16
      %v406 = vrot.slane %v404, 4
      %v407 = vor.u32 %v406, %v402
      %v408 = vrot.slane %v407, 4
      %v410 = vshll.u32 %v325, 16
      %v412 = vrot.slane %v410, 5
      %v413 = vsel %vm341, %v408, %v412
      %v415 = vshrl.u32 %v296, 16
      %v417 = vrot.slane %v415, 4
      %v418 = vshll.u32 %v296, 16
      %v420 = vrot.slane %v418, 5
      %v421 = vor.u32 %v417, %v420
      %v422 = vrot.slane %v421, 4
      %v424 = vshll.u32 %v297, 16
      %v426 = vrot.slane %v424, 5
      %v427 = vsel %vm341, %v422, %v426
      %v428 = vshrl.u32 %v297, 16
      %v430 = vrot.slane %v428, 4
      %v431 = vor.u32 %v430, %v426
      %v432 = vrot.slane %v431, 4
      %v434 = vshll.u32 %v326, 16
      %v436 = vrot.slane %v434, 5
      %v437 = vsel %vm341, %v432, %v436
      %v439 = vshrl.u32 %v298, 16
      %v441 = vrot.slane %v439, 4
      %v442 = vshll.u32 %v298, 16
      %v444 = vrot.slane %v442, 5
      %v445 = vor.u32 %v441, %v444
      %v446 = vrot.slane %v445, 4
      %v448 = vshll.u32 %v299, 16
      %v450 = vrot.slane %v448, 5
      %v451 = vsel %vm341, %v446, %v450
      %v452 = vshrl.u32 %v299, 16
      %v454 = vrot.slane %v452, 4
      %v455 = vor.u32 %v454, %v450
      %v456 = vrot.slane %v455, 4
      %v458 = vshll.u32 %v327, 16
      %v460 = vrot.slane %v458, 5
      %v461 = vsel %vm341, %v456, %v460
      %v463 = vshrl.u32 %v300, 16
      %v465 = vrot.slane %v463, 4
      %v466 = vshll.u32 %v300, 16
      %v468 = vrot.slane %v466, 5
      %v469 = vor.u32 %v465, %v468
      %v470 = vrot.slane %v469, 4
      %v472 = vshll.u32 %v301, 16
      %v474 = vrot.slane %v472, 5
      %v475 = vsel %vm341, %v470, %v474
      %v476 = vshrl.u32 %v301, 16
      %v478 = vrot.slane %v476, 4
      %v479 = vor.u32 %v478, %v474
      %v480 = vrot.slane %v479, 4
      %v482 = vshll.u32 %v328, 16
      %v484 = vrot.slane %v482, 5
      %v485 = vsel %vm341, %v480, %v484
      %v487 = vshrl.u32 %v302, 16
      %v489 = vrot.slane %v487, 4
      %v490 = vshll.u32 %v302, 16
      %v492 = vrot.slane %v490, 5
      %v493 = vor.u32 %v489, %v492
      %v494 = vrot.slane %v493, 4
      %v496 = vshll.u32 %v303, 16
      %v498 = vrot.slane %v496, 5
      %v499 = vsel %vm341, %v494, %v498
      %v500 = vshrl.u32 %v303, 16
      %v502 = vrot.slane %v500, 4
      %v503 = vor.u32 %v502, %v498
      %v504 = vrot.slane %v503, 4
      %v506 = vshll.u32 %v329, 16
      %v508 = vrot.slane %v506, 5
      %v509 = vsel %vm341, %v504, %v508
      %v511 = vshrl.u32 %v304, 16
      %v513 = vrot.slane %v511, 4
      %v514 = vshll.u32 %v304, 16
      %v516 = vrot.slane %v514, 5
      %v517 = vor.u32 %v513, %v516
      %v518 = vrot.slane %v517, 4
      %v520 = vshll.u32 %v305, 16
      %v522 = vrot.slane %v520, 5
      %v523 = vsel %vm341, %v518, %v522
      %v524 = vshrl.u32 %v305, 16
      %v526 = vrot.slane %v524, 4
      %v527 = vor.u32 %v526, %v522
      %v528 = vrot.slane %v527, 4
      %v530 = vshll.u32 %v330, 16
      %v532 = vrot.slane %v530, 5
      %v533 = vsel %vm341, %v528, %v532
      %v535 = vshrl.u32 %v306, 16
      %v537 = vrot.slane %v535, 4
      %v538 = vshll.u32 %v306, 16
      %v540 = vrot.slane %v538, 5
      %v541 = vor.u32 %v537, %v540
      %v542 = vrot.slane %v541, 4
      %v544 = vshll.u32 %v307, 16
      %v546 = vrot.slane %v544, 5
      %v547 = vsel %vm341, %v542, %v546
      %v548 = vshrl.u32 %v307, 16
      %v550 = vrot.slane %v548, 4
      %v551 = vor.u32 %v550, %v546
      %v552 = vrot.slane %v551, 4
      %v554 = vshll.u32 %v331, 16
      %v556 = vrot.slane %v554, 5
      %v557 = vsel %vm341, %v552, %v556
      %v559 = vshrl.u32 %v308, 16
      %v561 = vrot.slane %v559, 4
      %v562 = vshll.u32 %v308, 16
      %v564 = vrot.slane %v562, 5
      %v565 = vor.u32 %v561, %v564
      %v566 = vrot.slane %v565, 4
      %v568 = vshll.u32 %v309, 16
      %v570 = vrot.slane %v568, 5
      %v571 = vsel %vm341, %v566, %v570
      %v572 = vshrl.u32 %v309, 16
      %v574 = vrot.slane %v572, 4
      %v575 = vor.u32 %v574, %v570
      %v576 = vrot.slane %v575, 4
      %v578 = vshll.u32 %v332, 16
      %v580 = vrot.slane %v578, 5
      %v581 = vsel %vm341, %v576, %v580
      %v583 = vshrl.u32 %v310, 16
      %v585 = vrot.slane %v583, 4
      %v586 = vshll.u32 %v310, 16
      %v588 = vrot.slane %v586, 5
      %v589 = vor.u32 %v585, %v588
      %v590 = vrot.slane %v589, 4
      %v592 = vshll.u32 %v311, 16
      %v594 = vrot.slane %v592, 5
      %v595 = vsel %vm341, %v590, %v594
      %v596 = vshrl.u32 %v311, 16
      %v598 = vrot.slane %v596, 4
      %v599 = vor.u32 %v598, %v594
      %v600 = vrot.slane %v599, 4
      %v602 = vshll.u32 %v333, 16
      %v604 = vrot.slane %v602, 5
      %v605 = vsel %vm341, %v600, %v604
      %v607 = vshrl.u32 %v312, 16
      %v609 = vrot.slane %v607, 4
      %v610 = vshll.u32 %v312, 16
      %v612 = vrot.slane %v610, 5
      %v613 = vor.u32 %v609, %v612
      %v614 = vrot.slane %v613, 4
      %v616 = vshll.u32 %v313, 16
      %v618 = vrot.slane %v616, 5
      %v619 = vsel %vm341, %v614, %v618
      %v620 = vshrl.u32 %v313, 16
      %v622 = vrot.slane %v620, 4
      %v623 = vor.u32 %v622, %v618
      %v624 = vrot.slane %v623, 4
      %v626 = vshll.u32 %v334, 16
      %v628 = vrot.slane %v626, 5
      %v629 = vsel %vm341, %v624, %v628
      %v631 = vshrl.u32 %v314, 16
      %v633 = vrot.slane %v631, 4
      %v634 = vshll.u32 %v314, 16
      %v636 = vrot.slane %v634, 5
      %v637 = vor.u32 %v633, %v636
      %v638 = vrot.slane %v637, 4
      %v640 = vshll.u32 %v315, 16
      %v642 = vrot.slane %v640, 5
      %v643 = vsel %vm341, %v638, %v642
      %v644 = vshrl.u32 %v315, 16
      %v646 = vrot.slane %v644, 4
      %v647 = vor.u32 %v646, %v642
      %v648 = vrot.slane %v647, 4
      %v650 = vshll.u32 %v335, 16
      %v652 = vrot.slane %v650, 5
      %v653 = vsel %vm341, %v648, %v652
      %v655 = vshrl.u32 %v316, 16
      %v657 = vrot.slane %v655, 4
      %v658 = vshll.u32 %v316, 16
      %v660 = vrot.slane %v658, 5
      %v661 = vor.u32 %v657, %v660
      %v662 = vrot.slane %v661, 4
      %v664 = vshll.u32 %v317, 16
      %v666 = vrot.slane %v664, 5
      %v667 = vsel %vm341, %v662, %v666
      %v668 = vshrl.u32 %v317, 16
      %v670 = vrot.slane %v668, 4
      %v671 = vor.u32 %v670, %v666
      %v672 = vrot.slane %v671, 4
      %v674 = vshll.u32 %v336, 16
      %v676 = vrot.slane %v674, 5
      %v677 = vsel %vm341, %v672, %v676
      %v679 = vshrl.u32 %v318, 16
      %v681 = vrot.slane %v679, 4
      %v682 = vshll.u32 %v318, 16
      %v684 = vrot.slane %v682, 5
      %v685 = vor.u32 %v681, %v684
      %v686 = vrot.slane %v685, 4
      %v688 = vshll.u32 %v319, 16
      %v690 = vrot.slane %v688, 5
      %v691 = vsel %vm341, %v686, %v690
      %v692 = vshrl.u32 %v319, 16
      %v694 = vrot.slane %v692, 4
      %v695 = vor.u32 %v694, %v690
      %v696 = vrot.slane %v695, 4
      %v698 = vshll.u32 %v337, 16
      %v700 = vrot.slane %v698, 5
      %v701 = vsel %vm341, %v696, %v700
      %v703 = vshrl.u32 %v320, 16
      %v705 = vrot.slane %v703, 4
      %v706 = vshll.u32 %v320, 16
      %v708 = vrot.slane %v706, 5
      %v709 = vor.u32 %v705, %v708
      %v710 = vrot.slane %v709, 4
      %v712 = vshll.u32 %v321, 16
      %v714 = vrot.slane %v712, 5
      %v715 = vsel %vm341, %v710, %v714
      %v716 = vshrl.u32 %v321, 16
      %v718 = vrot.slane %v716, 4
      %v719 = vor.u32 %v718, %v714
      %v720 = vrot.slane %v719, 4
      %v722 = vshll.u32 %v338, 16
      %v724 = vrot.slane %v722, 5
      %v725 = vsel %vm341, %v720, %v724
      %s726 = scalar_lea.vmem %s1, 4
      %v727 = vld [vmem:[%s726] sm:$0xf]
      %v728 = vunpack.c.l.b16 %v355
      %v729 = vunpack.c.l.b16 %v365
      %v730 = vunpack.c.l.b16 %v379
      %v731 = vunpack.c.l.b16 %v389
      %v732 = vunpack.c.l.b16 %v403
      %v733 = vunpack.c.l.b16 %v413
      %v734 = vunpack.c.l.b16 %v427
      %v735 = vunpack.c.l.b16 %v437
      %v736 = vunpack.c.l.b16 %v451
      %v737 = vunpack.c.l.b16 %v461
      %v738 = vunpack.c.l.b16 %v475
      %v739 = vunpack.c.l.b16 %v485
      %v740 = vunpack.c.l.b16 %v499
      %v741 = vunpack.c.l.b16 %v509
      %v742 = vunpack.c.l.b16 %v523
      %v743 = vunpack.c.l.b16 %v533
      %v744 = vunpack.c.l.b16 %v547
      %v745 = vunpack.c.l.b16 %v557
      %v746 = vunpack.c.l.b16 %v571
      %v747 = vunpack.c.l.b16 %v581
      %v748 = vunpack.c.l.b16 %v595
      %v749 = vunpack.c.l.b16 %v605
      %v750 = vunpack.c.l.b16 %v619
      %v751 = vunpack.c.l.b16 %v629
      %v752 = vunpack.c.l.b16 %v643
      %v753 = vunpack.c.l.b16 %v653
      %v754 = vunpack.c.l.b16 %v667
      %v755 = vunpack.c.l.b16 %v677
      %v756 = vunpack.c.l.b16 %v691
      %v757 = vunpack.c.l.b16 %v701
      %v758 = vunpack.c.l.b16 %v715
      %v759 = vunpack.c.l.b16 %v725
      %v760 = vpack.c.b16 %v729, %v728
      %v761 = vpack.c.b16 %v731, %v730
      %v762 = vpack.c.b16 %v733, %v732
      %v763 = vpack.c.b16 %v735, %v734
      %v764 = vpack.c.b16 %v737, %v736
      %v765 = vpack.c.b16 %v739, %v738
      %v766 = vpack.c.b16 %v741, %v740
      %v767 = vpack.c.b16 %v743, %v742
      %v768 = vpack.c.b16 %v745, %v744
      %v769 = vpack.c.b16 %v747, %v746
      %v770 = vpack.c.b16 %v749, %v748
      %v771 = vpack.c.b16 %v751, %v750
      %v772 = vpack.c.b16 %v753, %v752
      %v773 = vpack.c.b16 %v755, %v754
      %v774 = vpack.c.b16 %v757, %v756
      %v775 = vpack.c.b16 %v759, %v758
      %vm776 = vcmask 31744
      %v778 = vsel %vm776, %v727, 0
      %v781 = vsel %vm776, %v760, 0
      %v784 = vsel %vm776, %v761, 0
      %v787 = vsel %vm776, %v762, 0
      %v790 = vsel %vm776, %v763, 0
      %v793 = vsel %vm776, %v764, 0
      %v796 = vsel %vm776, %v765, 0
      %v799 = vsel %vm776, %v766, 0
      %v802 = vsel %vm776, %v767, 0
      %v805 = vsel %vm776, %v768, 0
      %v808 = vsel %vm776, %v769, 0
      %v811 = vsel %vm776, %v770, 0
      %v814 = vsel %vm776, %v771, 0
      %v817 = vsel %vm776, %v772, 0
      %v820 = vsel %vm776, %v773, 0
      %v823 = vsel %vm776, %v774, 0
      %v826 = vsel %vm776, %v775, 0
      %828 = vmatprep.subr.bf16.mxu0 0
      %829 = vmatpush1.bf16.xpose.msra.mxu0 %v781
      %830 = vmatprep.subr.bf16.mxu0 0
      %831 = vmatpush1.bf16.xpose.msra.mxu0 %v784
      %832 = vmatprep.subr.bf16.mxu0 0
      %833 = vmatpush1.bf16.xpose.msra.mxu0 %v787
      %834 = vmatprep.subr.bf16.mxu0 0
      %835 = vmatpush1.bf16.xpose.msra.mxu0 %v790
      %836 = vmatprep.subr.bf16.mxu0 0
      %837 = vmatpush1.bf16.xpose.msra.mxu0 %v793
      %838 = vmatprep.subr.bf16.mxu0 0
      %839 = vmatpush1.bf16.xpose.msra.mxu0 %v796
      %840 = vmatprep.subr.bf16.mxu0 0
      %841 = vmatpush1.bf16.xpose.msra.mxu0 %v799
      %842 = vmatprep.subr.bf16.mxu0 0
      %843 = vmatpush1.bf16.xpose.msra.mxu0 %v802
      %844 = vmatprep.subr.bf16.mxu0 0
      %845 = vmatpush1.bf16.xpose.msra.mxu0 %v805
      %846 = vmatprep.subr.bf16.mxu0 0
      %847 = vmatpush1.bf16.xpose.msra.mxu0 %v808
      %848 = vmatprep.subr.bf16.mxu0 0
      %849 = vmatpush1.bf16.xpose.msra.mxu0 %v811
      %850 = vmatprep.subr.bf16.mxu0 0
      %851 = vmatpush1.bf16.xpose.msra.mxu0 %v814
      %852 = vmatprep.subr.bf16.mxu0 0
      %853 = vmatpush1.bf16.xpose.msra.mxu0 %v817
      %854 = vmatprep.subr.bf16.mxu0 0
      %855 = vmatpush1.bf16.xpose.msra.mxu0 %v820
      %856 = vmatprep.subr.bf16.mxu0 0
      %857 = vmatpush1.bf16.xpose.msra.mxu0 %v823
      %858 = vmatprep.subr.bf16.mxu0 0
      %859 = vmatpush1.bf16.xpose.msra.mxu0 %v826
      %860 = vmatprep.mubr.bf16.mxu0 0
      %861 = vmatmul.mubr.bf16.gmra.mrb[0].mxu0 %v778
      %v862 = vpop.f32.mrb[0].mxu0
      %v863 = vadd.f32 0.0, %v862
      %v864 = vpop.f32.mrb[0].mxu0
      %v865 = vadd.f32 0.0, %v864
      %v866 = vpop.f32.mrb[0].mxu0
      %v867 = vpop.f32.mrb[0].mxu0
      %868 = vdwg.mxu0
      %v901 = vunpack.c.l.b16 %v290
      %v902 = vunpack.c.l.b16 %v291
      %v903 = vunpack.c.l.b16 %v292
      %v904 = vunpack.c.l.b16 %v293
      %v905 = vunpack.c.l.b16 %v294
      %v906 = vunpack.c.l.b16 %v295
      %v907 = vunpack.c.l.b16 %v296
      %v908 = vunpack.c.l.b16 %v297
      %v909 = vunpack.c.l.b16 %v298
      %v910 = vunpack.c.l.b16 %v299
      %v911 = vunpack.c.l.b16 %v300
      %v912 = vunpack.c.l.b16 %v301
      %v913 = vunpack.c.l.b16 %v302
      %v914 = vunpack.c.l.b16 %v303
      %v915 = vunpack.c.l.b16 %v304
      %v916 = vunpack.c.l.b16 %v305
      %v917 = vunpack.c.l.b16 %v306
      %v918 = vunpack.c.l.b16 %v307
      %v919 = vunpack.c.l.b16 %v308
      %v920 = vunpack.c.l.b16 %v309
      %v921 = vunpack.c.l.b16 %v310
      %v922 = vunpack.c.l.b16 %v311
      %v923 = vunpack.c.l.b16 %v312
      %v924 = vunpack.c.l.b16 %v313
      %v925 = vunpack.c.l.b16 %v314
      %v926 = vunpack.c.l.b16 %v315
      %v927 = vunpack.c.l.b16 %v316
      %v928 = vunpack.c.l.b16 %v317
      %v929 = vunpack.c.l.b16 %v318
      %v930 = vunpack.c.l.b16 %v319
      %v931 = vunpack.c.l.b16 %v320
      %v932 = vunpack.c.l.b16 %v321
      %v933 = vpack.c.b16 %v902, %v901
      %v934 = vpack.c.b16 %v904, %v903
      %v935 = vpack.c.b16 %v906, %v905
      %v936 = vpack.c.b16 %v908, %v907
      %v937 = vpack.c.b16 %v910, %v909
      %v938 = vpack.c.b16 %v912, %v911
      %v939 = vpack.c.b16 %v914, %v913
      %v940 = vpack.c.b16 %v916, %v915
      %v941 = vpack.c.b16 %v918, %v917
      %v942 = vpack.c.b16 %v920, %v919
      %v943 = vpack.c.b16 %v922, %v921
      %v944 = vpack.c.b16 %v924, %v923
      %v945 = vpack.c.b16 %v926, %v925
      %v946 = vpack.c.b16 %v928, %v927
      %v947 = vpack.c.b16 %v930, %v929
      %v948 = vpack.c.b16 %v932, %v931
      %v950 = vsel %vm776, %v322, 0
      %v953 = vsel %vm776, %v933, 0
      %v956 = vsel %vm776, %v934, 0
      %v959 = vsel %vm776, %v935, 0
      %v962 = vsel %vm776, %v936, 0
      %v965 = vsel %vm776, %v937, 0
      %v968 = vsel %vm776, %v938, 0
      %v971 = vsel %vm776, %v939, 0
      %v974 = vsel %vm776, %v940, 0
      %v977 = vsel %vm776, %v941, 0
      %v980 = vsel %vm776, %v942, 0
      %v983 = vsel %vm776, %v943, 0
      %v986 = vsel %vm776, %v944, 0
      %v989 = vsel %vm776, %v945, 0
      %v992 = vsel %vm776, %v946, 0
      %v995 = vsel %vm776, %v947, 0
      %v998 = vsel %vm776, %v948, 0
      %1000 = vmatprep.subr.bf16.mxu0 0
      %1001 = vmatpush1.bf16.xpose.msra.mxu0 %v953
      %1002 = vmatprep.subr.bf16.mxu0 0
      %1003 = vmatpush1.bf16.xpose.msra.mxu0 %v956
      %1004 = vmatprep.subr.bf16.mxu0 0
      %1005 = vmatpush1.bf16.xpose.msra.mxu0 %v959
      %1006 = vmatprep.subr.bf16.mxu0 0
      %1007 = vmatpush1.bf16.xpose.msra.mxu0 %v962
      %1008 = vmatprep.subr.bf16.mxu0 0
      %1009 = vmatpush1.bf16.xpose.msra.mxu0 %v965
      %1010 = vmatprep.subr.bf16.mxu0 0
      %1011 = vmatpush1.bf16.xpose.msra.mxu0 %v968
      %1012 = vmatprep.subr.bf16.mxu0 0
      %1013 = vmatpush1.bf16.xpose.msra.mxu0 %v971
      %1014 = vmatprep.subr.bf16.mxu0 0
      %1015 = vmatpush1.bf16.xpose.msra.mxu0 %v974
      %1016 = vmatprep.subr.bf16.mxu0 0
      %1017 = vmatpush1.bf16.xpose.msra.mxu0 %v977
      %1018 = vmatprep.subr.bf16.mxu0 0
      %1019 = vmatpush1.bf16.xpose.msra.mxu0 %v980
      %1020 = vmatprep.subr.bf16.mxu0 0
      %1021 = vmatpush1.bf16.xpose.msra.mxu0 %v983
      %1022 = vmatprep.subr.bf16.mxu0 0
      %1023 = vmatpush1.bf16.xpose.msra.mxu0 %v986
      %1024 = vmatprep.subr.bf16.mxu0 0
      %1025 = vmatpush1.bf16.xpose.msra.mxu0 %v989
      %1026 = vmatprep.subr.bf16.mxu0 0
      %1027 = vmatpush1.bf16.xpose.msra.mxu0 %v992
      %1028 = vmatprep.subr.bf16.mxu0 0
      %1029 = vmatpush1.bf16.xpose.msra.mxu0 %v995
      %1030 = vmatprep.subr.bf16.mxu0 0
      %1031 = vmatpush1.bf16.xpose.msra.mxu0 %v998
      %1032 = vmatprep.mubr.bf16.mxu0 0
      %1033 = vmatmul.mubr.bf16.gmra.mrb[0].mxu0 %v950
      %v1034 = vpop.f32.mrb[0].mxu0
      %v1035 = vadd.f32 %v863, %v1034
      %v1036 = vpop.f32.mrb[0].mxu0
      %v1037 = vadd.f32 %v865, %v1036
      %v1038 = vpop.f32.mrb[0].mxu0
      %v1039 = vpop.f32.mrb[0].mxu0
      %1040 = vdwg.mxu0
      %v1041 = vld [vmem:[%s289] sm:$0xe]
      %v1042 = vld [vmem:[%s289 + $0xc] sm:$0xe]
      %v1043 = vld [vmem:[%s289 + $0x18] sm:$0xe]
      %v1044 = vld [vmem:[%s289 + $0x24] sm:$0xe]
      %v1045 = vld [vmem:[%s289 + $0x30] sm:$0xe]
      %v1046 = vld [vmem:[%s289 + $0x3c] sm:$0xe]
      %v1047 = vld [vmem:[%s289 + $0x48] sm:$0xe]
      %v1048 = vld [vmem:[%s289 + $0x54] sm:$0xe]
      %v1049 = vld [vmem:[%s289 + $0x60] sm:$0xe]
      %v1050 = vld [vmem:[%s289 + $0x6c] sm:$0xe]
      %v1051 = vld [vmem:[%s289 + $0x78] sm:$0xe]
      %v1052 = vld [vmem:[%s289 + $0x84] sm:$0xe]
      %v1053 = vld [vmem:[%s289 + $0x90] sm:$0xe]
      %v1054 = vld [vmem:[%s289 + $0x9c] sm:$0xe]
      %v1055 = vld [vmem:[%s289 + $0xa8] sm:$0xe]
      %v1056 = vld [vmem:[%s289 + $0xb4] sm:$0xe]
      %vm1089 = vcmask 1042432
      %vm1090 = vcmask 1046532
      %vm1091 = vmor %vm1089, %vm1090
      %v1092 = vrot.slane %v1041, 5
      %v1093 = vrot.slane %v1092, 4
      %v1094 = vrot.slane %v291, 5
      %v1095 = vsel %vm1091, %v1093, %v1094
      %v1096 = vrot.slane %v1094, 4
      %v1097 = vrot.slane %v323, 5
      %v1098 = vsel %vm1091, %v1096, %v1097
      %v1099 = vrot.slane %v1042, 5
      %v1100 = vrot.slane %v1099, 4
      %v1101 = vrot.slane %v293, 5
      %v1102 = vsel %vm1091, %v1100, %v1101
      %v1103 = vrot.slane %v1101, 4
      %v1104 = vrot.slane %v324, 5
      %v1105 = vsel %vm1091, %v1103, %v1104
      %v1106 = vrot.slane %v1043, 5
      %v1107 = vrot.slane %v1106, 4
      %v1108 = vrot.slane %v295, 5
      %v1109 = vsel %vm1091, %v1107, %v1108
      %v1110 = vrot.slane %v1108, 4
      %v1111 = vrot.slane %v325, 5
      %v1112 = vsel %vm1091, %v1110, %v1111
      %v1113 = vrot.slane %v1044, 5
      %v1114 = vrot.slane %v1113, 4
      %v1115 = vrot.slane %v297, 5
      %v1116 = vsel %vm1091, %v1114, %v1115
      %v1117 = vrot.slane %v1115, 4
      %v1118 = vrot.slane %v326, 5
      %v1119 = vsel %vm1091, %v1117, %v1118
      %v1120 = vrot.slane %v1045, 5
      %v1121 = vrot.slane %v1120, 4
      %v1122 = vrot.slane %v299, 5
      %v1123 = vsel %vm1091, %v1121, %v1122
      %v1124 = vrot.slane %v1122, 4
      %v1125 = vrot.slane %v327, 5
      %v1126 = vsel %vm1091, %v1124, %v1125
      %v1127 = vrot.slane %v1046, 5
      %v1128 = vrot.slane %v1127, 4
      %v1129 = vrot.slane %v301, 5
      %v1130 = vsel %vm1091, %v1128, %v1129
      %v1131 = vrot.slane %v1129, 4
      %v1132 = vrot.slane %v328, 5
      %v1133 = vsel %vm1091, %v1131, %v1132
      %v1134 = vrot.slane %v1047, 5
      %v1135 = vrot.slane %v1134, 4
      %v1136 = vrot.slane %v303, 5
      %v1137 = vsel %vm1091, %v1135, %v1136
      %v1138 = vrot.slane %v1136, 4
      %v1139 = vrot.slane %v329, 5
      %v1140 = vsel %vm1091, %v1138, %v1139
      %v1141 = vrot.slane %v1048, 5
      %v1142 = vrot.slane %v1141, 4
      %v1143 = vrot.slane %v305, 5
      %v1144 = vsel %vm1091, %v1142, %v1143
      %v1145 = vrot.slane %v1143, 4
      %v1146 = vrot.slane %v330, 5
      %v1147 = vsel %vm1091, %v1145, %v1146
      %v1148 = vrot.slane %v1049, 5
      %v1149 = vrot.slane %v1148, 4
      %v1150 = vrot.slane %v307, 5
      %v1151 = vsel %vm1091, %v1149, %v1150
      %v1152 = vrot.slane %v1150, 4
      %v1153 = vrot.slane %v331, 5
      %v1154 = vsel %vm1091, %v1152, %v1153
      %v1155 = vrot.slane %v1050, 5
      %v1156 = vrot.slane %v1155, 4
      %v1157 = vrot.slane %v309, 5
      %v1158 = vsel %vm1091, %v1156, %v1157
      %v1159 = vrot.slane %v1157, 4
      %v1160 = vrot.slane %v332, 5
      %v1161 = vsel %vm1091, %v1159, %v1160
      %v1162 = vrot.slane %v1051, 5
      %v1163 = vrot.slane %v1162, 4
      %v1164 = vrot.slane %v311, 5
      %v1165 = vsel %vm1091, %v1163, %v1164
      %v1166 = vrot.slane %v1164, 4
      %v1167 = vrot.slane %v333, 5
      %v1168 = vsel %vm1091, %v1166, %v1167
      %v1169 = vrot.slane %v1052, 5
      %v1170 = vrot.slane %v1169, 4
      %v1171 = vrot.slane %v313, 5
      %v1172 = vsel %vm1091, %v1170, %v1171
      %v1173 = vrot.slane %v1171, 4
      %v1174 = vrot.slane %v334, 5
      %v1175 = vsel %vm1091, %v1173, %v1174
      %v1176 = vrot.slane %v1053, 5
      %v1177 = vrot.slane %v1176, 4
      %v1178 = vrot.slane %v315, 5
      %v1179 = vsel %vm1091, %v1177, %v1178
      %v1180 = vrot.slane %v1178, 4
      %v1181 = vrot.slane %v335, 5
      %v1182 = vsel %vm1091, %v1180, %v1181
      %v1183 = vrot.slane %v1054, 5
      %v1184 = vrot.slane %v1183, 4
      %v1185 = vrot.slane %v317, 5
      %v1186 = vsel %vm1091, %v1184, %v1185
      %v1187 = vrot.slane %v1185, 4
      %v1188 = vrot.slane %v336, 5
      %v1189 = vsel %vm1091, %v1187, %v1188
      %v1190 = vrot.slane %v1055, 5
      %v1191 = vrot.slane %v1190, 4
      %v1192 = vrot.slane %v319, 5
      %v1193 = vsel %vm1091, %v1191, %v1192
      %v1194 = vrot.slane %v1192, 4
      %v1195 = vrot.slane %v337, 5
      %v1196 = vsel %vm1091, %v1194, %v1195
      %v1197 = vrot.slane %v1056, 5
      %v1198 = vrot.slane %v1197, 4
      %v1199 = vrot.slane %v321, 5
      %v1200 = vsel %vm1091, %v1198, %v1199
      %v1201 = vrot.slane %v1199, 4
      %v1202 = vrot.slane %v338, 5
      %v1203 = vsel %vm1091, %v1201, %v1202
      %s1204 = scalar_lea.vmem %s1, 8
      %v1205 = vld [vmem:[%s1204] sm:$0xf]
      %v1206 = vunpack.c.l.b16 %v1095
      %v1207 = vunpack.c.l.b16 %v1098
      %v1208 = vunpack.c.l.b16 %v1102
      %v1209 = vunpack.c.l.b16 %v1105
      %v1210 = vunpack.c.l.b16 %v1109
      %v1211 = vunpack.c.l.b16 %v1112
      %v1212 = vunpack.c.l.b16 %v1116
      %v1213 = vunpack.c.l.b16 %v1119
      %v1214 = vunpack.c.l.b16 %v1123
      %v1215 = vunpack.c.l.b16 %v1126
      %v1216 = vunpack.c.l.b16 %v1130
      %v1217 = vunpack.c.l.b16 %v1133
      %v1218 = vunpack.c.l.b16 %v1137
      %v1219 = vunpack.c.l.b16 %v1140
      %v1220 = vunpack.c.l.b16 %v1144
      %v1221 = vunpack.c.l.b16 %v1147
      %v1222 = vunpack.c.l.b16 %v1151
      %v1223 = vunpack.c.l.b16 %v1154
      %v1224 = vunpack.c.l.b16 %v1158
      %v1225 = vunpack.c.l.b16 %v1161
      %v1226 = vunpack.c.l.b16 %v1165
      %v1227 = vunpack.c.l.b16 %v1168
      %v1228 = vunpack.c.l.b16 %v1172
      %v1229 = vunpack.c.l.b16 %v1175
      %v1230 = vunpack.c.l.b16 %v1179
      %v1231 = vunpack.c.l.b16 %v1182
      %v1232 = vunpack.c.l.b16 %v1186
      %v1233 = vunpack.c.l.b16 %v1189
      %v1234 = vunpack.c.l.b16 %v1193
      %v1235 = vunpack.c.l.b16 %v1196
      %v1236 = vunpack.c.l.b16 %v1200
      %v1237 = vunpack.c.l.b16 %v1203
      %v1238 = vpack.c.b16 %v1207, %v1206
      %v1239 = vpack.c.b16 %v1209, %v1208
      %v1240 = vpack.c.b16 %v1211, %v1210
      %v1241 = vpack.c.b16 %v1213, %v1212
      %v1242 = vpack.c.b16 %v1215, %v1214
      %v1243 = vpack.c.b16 %v1217, %v1216
      %v1244 = vpack.c.b16 %v1219, %v1218
      %v1245 = vpack.c.b16 %v1221, %v1220
      %v1246 = vpack.c.b16 %v1223, %v1222
      %v1247 = vpack.c.b16 %v1225, %v1224
      %v1248 = vpack.c.b16 %v1227, %v1226
      %v1249 = vpack.c.b16 %v1229, %v1228
      %v1250 = vpack.c.b16 %v1231, %v1230
      %v1251 = vpack.c.b16 %v1233, %v1232
      %v1252 = vpack.c.b16 %v1235, %v1234
      %v1253 = vpack.c.b16 %v1237, %v1236
      %v1255 = vsel %vm776, %v1205, 0
      %v1258 = vsel %vm776, %v1238, 0
      %v1261 = vsel %vm776, %v1239, 0
      %v1264 = vsel %vm776, %v1240, 0
      %v1267 = vsel %vm776, %v1241, 0
      %v1270 = vsel %vm776, %v1242, 0
      %v1273 = vsel %vm776, %v1243, 0
      %v1276 = vsel %vm776, %v1244, 0
      %v1279 = vsel %vm776, %v1245, 0
      %v1282 = vsel %vm776, %v1246, 0
      %v1285 = vsel %vm776, %v1247, 0
      %v1288 = vsel %vm776, %v1248, 0
      %v1291 = vsel %vm776, %v1249, 0
      %v1294 = vsel %vm776, %v1250, 0
      %v1297 = vsel %vm776, %v1251, 0
      %v1300 = vsel %vm776, %v1252, 0
      %v1303 = vsel %vm776, %v1253, 0
      %1305 = vmatprep.subr.bf16.mxu0 0
      %1306 = vmatpush1.bf16.xpose.msra.mxu0 %v1258
      %1307 = vmatprep.subr.bf16.mxu0 0
      %1308 = vmatpush1.bf16.xpose.msra.mxu0 %v1261
      %1309 = vmatprep.subr.bf16.mxu0 0
      %1310 = vmatpush1.bf16.xpose.msra.mxu0 %v1264
      %1311 = vmatprep.subr.bf16.mxu0 0
      %1312 = vmatpush1.bf16.xpose.msra.mxu0 %v1267
      %1313 = vmatprep.subr.bf16.mxu0 0
      %1314 = vmatpush1.bf16.xpose.msra.mxu0 %v1270
      %1315 = vmatprep.subr.bf16.mxu0 0
      %1316 = vmatpush1.bf16.xpose.msra.mxu0 %v1273
      %1317 = vmatprep.subr.bf16.mxu0 0
      %1318 = vmatpush1.bf16.xpose.msra.mxu0 %v1276
      %1319 = vmatprep.subr.bf16.mxu0 0
      %1320 = vmatpush1.bf16.xpose.msra.mxu0 %v1279
      %1321 = vmatprep.subr.bf16.mxu0 0
      %1322 = vmatpush1.bf16.xpose.msra.mxu0 %v1282
      %1323 = vmatprep.subr.bf16.mxu0 0
      %1324 = vmatpush1.bf16.xpose.msra.mxu0 %v1285
      %1325 = vmatprep.subr.bf16.mxu0 0
      %1326 = vmatpush1.bf16.xpose.msra.mxu0 %v1288
      %1327 = vmatprep.subr.bf16.mxu0 0
      %1328 = vmatpush1.bf16.xpose.msra.mxu0 %v1291
      %1329 = vmatprep.subr.bf16.mxu0 0
      %1330 = vmatpush1.bf16.xpose.msra.mxu0 %v1294
      %1331 = vmatprep.subr.bf16.mxu0 0
      %1332 = vmatpush1.bf16.xpose.msra.mxu0 %v1297
      %1333 = vmatprep.subr.bf16.mxu0 0
      %1334 = vmatpush1.bf16.xpose.msra.mxu0 %v1300
      %1335 = vmatprep.subr.bf16.mxu0 0
      %1336 = vmatpush1.bf16.xpose.msra.mxu0 %v1303
      %1337 = vmatprep.mubr.bf16.mxu0 0
      %1338 = vmatmul.mubr.bf16.gmra.mrb[0].mxu0 %v1255
      %v1339 = vpop.f32.mrb[0].mxu0
      %v1340 = vadd.f32 0.0, %v1339
      %v1341 = vpop.f32.mrb[0].mxu0
      %v1342 = vadd.f32 0.0, %v1341
      %v1343 = vpop.f32.mrb[0].mxu0
      %v1344 = vpop.f32.mrb[0].mxu0
      %1345 = vdwg.mxu0
      %v1346 = vadd.f32 %v1035, %v1340
      %v1347 = vadd.f32 %v1037, %v1342
      %s1348 = sadd.s32 %s286, 1
      %s1349 = smul.u32 %s1348, 3
      %s1350 = smul.addr %s1349, 4
      %s1351 = scalar_lea.vmem %s260, %s1350
      %v1352 = vld [vmem:[%s1351] sm:$0xf]
      %v1353 = vld [vmem:[%s1351 + $0x4] sm:$0xf]
      %v1354 = vld [vmem:[%s1351 + $0xc] sm:$0xf]
      %v1355 = vld [vmem:[%s1351 + $0x10] sm:$0xf]
      %v1356 = vld [vmem:[%s1351 + $0x18] sm:$0xf]
      %v1357 = vld [vmem:[%s1351 + $0x1c] sm:$0xf]
      %v1358 = vld [vmem:[%s1351 + $0x24] sm:$0xf]
      %v1359 = vld [vmem:[%s1351 + $0x28] sm:$0xf]
      %v1360 = vld [vmem:[%s1351 + $0x30] sm:$0xf]
      %v1361 = vld [vmem:[%s1351 + $0x34] sm:$0xf]
      %v1362 = vld [vmem:[%s1351 + $0x3c] sm:$0xf]
      %v1363 = vld [vmem:[%s1351 + $0x40] sm:$0xf]
      %v1364 = vld [vmem:[%s1351 + $0x48] sm:$0xf]
      %v1365 = vld [vmem:[%s1351 + $0x4c] sm:$0xf]
      %v1366 = vld [vmem:[%s1351 + $0x54] sm:$0xf]
      %v1367 = vld [vmem:[%s1351 + $0x58] sm:$0xf]
      %v1368 = vld [vmem:[%s1351 + $0x60] sm:$0xf]
      %v1369 = vld [vmem:[%s1351 + $0x64] sm:$0xf]
      %v1370 = vld [vmem:[%s1351 + $0x6c] sm:$0xf]
      %v1371 = vld [vmem:[%s1351 + $0x70] sm:$0xf]
      %v1372 = vld [vmem:[%s1351 + $0x78] sm:$0xf]
      %v1373 = vld [vmem:[%s1351 + $0x7c] sm:$0xf]
      %v1374 = vld [vmem:[%s1351 + $0x84] sm:$0xf]
      %v1375 = vld [vmem:[%s1351 + $0x88] sm:$0xf]
      %v1376 = vld [vmem:[%s1351 + $0x90] sm:$0xf]
      %v1377 = vld [vmem:[%s1351 + $0x94] sm:$0xf]
      %v1378 = vld [vmem:[%s1351 + $0x9c] sm:$0xf]
      %v1379 = vld [vmem:[%s1351 + $0xa0] sm:$0xf]
      %v1380 = vld [vmem:[%s1351 + $0xa8] sm:$0xf]
      %v1381 = vld [vmem:[%s1351 + $0xac] sm:$0xf]
      %v1382 = vld [vmem:[%s1351 + $0xb4] sm:$0xf]
      %v1383 = vld [vmem:[%s1351 + $0xb8] sm:$0xf]
      %s1384 = scalar_lea.vmem %s1, 12
      %v1385 = vld [vmem:[%s1384] sm:$0xf]
      %v1418 = vunpack.c.l.b16 %v1352
      %v1419 = vunpack.c.l.b16 %v1353
      %v1420 = vunpack.c.l.b16 %v1354
      %v1421 = vunpack.c.l.b16 %v1355
      %v1422 = vunpack.c.l.b16 %v1356
      %v1423 = vunpack.c.l.b16 %v1357
      %v1424 = vunpack.c.l.b16 %v1358
      %v1425 = vunpack.c.l.b16 %v1359
      %v1426 = vunpack.c.l.b16 %v1360
      %v1427 = vunpack.c.l.b16 %v1361
      %v1428 = vunpack.c.l.b16 %v1362
      %v1429 = vunpack.c.l.b16 %v1363
      %v1430 = vunpack.c.l.b16 %v1364
      %v1431 = vunpack.c.l.b16 %v1365
      %v1432 = vunpack.c.l.b16 %v1366
      %v1433 = vunpack.c.l.b16 %v1367
      %v1434 = vunpack.c.l.b16 %v1368
      %v1435 = vunpack.c.l.b16 %v1369
      %v1436 = vunpack.c.l.b16 %v1370
      %v1437 = vunpack.c.l.b16 %v1371
      %v1438 = vunpack.c.l.b16 %v1372
      %v1439 = vunpack.c.l.b16 %v1373
      %v1440 = vunpack.c.l.b16 %v1374
      %v1441 = vunpack.c.l.b16 %v1375
      %v1442 = vunpack.c.l.b16 %v1376
      %v1443 = vunpack.c.l.b16 %v1377
      %v1444 = vunpack.c.l.b16 %v1378
      %v1445 = vunpack.c.l.b16 %v1379
      %v1446 = vunpack.c.l.b16 %v1380
      %v1447 = vunpack.c.l.b16 %v1381
      %v1448 = vunpack.c.l.b16 %v1382
      %v1449 = vunpack.c.l.b16 %v1383
      %v1450 = vpack.c.b16 %v1419, %v1418
      %v1451 = vpack.c.b16 %v1421, %v1420
      %v1452 = vpack.c.b16 %v1423, %v1422
      %v1453 = vpack.c.b16 %v1425, %v1424
      %v1454 = vpack.c.b16 %v1427, %v1426
      %v1455 = vpack.c.b16 %v1429, %v1428
      %v1456 = vpack.c.b16 %v1431, %v1430
      %v1457 = vpack.c.b16 %v1433, %v1432
      %v1458 = vpack.c.b16 %v1435, %v1434
      %v1459 = vpack.c.b16 %v1437, %v1436
      %v1460 = vpack.c.b16 %v1439, %v1438
      %v1461 = vpack.c.b16 %v1441, %v1440
      %v1462 = vpack.c.b16 %v1443, %v1442
      %v1463 = vpack.c.b16 %v1445, %v1444
      %v1464 = vpack.c.b16 %v1447, %v1446
      %v1465 = vpack.c.b16 %v1449, %v1448
      %v1467 = vsel %vm776, %v1385, 0
      %v1470 = vsel %vm776, %v1450, 0
      %v1473 = vsel %vm776, %v1451, 0
      %v1476 = vsel %vm776, %v1452, 0
      %v1479 = vsel %vm776, %v1453, 0
      %v1482 = vsel %vm776, %v1454, 0
      %v1485 = vsel %vm776, %v1455, 0
      %v1488 = vsel %vm776, %v1456, 0
      %v1491 = vsel %vm776, %v1457, 0
      %v1494 = vsel %vm776, %v1458, 0
      %v1497 = vsel %vm776, %v1459, 0
      %v1500 = vsel %vm776, %v1460, 0
      %v1503 = vsel %vm776, %v1461, 0
      %v1506 = vsel %vm776, %v1462, 0
      %v1509 = vsel %vm776, %v1463, 0
      %v1512 = vsel %vm776, %v1464, 0
      %v1515 = vsel %vm776, %v1465, 0
      %1517 = vmatprep.subr.bf16.mxu0 0
      %1518 = vmatpush1.bf16.xpose.msra.mxu0 %v1470
      %1519 = vmatprep.subr.bf16.mxu0 0
      %1520 = vmatpush1.bf16.xpose.msra.mxu0 %v1473
      %1521 = vmatprep.subr.bf16.mxu0 0
      %1522 = vmatpush1.bf16.xpose.msra.mxu0 %v1476
      %1523 = vmatprep.subr.bf16.mxu0 0
      %1524 = vmatpush1.bf16.xpose.msra.mxu0 %v1479
      %1525 = vmatprep.subr.bf16.mxu0 0
      %1526 = vmatpush1.bf16.xpose.msra.mxu0 %v1482
      %1527 = vmatprep.subr.bf16.mxu0 0
      %1528 = vmatpush1.bf16.xpose.msra.mxu0 %v1485
      %1529 = vmatprep.subr.bf16.mxu0 0
      %1530 = vmatpush1.bf16.xpose.msra.mxu0 %v1488
      %1531 = vmatprep.subr.bf16.mxu0 0
      %1532 = vmatpush1.bf16.xpose.msra.mxu0 %v1491
      %1533 = vmatprep.subr.bf16.mxu0 0
      %1534 = vmatpush1.bf16.xpose.msra.mxu0 %v1494
      %1535 = vmatprep.subr.bf16.mxu0 0
      %1536 = vmatpush1.bf16.xpose.msra.mxu0 %v1497
      %1537 = vmatprep.subr.bf16.mxu0 0
      %1538 = vmatpush1.bf16.xpose.msra.mxu0 %v1500
      %1539 = vmatprep.subr.bf16.mxu0 0
      %1540 = vmatpush1.bf16.xpose.msra.mxu0 %v1503
      %1541 = vmatprep.subr.bf16.mxu0 0
      %1542 = vmatpush1.bf16.xpose.msra.mxu0 %v1506
      %1543 = vmatprep.subr.bf16.mxu0 0
      %1544 = vmatpush1.bf16.xpose.msra.mxu0 %v1509
      %1545 = vmatprep.subr.bf16.mxu0 0
      %1546 = vmatpush1.bf16.xpose.msra.mxu0 %v1512
      %1547 = vmatprep.subr.bf16.mxu0 0
      %1548 = vmatpush1.bf16.xpose.msra.mxu0 %v1515
      %1549 = vmatprep.mubr.bf16.mxu0 0
      %1550 = vmatmul.mubr.bf16.gmra.mrb[0].mxu0 %v1467
      %v1551 = vpop.f32.mrb[0].mxu0
      %v1552 = vadd.f32 0.0, %v1551
      %v1553 = vpop.f32.mrb[0].mxu0
      %v1554 = vadd.f32 0.0, %v1553
      %v1555 = vpop.f32.mrb[0].mxu0
      %v1556 = vpop.f32.mrb[0].mxu0
      %1557 = vdwg.mxu0
      %v1558 = vadd.f32 %v1346, %v1552
      %v1559 = vadd.f32 %v1347, %v1554
      %v1560 = vld [vmem:[%s1351] sm:$0xf]
      %v1561 = vld [vmem:[%s1351 + $0x4] sm:$0xf]
      %v1562 = vld [vmem:[%s1351 + $0x8] sm:$0x1]
      %v1563 = vld [vmem:[%s1351 + $0xc] sm:$0xf]
      %v1564 = vld [vmem:[%s1351 + $0x10] sm:$0xf]
      %v1565 = vld [vmem:[%s1351 + $0x14] sm:$0x1]
      %v1566 = vld [vmem:[%s1351 + $0x18] sm:$0xf]
      %v1567 = vld [vmem:[%s1351 + $0x1c] sm:$0xf]
      %v1568 = vld [vmem:[%s1351 + $0x20] sm:$0x1]
      %v1569 = vld [vmem:[%s1351 + $0x24] sm:$0xf]
      %v1570 = vld [vmem:[%s1351 + $0x28] sm:$0xf]
      %v1571 = vld [vmem:[%s1351 + $0x2c] sm:$0x1]
      %v1572 = vld [vmem:[%s1351 + $0x30] sm:$0xf]
      %v1573 = vld [vmem:[%s1351 + $0x34] sm:$0xf]
      %v1574 = vld [vmem:[%s1351 + $0x38] sm:$0x1]
      %v1575 = vld [vmem:[%s1351 + $0x3c] sm:$0xf]
      %v1576 = vld [vmem:[%s1351 + $0x40] sm:$0xf]
      %v1577 = vld [vmem:[%s1351 + $0x44] sm:$0x1]
      %v1578 = vld [vmem:[%s1351 + $0x48] sm:$0xf]
      %v1579 = vld [vmem:[%s1351 + $0x4c] sm:$0xf]
      %v1580 = vld [vmem:[%s1351 + $0x50] sm:$0x1]
      %v1581 = vld [vmem:[%s1351 + $0x54] sm:$0xf]
      %v1582 = vld [vmem:[%s1351 + $0x58] sm:$0xf]
      %v1583 = vld [vmem:[%s1351 + $0x5c] sm:$0x1]
      %v1584 = vld [vmem:[%s1351 + $0x60] sm:$0xf]
      %v1585 = vld [vmem:[%s1351 + $0x64] sm:$0xf]
      %v1586 = vld [vmem:[%s1351 + $0x68] sm:$0x1]
      %v1587 = vld [vmem:[%s1351 + $0x6c] sm:$0xf]
      %v1588 = vld [vmem:[%s1351 + $0x70] sm:$0xf]
      %v1589 = vld [vmem:[%s1351 + $0x74] sm:$0x1]
      %v1590 = vld [vmem:[%s1351 + $0x78] sm:$0xf]
      %v1591 = vld [vmem:[%s1351 + $0x7c] sm:$0xf]
      %v1592 = vld [vmem:[%s1351 + $0x80] sm:$0x1]
      %v1593 = vld [vmem:[%s1351 + $0x84] sm:$0xf]
      %v1594 = vld [vmem:[%s1351 + $0x88] sm:$0xf]
      %v1595 = vld [vmem:[%s1351 + $0x8c] sm:$0x1]
      %v1596 = vld [vmem:[%s1351 + $0x90] sm:$0xf]
      %v1597 = vld [vmem:[%s1351 + $0x94] sm:$0xf]
      %v1598 = vld [vmem:[%s1351 + $0x98] sm:$0x1]
      %v1599 = vld [vmem:[%s1351 + $0x9c] sm:$0xf]
      %v1600 = vld [vmem:[%s1351 + $0xa0] sm:$0xf]
      %v1601 = vld [vmem:[%s1351 + $0xa4] sm:$0x1]
      %v1602 = vld [vmem:[%s1351 + $0xa8] sm:$0xf]
      %v1603 = vld [vmem:[%s1351 + $0xac] sm:$0xf]
      %v1604 = vld [vmem:[%s1351 + $0xb0] sm:$0x1]
      %v1605 = vld [vmem:[%s1351 + $0xb4] sm:$0xf]
      %v1606 = vld [vmem:[%s1351 + $0xb8] sm:$0xf]
      %v1607 = vld [vmem:[%s1351 + $0xbc] sm:$0x1]
      %v1609 = vshrl.u32 %v1560, 16
      %v1611 = vrot.slane %v1609, 4
      %v1612 = vshll.u32 %v1560, 16
      %v1614 = vrot.slane %v1612, 5
      %v1615 = vor.u32 %v1611, %v1614
      %v1616 = vrot.slane %v1615, 4
      %v1618 = vshll.u32 %v1561, 16
      %v1620 = vrot.slane %v1618, 5
      %v1621 = vsel %vm341, %v1616, %v1620
      %v1622 = vshrl.u32 %v1561, 16
      %v1624 = vrot.slane %v1622, 4
      %v1625 = vor.u32 %v1624, %v1620
      %v1626 = vrot.slane %v1625, 4
      %v1628 = vshll.u32 %v1562, 16
      %v1630 = vrot.slane %v1628, 5
      %v1631 = vsel %vm341, %v1626, %v1630
      %v1633 = vshrl.u32 %v1563, 16
      %v1635 = vrot.slane %v1633, 4
      %v1636 = vshll.u32 %v1563, 16
      %v1638 = vrot.slane %v1636, 5
      %v1639 = vor.u32 %v1635, %v1638
      %v1640 = vrot.slane %v1639, 4
      %v1642 = vshll.u32 %v1564, 16
      %v1644 = vrot.slane %v1642, 5
      %v1645 = vsel %vm341, %v1640, %v1644
      %v1646 = vshrl.u32 %v1564, 16
      %v1648 = vrot.slane %v1646, 4
      %v1649 = vor.u32 %v1648, %v1644
      %v1650 = vrot.slane %v1649, 4
      %v1652 = vshll.u32 %v1565, 16
      %v1654 = vrot.slane %v1652, 5
      %v1655 = vsel %vm341, %v1650, %v1654
      %v1657 = vshrl.u32 %v1566, 16
      %v1659 = vrot.slane %v1657, 4
      %v1660 = vshll.u32 %v1566, 16
      %v1662 = vrot.slane %v1660, 5
      %v1663 = vor.u32 %v1659, %v1662
      %v1664 = vrot.slane %v1663, 4
      %v1666 = vshll.u32 %v1567, 16
      %v1668 = vrot.slane %v1666, 5
      %v1669 = vsel %vm341, %v1664, %v1668
      %v1670 = vshrl.u32 %v1567, 16
      %v1672 = vrot.slane %v1670, 4
      %v1673 = vor.u32 %v1672, %v1668
      %v1674 = vrot.slane %v1673, 4
      %v1676 = vshll.u32 %v1568, 16
      %v1678 = vrot.slane %v1676, 5
      %v1679 = vsel %vm341, %v1674, %v1678
      %v1681 = vshrl.u32 %v1569, 16
      %v1683 = vrot.slane %v1681, 4
      %v1684 = vshll.u32 %v1569, 16
      %v1686 = vrot.slane %v1684, 5
      %v1687 = vor.u32 %v1683, %v1686
      %v1688 = vrot.slane %v1687, 4
      %v1690 = vshll.u32 %v1570, 16
      %v1692 = vrot.slane %v1690, 5
      %v1693 = vsel %vm341, %v1688, %v1692
      %v1694 = vshrl.u32 %v1570, 16
      %v1696 = vrot.slane %v1694, 4
      %v1697 = vor.u32 %v1696, %v1692
      %v1698 = vrot.slane %v1697, 4
      %v1700 = vshll.u32 %v1571, 16
      %v1702 = vrot.slane %v1700, 5
      %v1703 = vsel %vm341, %v1698, %v1702
      %v1705 = vshrl.u32 %v1572, 16
      %v1707 = vrot.slane %v1705, 4
      %v1708 = vshll.u32 %v1572, 16
      %v1710 = vrot.slane %v1708, 5
      %v1711 = vor.u32 %v1707, %v1710
      %v1712 = vrot.slane %v1711, 4
      %v1714 = vshll.u32 %v1573, 16
      %v1716 = vrot.slane %v1714, 5
      %v1717 = vsel %vm341, %v1712, %v1716
      %v1718 = vshrl.u32 %v1573, 16
      %v1720 = vrot.slane %v1718, 4
      %v1721 = vor.u32 %v1720, %v1716
      %v1722 = vrot.slane %v1721, 4
      %v1724 = vshll.u32 %v1574, 16
      %v1726 = vrot.slane %v1724, 5
      %v1727 = vsel %vm341, %v1722, %v1726
      %v1729 = vshrl.u32 %v1575, 16
      %v1731 = vrot.slane %v1729, 4
      %v1732 = vshll.u32 %v1575, 16
      %v1734 = vrot.slane %v1732, 5
      %v1735 = vor.u32 %v1731, %v1734
      %v1736 = vrot.slane %v1735, 4
      %v1738 = vshll.u32 %v1576, 16
      %v1740 = vrot.slane %v1738, 5
      %v1741 = vsel %vm341, %v1736, %v1740
      %v1742 = vshrl.u32 %v1576, 16
      %v1744 = vrot.slane %v1742, 4
      %v1745 = vor.u32 %v1744, %v1740
      %v1746 = vrot.slane %v1745, 4
      %v1748 = vshll.u32 %v1577, 16
      %v1750 = vrot.slane %v1748, 5
      %v1751 = vsel %vm341, %v1746, %v1750
      %v1753 = vshrl.u32 %v1578, 16
      %v1755 = vrot.slane %v1753, 4
      %v1756 = vshll.u32 %v1578, 16
      %v1758 = vrot.slane %v1756, 5
      %v1759 = vor.u32 %v1755, %v1758
      %v1760 = vrot.slane %v1759, 4
      %v1762 = vshll.u32 %v1579, 16
      %v1764 = vrot.slane %v1762, 5
      %v1765 = vsel %vm341, %v1760, %v1764
      %v1766 = vshrl.u32 %v1579, 16
      %v1768 = vrot.slane %v1766, 4
      %v1769 = vor.u32 %v1768, %v1764
      %v1770 = vrot.slane %v1769, 4
      %v1772 = vshll.u32 %v1580, 16
      %v1774 = vrot.slane %v1772, 5
      %v1775 = vsel %vm341, %v1770, %v1774
      %v1777 = vshrl.u32 %v1581, 16
      %v1779 = vrot.slane %v1777, 4
      %v1780 = vshll.u32 %v1581, 16
      %v1782 = vrot.slane %v1780, 5
      %v1783 = vor.u32 %v1779, %v1782
      %v1784 = vrot.slane %v1783, 4
      %v1786 = vshll.u32 %v1582, 16
      %v1788 = vrot.slane %v1786, 5
      %v1789 = vsel %vm341, %v1784, %v1788
      %v1790 = vshrl.u32 %v1582, 16
      %v1792 = vrot.slane %v1790, 4
      %v1793 = vor.u32 %v1792, %v1788
      %v1794 = vrot.slane %v1793, 4
      %v1796 = vshll.u32 %v1583, 16
      %v1798 = vrot.slane %v1796, 5
      %v1799 = vsel %vm341, %v1794, %v1798
      %v1801 = vshrl.u32 %v1584, 16
      %v1803 = vrot.slane %v1801, 4
      %v1804 = vshll.u32 %v1584, 16
      %v1806 = vrot.slane %v1804, 5
      %v1807 = vor.u32 %v1803, %v1806
      %v1808 = vrot.slane %v1807, 4
      %v1810 = vshll.u32 %v1585, 16
      %v1812 = vrot.slane %v1810, 5
      %v1813 = vsel %vm341, %v1808, %v1812
      %v1814 = vshrl.u32 %v1585, 16
      %v1816 = vrot.slane %v1814, 4
      %v1817 = vor.u32 %v1816, %v1812
      %v1818 = vrot.slane %v1817, 4
      %v1820 = vshll.u32 %v1586, 16
      %v1822 = vrot.slane %v1820, 5
      %v1823 = vsel %vm341, %v1818, %v1822
      %v1825 = vshrl.u32 %v1587, 16
      %v1827 = vrot.slane %v1825, 4
      %v1828 = vshll.u32 %v1587, 16
      %v1830 = vrot.slane %v1828, 5
      %v1831 = vor.u32 %v1827, %v1830
      %v1832 = vrot.slane %v1831, 4
      %v1834 = vshll.u32 %v1588, 16
      %v1836 = vrot.slane %v1834, 5
      %v1837 = vsel %vm341, %v1832, %v1836
      %v1838 = vshrl.u32 %v1588, 16
      %v1840 = vrot.slane %v1838, 4
      %v1841 = vor.u32 %v1840, %v1836
      %v1842 = vrot.slane %v1841, 4
      %v1844 = vshll.u32 %v1589, 16
      %v1846 = vrot.slane %v1844, 5
      %v1847 = vsel %vm341, %v1842, %v1846
      %v1849 = vshrl.u32 %v1590, 16
      %v1851 = vrot.slane %v1849, 4
      %v1852 = vshll.u32 %v1590, 16
      %v1854 = vrot.slane %v1852, 5
      %v1855 = vor.u32 %v1851, %v1854
      %v1856 = vrot.slane %v1855, 4
      %v1858 = vshll.u32 %v1591, 16
      %v1860 = vrot.slane %v1858, 5
      %v1861 = vsel %vm341, %v1856, %v1860
      %v1862 = vshrl.u32 %v1591, 16
      %v1864 = vrot.slane %v1862, 4
      %v1865 = vor.u32 %v1864, %v1860
      %v1866 = vrot.slane %v1865, 4
      %v1868 = vshll.u32 %v1592, 16
      %v1870 = vrot.slane %v1868, 5
      %v1871 = vsel %vm341, %v1866, %v1870
      %v1873 = vshrl.u32 %v1593, 16
      %v1875 = vrot.slane %v1873, 4
      %v1876 = vshll.u32 %v1593, 16
      %v1878 = vrot.slane %v1876, 5
      %v1879 = vor.u32 %v1875, %v1878
      %v1880 = vrot.slane %v1879, 4
      %v1882 = vshll.u32 %v1594, 16
      %v1884 = vrot.slane %v1882, 5
      %v1885 = vsel %vm341, %v1880, %v1884
      %v1886 = vshrl.u32 %v1594, 16
      %v1888 = vrot.slane %v1886, 4
      %v1889 = vor.u32 %v1888, %v1884
      %v1890 = vrot.slane %v1889, 4
      %v1892 = vshll.u32 %v1595, 16
      %v1894 = vrot.slane %v1892, 5
      %v1895 = vsel %vm341, %v1890, %v1894
      %v1897 = vshrl.u32 %v1596, 16
      %v1899 = vrot.slane %v1897, 4
      %v1900 = vshll.u32 %v1596, 16
      %v1902 = vrot.slane %v1900, 5
      %v1903 = vor.u32 %v1899, %v1902
      %v1904 = vrot.slane %v1903, 4
      %v1906 = vshll.u32 %v1597, 16
      %v1908 = vrot.slane %v1906, 5
      %v1909 = vsel %vm341, %v1904, %v1908
      %v1910 = vshrl.u32 %v1597, 16
      %v1912 = vrot.slane %v1910, 4
      %v1913 = vor.u32 %v1912, %v1908
      %v1914 = vrot.slane %v1913, 4
      %v1916 = vshll.u32 %v1598, 16
      %v1918 = vrot.slane %v1916, 5
      %v1919 = vsel %vm341, %v1914, %v1918
      %v1921 = vshrl.u32 %v1599, 16
      %v1923 = vrot.slane %v1921, 4
      %v1924 = vshll.u32 %v1599, 16
      %v1926 = vrot.slane %v1924, 5
      %v1927 = vor.u32 %v1923, %v1926
      %v1928 = vrot.slane %v1927, 4
      %v1930 = vshll.u32 %v1600, 16
      %v1932 = vrot.slane %v1930, 5
      %v1933 = vsel %vm341, %v1928, %v1932
      %v1934 = vshrl.u32 %v1600, 16
      %v1936 = vrot.slane %v1934, 4
      %v1937 = vor.u32 %v1936, %v1932
      %v1938 = vrot.slane %v1937, 4
      %v1940 = vshll.u32 %v1601, 16
      %v1942 = vrot.slane %v1940, 5
      %v1943 = vsel %vm341, %v1938, %v1942
      %v1945 = vshrl.u32 %v1602, 16
      %v1947 = vrot.slane %v1945, 4
      %v1948 = vshll.u32 %v1602, 16
      %v1950 = vrot.slane %v1948, 5
      %v1951 = vor.u32 %v1947, %v1950
      %v1952 = vrot.slane %v1951, 4
      %v1954 = vshll.u32 %v1603, 16
      %v1956 = vrot.slane %v1954, 5
      %v1957 = vsel %vm341, %v1952, %v1956
      %v1958 = vshrl.u32 %v1603, 16
      %v1960 = vrot.slane %v1958, 4
      %v1961 = vor.u32 %v1960, %v1956
      %v1962 = vrot.slane %v1961, 4
      %v1964 = vshll.u32 %v1604, 16
      %v1966 = vrot.slane %v1964, 5
      %v1967 = vsel %vm341, %v1962, %v1966
      %v1969 = vshrl.u32 %v1605, 16
      %v1971 = vrot.slane %v1969, 4
      %v1972 = vshll.u32 %v1605, 16
      %v1974 = vrot.slane %v1972, 5
      %v1975 = vor.u32 %v1971, %v1974
      %v1976 = vrot.slane %v1975, 4
      %v1978 = vshll.u32 %v1606, 16
      %v1980 = vrot.slane %v1978, 5
      %v1981 = vsel %vm341, %v1976, %v1980
      %v1982 = vshrl.u32 %v1606, 16
      %v1984 = vrot.slane %v1982, 4
      %v1985 = vor.u32 %v1984, %v1980
      %v1986 = vrot.slane %v1985, 4
      %v1988 = vshll.u32 %v1607, 16
      %v1990 = vrot.slane %v1988, 5
      %v1991 = vsel %vm341, %v1986, %v1990
      %s1992 = scalar_lea.vmem %s1, 16
      %v1993 = vld [vmem:[%s1992] sm:$0xf]
      %v1994 = vunpack.c.l.b16 %v1621
      %v1995 = vunpack.c.l.b16 %v1631
      %v1996 = vunpack.c.l.b16 %v1645
      %v1997 = vunpack.c.l.b16 %v1655
      %v1998 = vunpack.c.l.b16 %v1669
      %v1999 = vunpack.c.l.b16 %v1679
      %v2000 = vunpack.c.l.b16 %v1693
      %v2001 = vunpack.c.l.b16 %v1703
      %v2002 = vunpack.c.l.b16 %v1717
      %v2003 = vunpack.c.l.b16 %v1727
      %v2004 = vunpack.c.l.b16 %v1741
      %v2005 = vunpack.c.l.b16 %v1751
      %v2006 = vunpack.c.l.b16 %v1765
      %v2007 = vunpack.c.l.b16 %v1775
      %v2008 = vunpack.c.l.b16 %v1789
      %v2009 = vunpack.c.l.b16 %v1799
      %v2010 = vunpack.c.l.b16 %v1813
      %v2011 = vunpack.c.l.b16 %v1823
      %v2012 = vunpack.c.l.b16 %v1837
      %v2013 = vunpack.c.l.b16 %v1847
      %v2014 = vunpack.c.l.b16 %v1861
      %v2015 = vunpack.c.l.b16 %v1871
      %v2016 = vunpack.c.l.b16 %v1885
      %v2017 = vunpack.c.l.b16 %v1895
      %v2018 = vunpack.c.l.b16 %v1909
      %v2019 = vunpack.c.l.b16 %v1919
      %v2020 = vunpack.c.l.b16 %v1933
      %v2021 = vunpack.c.l.b16 %v1943
      %v2022 = vunpack.c.l.b16 %v1957
      %v2023 = vunpack.c.l.b16 %v1967
      %v2024 = vunpack.c.l.b16 %v1981
      %v2025 = vunpack.c.l.b16 %v1991
      %v2026 = vpack.c.b16 %v1995, %v1994
      %v2027 = vpack.c.b16 %v1997, %v1996
      %v2028 = vpack.c.b16 %v1999, %v1998
      %v2029 = vpack.c.b16 %v2001, %v2000
      %v2030 = vpack.c.b16 %v2003, %v2002
      %v2031 = vpack.c.b16 %v2005, %v2004
      %v2032 = vpack.c.b16 %v2007, %v2006
      %v2033 = vpack.c.b16 %v2009, %v2008
      %v2034 = vpack.c.b16 %v2011, %v2010
      %v2035 = vpack.c.b16 %v2013, %v2012
      %v2036 = vpack.c.b16 %v2015, %v2014
      %v2037 = vpack.c.b16 %v2017, %v2016
      %v2038 = vpack.c.b16 %v2019, %v2018
      %v2039 = vpack.c.b16 %v2021, %v2020
      %v2040 = vpack.c.b16 %v2023, %v2022
      %v2041 = vpack.c.b16 %v2025, %v2024
      %v2043 = vsel %vm776, %v1993, 0
      %v2046 = vsel %vm776, %v2026, 0
      %v2049 = vsel %vm776, %v2027, 0
      %v2052 = vsel %vm776, %v2028, 0
      %v2055 = vsel %vm776, %v2029, 0
      %v2058 = vsel %vm776, %v2030, 0
      %v2061 = vsel %vm776, %v2031, 0
      %v2064 = vsel %vm776, %v2032, 0
      %v2067 = vsel %vm776, %v2033, 0
      %v2070 = vsel %vm776, %v2034, 0
      %v2073 = vsel %vm776, %v2035, 0
      %v2076 = vsel %vm776, %v2036, 0
      %v2079 = vsel %vm776, %v2037, 0
      %v2082 = vsel %vm776, %v2038, 0
      %v2085 = vsel %vm776, %v2039, 0
      %v2088 = vsel %vm776, %v2040, 0
      %v2091 = vsel %vm776, %v2041, 0
      %2093 = vmatprep.subr.bf16.mxu0 0
      %2094 = vmatpush1.bf16.xpose.msra.mxu0 %v2046
      %2095 = vmatprep.subr.bf16.mxu0 0
      %2096 = vmatpush1.bf16.xpose.msra.mxu0 %v2049
      %2097 = vmatprep.subr.bf16.mxu0 0
      %2098 = vmatpush1.bf16.xpose.msra.mxu0 %v2052
      %2099 = vmatprep.subr.bf16.mxu0 0
      %2100 = vmatpush1.bf16.xpose.msra.mxu0 %v2055
      %2101 = vmatprep.subr.bf16.mxu0 0
      %2102 = vmatpush1.bf16.xpose.msra.mxu0 %v2058
      %2103 = vmatprep.subr.bf16.mxu0 0
      %2104 = vmatpush1.bf16.xpose.msra.mxu0 %v2061
      %2105 = vmatprep.subr.bf16.mxu0 0
      %2106 = vmatpush1.bf16.xpose.msra.mxu0 %v2064
      %2107 = vmatprep.subr.bf16.mxu0 0
      %2108 = vmatpush1.bf16.xpose.msra.mxu0 %v2067
      %2109 = vmatprep.subr.bf16.mxu0 0
      %2110 = vmatpush1.bf16.xpose.msra.mxu0 %v2070
      %2111 = vmatprep.subr.bf16.mxu0 0
      %2112 = vmatpush1.bf16.xpose.msra.mxu0 %v2073
      %2113 = vmatprep.subr.bf16.mxu0 0
      %2114 = vmatpush1.bf16.xpose.msra.mxu0 %v2076
      %2115 = vmatprep.subr.bf16.mxu0 0
      %2116 = vmatpush1.bf16.xpose.msra.mxu0 %v2079
      %2117 = vmatprep.subr.bf16.mxu0 0
      %2118 = vmatpush1.bf16.xpose.msra.mxu0 %v2082
      %2119 = vmatprep.subr.bf16.mxu0 0
      %2120 = vmatpush1.bf16.xpose.msra.mxu0 %v2085
      %2121 = vmatprep.subr.bf16.mxu0 0
      %2122 = vmatpush1.bf16.xpose.msra.mxu0 %v2088
      %2123 = vmatprep.subr.bf16.mxu0 0
      %2124 = vmatpush1.bf16.xpose.msra.mxu0 %v2091
      %2125 = vmatprep.mubr.bf16.mxu0 0
      %2126 = vmatmul.mubr.bf16.gmra.mrb[0].mxu0 %v2043
      %v2127 = vpop.f32.mrb[0].mxu0
      %v2128 = vadd.f32 0.0, %v2127
      %v2129 = vpop.f32.mrb[0].mxu0
      %v2130 = vadd.f32 0.0, %v2129
      %v2131 = vpop.f32.mrb[0].mxu0
      %v2132 = vpop.f32.mrb[0].mxu0
      %2133 = vdwg.mxu0
      %v2134 = vadd.f32 %v1558, %v2128
      %v2135 = vadd.f32 %v1559, %v2130
      %v2136 = vld [vmem:[%s1351] sm:$0xe]
      %v2137 = vld [vmem:[%s1351 + $0xc] sm:$0xe]
      %v2138 = vld [vmem:[%s1351 + $0x18] sm:$0xe]
      %v2139 = vld [vmem:[%s1351 + $0x24] sm:$0xe]
      %v2140 = vld [vmem:[%s1351 + $0x30] sm:$0xe]
      %v2141 = vld [vmem:[%s1351 + $0x3c] sm:$0xe]
      %v2142 = vld [vmem:[%s1351 + $0x48] sm:$0xe]
      %v2143 = vld [vmem:[%s1351 + $0x54] sm:$0xe]
      %v2144 = vld [vmem:[%s1351 + $0x60] sm:$0xe]
      %v2145 = vld [vmem:[%s1351 + $0x6c] sm:$0xe]
      %v2146 = vld [vmem:[%s1351 + $0x78] sm:$0xe]
      %v2147 = vld [vmem:[%s1351 + $0x84] sm:$0xe]
      %v2148 = vld [vmem:[%s1351 + $0x90] sm:$0xe]
      %v2149 = vld [vmem:[%s1351 + $0x9c] sm:$0xe]
      %v2150 = vld [vmem:[%s1351 + $0xa8] sm:$0xe]
      %v2151 = vld [vmem:[%s1351 + $0xb4] sm:$0xe]
      %v2200 = vrot.slane %v2136, 5
      %v2201 = vrot.slane %v2200, 4
      %v2202 = vrot.slane %v1561, 5
      %v2203 = vsel %vm1091, %v2201, %v2202
      %v2204 = vrot.slane %v2202, 4
      %v2205 = vrot.slane %v1562, 5
      %v2206 = vsel %vm1091, %v2204, %v2205
      %v2207 = vrot.slane %v2137, 5
      %v2208 = vrot.slane %v2207, 4
      %v2209 = vrot.slane %v1564, 5
      %v2210 = vsel %vm1091, %v2208, %v2209
      %v2211 = vrot.slane %v2209, 4
      %v2212 = vrot.slane %v1565, 5
      %v2213 = vsel %vm1091, %v2211, %v2212
      %v2214 = vrot.slane %v2138, 5
      %v2215 = vrot.slane %v2214, 4
      %v2216 = vrot.slane %v1567, 5
      %v2217 = vsel %vm1091, %v2215, %v2216
      %v2218 = vrot.slane %v2216, 4
      %v2219 = vrot.slane %v1568, 5
      %v2220 = vsel %vm1091, %v2218, %v2219
      %v2221 = vrot.slane %v2139, 5
      %v2222 = vrot.slane %v2221, 4
      %v2223 = vrot.slane %v1570, 5
      %v2224 = vsel %vm1091, %v2222, %v2223
      %v2225 = vrot.slane %v2223, 4
      %v2226 = vrot.slane %v1571, 5
      %v2227 = vsel %vm1091, %v2225, %v2226
      %v2228 = vrot.slane %v2140, 5
      %v2229 = vrot.slane %v2228, 4
      %v2230 = vrot.slane %v1573, 5
      %v2231 = vsel %vm1091, %v2229, %v2230
      %v2232 = vrot.slane %v2230, 4
      %v2233 = vrot.slane %v1574, 5
      %v2234 = vsel %vm1091, %v2232, %v2233
      %v2235 = vrot.slane %v2141, 5
      %v2236 = vrot.slane %v2235, 4
      %v2237 = vrot.slane %v1576, 5
      %v2238 = vsel %vm1091, %v2236, %v2237
      %v2239 = vrot.slane %v2237, 4
      %v2240 = vrot.slane %v1577, 5
      %v2241 = vsel %vm1091, %v2239, %v2240
      %v2242 = vrot.slane %v2142, 5
      %v2243 = vrot.slane %v2242, 4
      %v2244 = vrot.slane %v1579, 5
      %v2245 = vsel %vm1091, %v2243, %v2244
      %v2246 = vrot.slane %v2244, 4
      %v2247 = vrot.slane %v1580, 5
      %v2248 = vsel %vm1091, %v2246, %v2247
      %v2249 = vrot.slane %v2143, 5
      %v2250 = vrot.slane %v2249, 4
      %v2251 = vrot.slane %v1582, 5
      %v2252 = vsel %vm1091, %v2250, %v2251
      %v2253 = vrot.slane %v2251, 4
      %v2254 = vrot.slane %v1583, 5
      %v2255 = vsel %vm1091, %v2253, %v2254
      %v2256 = vrot.slane %v2144, 5
      %v2257 = vrot.slane %v2256, 4
      %v2258 = vrot.slane %v1585, 5
      %v2259 = vsel %vm1091, %v2257, %v2258
      %v2260 = vrot.slane %v2258, 4
      %v2261 = vrot.slane %v1586, 5
      %v2262 = vsel %vm1091, %v2260, %v2261
      %v2263 = vrot.slane %v2145, 5
      %v2264 = vrot.slane %v2263, 4
      %v2265 = vrot.slane %v1588, 5
      %v2266 = vsel %vm1091, %v2264, %v2265
      %v2267 = vrot.slane %v2265, 4
      %v2268 = vrot.slane %v1589, 5
      %v2269 = vsel %vm1091, %v2267, %v2268
      %v2270 = vrot.slane %v2146, 5
      %v2271 = vrot.slane %v2270, 4
      %v2272 = vrot.slane %v1591, 5
      %v2273 = vsel %vm1091, %v2271, %v2272
      %v2274 = vrot.slane %v2272, 4
      %v2275 = vrot.slane %v1592, 5
      %v2276 = vsel %vm1091, %v2274, %v2275
      %v2277 = vrot.slane %v2147, 5
      %v2278 = vrot.slane %v2277, 4
      %v2279 = vrot.slane %v1594, 5
      %v2280 = vsel %vm1091, %v2278, %v2279
      %v2281 = vrot.slane %v2279, 4
      %v2282 = vrot.slane %v1595, 5
      %v2283 = vsel %vm1091, %v2281, %v2282
      %v2284 = vrot.slane %v2148, 5
      %v2285 = vrot.slane %v2284, 4
      %v2286 = vrot.slane %v1597, 5
      %v2287 = vsel %vm1091, %v2285, %v2286
      %v2288 = vrot.slane %v2286, 4
      %v2289 = vrot.slane %v1598, 5
      %v2290 = vsel %vm1091, %v2288, %v2289
      %v2291 = vrot.slane %v2149, 5
      %v2292 = vrot.slane %v2291, 4
      %v2293 = vrot.slane %v1600, 5
      %v2294 = vsel %vm1091, %v2292, %v2293
      %v2295 = vrot.slane %v2293, 4
      %v2296 = vrot.slane %v1601, 5
      %v2297 = vsel %vm1091, %v2295, %v2296
      %v2298 = vrot.slane %v2150, 5
      %v2299 = vrot.slane %v2298, 4
      %v2300 = vrot.slane %v1603, 5
      %v2301 = vsel %vm1091, %v2299, %v2300
      %v2302 = vrot.slane %v2300, 4
      %v2303 = vrot.slane %v1604, 5
      %v2304 = vsel %vm1091, %v2302, %v2303
      %v2305 = vrot.slane %v2151, 5
      %v2306 = vrot.slane %v2305, 4
      %v2307 = vrot.slane %v1606, 5
      %v2308 = vsel %vm1091, %v2306, %v2307
      %v2309 = vrot.slane %v2307, 4
      %v2310 = vrot.slane %v1607, 5
      %v2311 = vsel %vm1091, %v2309, %v2310
      %s2312 = scalar_lea.vmem %s1, 20
      %v2313 = vld [vmem:[%s2312] sm:$0xf]
      %v2314 = vunpack.c.l.b16 %v2203
      %v2315 = vunpack.c.l.b16 %v2206
      %v2316 = vunpack.c.l.b16 %v2210
      %v2317 = vunpack.c.l.b16 %v2213
      %v2318 = vunpack.c.l.b16 %v2217
      %v2319 = vunpack.c.l.b16 %v2220
      %v2320 = vunpack.c.l.b16 %v2224
      %v2321 = vunpack.c.l.b16 %v2227
      %v2322 = vunpack.c.l.b16 %v2231
      %v2323 = vunpack.c.l.b16 %v2234
      %v2324 = vunpack.c.l.b16 %v2238
      %v2325 = vunpack.c.l.b16 %v2241
      %v2326 = vunpack.c.l.b16 %v2245
      %v2327 = vunpack.c.l.b16 %v2248
      %v2328 = vunpack.c.l.b16 %v2252
      %v2329 = vunpack.c.l.b16 %v2255
      %v2330 = vunpack.c.l.b16 %v2259
      %v2331 = vunpack.c.l.b16 %v2262
      %v2332 = vunpack.c.l.b16 %v2266
      %v2333 = vunpack.c.l.b16 %v2269
      %v2334 = vunpack.c.l.b16 %v2273
      %v2335 = vunpack.c.l.b16 %v2276
      %v2336 = vunpack.c.l.b16 %v2280
      %v2337 = vunpack.c.l.b16 %v2283
      %v2338 = vunpack.c.l.b16 %v2287
      %v2339 = vunpack.c.l.b16 %v2290
      %v2340 = vunpack.c.l.b16 %v2294
      %v2341 = vunpack.c.l.b16 %v2297
      %v2342 = vunpack.c.l.b16 %v2301
      %v2343 = vunpack.c.l.b16 %v2304
      %v2344 = vunpack.c.l.b16 %v2308
      %v2345 = vunpack.c.l.b16 %v2311
      %v2346 = vpack.c.b16 %v2315, %v2314
      %v2347 = vpack.c.b16 %v2317, %v2316
      %v2348 = vpack.c.b16 %v2319, %v2318
      %v2349 = vpack.c.b16 %v2321, %v2320
      %v2350 = vpack.c.b16 %v2323, %v2322
      %v2351 = vpack.c.b16 %v2325, %v2324
      %v2352 = vpack.c.b16 %v2327, %v2326
      %v2353 = vpack.c.b16 %v2329, %v2328
      %v2354 = vpack.c.b16 %v2331, %v2330
      %v2355 = vpack.c.b16 %v2333, %v2332
      %v2356 = vpack.c.b16 %v2335, %v2334
      %v2357 = vpack.c.b16 %v2337, %v2336
      %v2358 = vpack.c.b16 %v2339, %v2338
      %v2359 = vpack.c.b16 %v2341, %v2340
      %v2360 = vpack.c.b16 %v2343, %v2342
      %v2361 = vpack.c.b16 %v2345, %v2344
      %v2363 = vsel %vm776, %v2313, 0
      %v2366 = vsel %vm776, %v2346, 0
      %v2369 = vsel %vm776, %v2347, 0
      %v2372 = vsel %vm776, %v2348, 0
      %v2375 = vsel %vm776, %v2349, 0
      %v2378 = vsel %vm776, %v2350, 0
      %v2381 = vsel %vm776, %v2351, 0
      %v2384 = vsel %vm776, %v2352, 0
      %v2387 = vsel %vm776, %v2353, 0
      %v2390 = vsel %vm776, %v2354, 0
      %v2393 = vsel %vm776, %v2355, 0
      %v2396 = vsel %vm776, %v2356, 0
      %v2399 = vsel %vm776, %v2357, 0
      %v2402 = vsel %vm776, %v2358, 0
      %v2405 = vsel %vm776, %v2359, 0
      %v2408 = vsel %vm776, %v2360, 0
      %v2411 = vsel %vm776, %v2361, 0
      %2413 = vmatprep.subr.bf16.mxu0 0
      %2414 = vmatpush1.bf16.xpose.msra.mxu0 %v2366
      %2415 = vmatprep.subr.bf16.mxu0 0
      %2416 = vmatpush1.bf16.xpose.msra.mxu0 %v2369
      %2417 = vmatprep.subr.bf16.mxu0 0
      %2418 = vmatpush1.bf16.xpose.msra.mxu0 %v2372
      %2419 = vmatprep.subr.bf16.mxu0 0
      %2420 = vmatpush1.bf16.xpose.msra.mxu0 %v2375
      %2421 = vmatprep.subr.bf16.mxu0 0
      %2422 = vmatpush1.bf16.xpose.msra.mxu0 %v2378
      %2423 = vmatprep.subr.bf16.mxu0 0
      %2424 = vmatpush1.bf16.xpose.msra.mxu0 %v2381
      %2425 = vmatprep.subr.bf16.mxu0 0
      %2426 = vmatpush1.bf16.xpose.msra.mxu0 %v2384
      %2427 = vmatprep.subr.bf16.mxu0 0
      %2428 = vmatpush1.bf16.xpose.msra.mxu0 %v2387
      %2429 = vmatprep.subr.bf16.mxu0 0
      %2430 = vmatpush1.bf16.xpose.msra.mxu0 %v2390
      %2431 = vmatprep.subr.bf16.mxu0 0
      %2432 = vmatpush1.bf16.xpose.msra.mxu0 %v2393
      %2433 = vmatprep.subr.bf16.mxu0 0
      %2434 = vmatpush1.bf16.xpose.msra.mxu0 %v2396
      %2435 = vmatprep.subr.bf16.mxu0 0
      %2436 = vmatpush1.bf16.xpose.msra.mxu0 %v2399
      %2437 = vmatprep.subr.bf16.mxu0 0
      %2438 = vmatpush1.bf16.xpose.msra.mxu0 %v2402
      %2439 = vmatprep.subr.bf16.mxu0 0
      %2440 = vmatpush1.bf16.xpose.msra.mxu0 %v2405
      %2441 = vmatprep.subr.bf16.mxu0 0
      %2442 = vmatpush1.bf16.xpose.msra.mxu0 %v2408
      %2443 = vmatprep.subr.bf16.mxu0 0
      %2444 = vmatpush1.bf16.xpose.msra.mxu0 %v2411
      %2445 = vmatprep.mubr.bf16.mxu0 0
      %2446 = vmatmul.mubr.bf16.gmra.mrb[0].mxu0 %v2363
      %v2447 = vpop.f32.mrb[0].mxu0
      %v2448 = vadd.f32 0.0, %v2447
      %v2449 = vpop.f32.mrb[0].mxu0
      %v2450 = vadd.f32 0.0, %v2449
      %v2451 = vpop.f32.mrb[0].mxu0
      %v2452 = vpop.f32.mrb[0].mxu0
      %2453 = vdwg.mxu0
      %v2454 = vadd.f32 %v2134, %v2448
      %v2455 = vadd.f32 %v2135, %v2450
      %s2456 = sadd.s32 %s286, 2
      %s2457 = smul.u32 %s2456, 3
      %s2458 = smul.addr %s2457, 4
      %s2459 = scalar_lea.vmem %s260, %s2458
      %v2460 = vld [vmem:[%s2459] sm:$0xf]
      %v2461 = vld [vmem:[%s2459 + $0x4] sm:$0xf]
      %v2462 = vld [vmem:[%s2459 + $0xc] sm:$0xf]
      %v2463 = vld [vmem:[%s2459 + $0x10] sm:$0xf]
      %v2464 = vld [vmem:[%s2459 + $0x18] sm:$0xf]
      %v2465 = vld [vmem:[%s2459 + $0x1c] sm:$0xf]
      %v2466 = vld [vmem:[%s2459 + $0x24] sm:$0xf]
      %v2467 = vld [vmem:[%s2459 + $0x28] sm:$0xf]
      %v2468 = vld [vmem:[%s2459 + $0x30] sm:$0xf]
      %v2469 = vld [vmem:[%s2459 + $0x34] sm:$0xf]
      %v2470 = vld [vmem:[%s2459 + $0x3c] sm:$0xf]
      %v2471 = vld [vmem:[%s2459 + $0x40] sm:$0xf]
      %v2472 = vld [vmem:[%s2459 + $0x48] sm:$0xf]
      %v2473 = vld [vmem:[%s2459 + $0x4c] sm:$0xf]
      %v2474 = vld [vmem:[%s2459 + $0x54] sm:$0xf]
      %v2475 = vld [vmem:[%s2459 + $0x58] sm:$0xf]
      %v2476 = vld [vmem:[%s2459 + $0x60] sm:$0xf]
      %v2477 = vld [vmem:[%s2459 + $0x64] sm:$0xf]
      %v2478 = vld [vmem:[%s2459 + $0x6c] sm:$0xf]
      %v2479 = vld [vmem:[%s2459 + $0x70] sm:$0xf]
      %v2480 = vld [vmem:[%s2459 + $0x78] sm:$0xf]
      %v2481 = vld [vmem:[%s2459 + $0x7c] sm:$0xf]
      %v2482 = vld [vmem:[%s2459 + $0x84] sm:$0xf]
      %v2483 = vld [vmem:[%s2459 + $0x88] sm:$0xf]
      %v2484 = vld [vmem:[%s2459 + $0x90] sm:$0xf]
      %v2485 = vld [vmem:[%s2459 + $0x94] sm:$0xf]
      %v2486 = vld [vmem:[%s2459 + $0x9c] sm:$0xf]
      %v2487 = vld [vmem:[%s2459 + $0xa0] sm:$0xf]
      %v2488 = vld [vmem:[%s2459 + $0xa8] sm:$0xf]
      %v2489 = vld [vmem:[%s2459 + $0xac] sm:$0xf]
      %v2490 = vld [vmem:[%s2459 + $0xb4] sm:$0xf]
      %v2491 = vld [vmem:[%s2459 + $0xb8] sm:$0xf]
      %s2492 = scalar_lea.vmem %s1, 24
      %v2493 = vld [vmem:[%s2492] sm:$0xf]
      %v2526 = vunpack.c.l.b16 %v2460
      %v2527 = vunpack.c.l.b16 %v2461
      %v2528 = vunpack.c.l.b16 %v2462
      %v2529 = vunpack.c.l.b16 %v2463
      %v2530 = vunpack.c.l.b16 %v2464
      %v2531 = vunpack.c.l.b16 %v2465
      %v2532 = vunpack.c.l.b16 %v2466
      %v2533 = vunpack.c.l.b16 %v2467
      %v2534 = vunpack.c.l.b16 %v2468
      %v2535 = vunpack.c.l.b16 %v2469
      %v2536 = vunpack.c.l.b16 %v2470
      %v2537 = vunpack.c.l.b16 %v2471
      %v2538 = vunpack.c.l.b16 %v2472
      %v2539 = vunpack.c.l.b16 %v2473
      %v2540 = vunpack.c.l.b16 %v2474
      %v2541 = vunpack.c.l.b16 %v2475
      %v2542 = vunpack.c.l.b16 %v2476
      %v2543 = vunpack.c.l.b16 %v2477
      %v2544 = vunpack.c.l.b16 %v2478
      %v2545 = vunpack.c.l.b16 %v2479
      %v2546 = vunpack.c.l.b16 %v2480
      %v2547 = vunpack.c.l.b16 %v2481
      %v2548 = vunpack.c.l.b16 %v2482
      %v2549 = vunpack.c.l.b16 %v2483
      %v2550 = vunpack.c.l.b16 %v2484
      %v2551 = vunpack.c.l.b16 %v2485
      %v2552 = vunpack.c.l.b16 %v2486
      %v2553 = vunpack.c.l.b16 %v2487
      %v2554 = vunpack.c.l.b16 %v2488
      %v2555 = vunpack.c.l.b16 %v2489
      %v2556 = vunpack.c.l.b16 %v2490
      %v2557 = vunpack.c.l.b16 %v2491
      %v2558 = vpack.c.b16 %v2527, %v2526
      %v2559 = vpack.c.b16 %v2529, %v2528
      %v2560 = vpack.c.b16 %v2531, %v2530
      %v2561 = vpack.c.b16 %v2533, %v2532
      %v2562 = vpack.c.b16 %v2535, %v2534
      %v2563 = vpack.c.b16 %v2537, %v2536
      %v2564 = vpack.c.b16 %v2539, %v2538
      %v2565 = vpack.c.b16 %v2541, %v2540
      %v2566 = vpack.c.b16 %v2543, %v2542
      %v2567 = vpack.c.b16 %v2545, %v2544
      %v2568 = vpack.c.b16 %v2547, %v2546
      %v2569 = vpack.c.b16 %v2549, %v2548
      %v2570 = vpack.c.b16 %v2551, %v2550
      %v2571 = vpack.c.b16 %v2553, %v2552
      %v2572 = vpack.c.b16 %v2555, %v2554
      %v2573 = vpack.c.b16 %v2557, %v2556
      %v2575 = vsel %vm776, %v2493, 0
      %v2578 = vsel %vm776, %v2558, 0
      %v2581 = vsel %vm776, %v2559, 0
      %v2584 = vsel %vm776, %v2560, 0
      %v2587 = vsel %vm776, %v2561, 0
      %v2590 = vsel %vm776, %v2562, 0
      %v2593 = vsel %vm776, %v2563, 0
      %v2596 = vsel %vm776, %v2564, 0
      %v2599 = vsel %vm776, %v2565, 0
      %v2602 = vsel %vm776, %v2566, 0
      %v2605 = vsel %vm776, %v2567, 0
      %v2608 = vsel %vm776, %v2568, 0
      %v2611 = vsel %vm776, %v2569, 0
      %v2614 = vsel %vm776, %v2570, 0
      %v2617 = vsel %vm776, %v2571, 0
      %v2620 = vsel %vm776, %v2572, 0
      %v2623 = vsel %vm776, %v2573, 0
      %2625 = vmatprep.subr.bf16.mxu0 0
      %2626 = vmatpush1.bf16.xpose.msra.mxu0 %v2578
      %2627 = vmatprep.subr.bf16.mxu0 0
      %2628 = vmatpush1.bf16.xpose.msra.mxu0 %v2581
      %2629 = vmatprep.subr.bf16.mxu0 0
      %2630 = vmatpush1.bf16.xpose.msra.mxu0 %v2584
      %2631 = vmatprep.subr.bf16.mxu0 0
      %2632 = vmatpush1.bf16.xpose.msra.mxu0 %v2587
      %2633 = vmatprep.subr.bf16.mxu0 0
      %2634 = vmatpush1.bf16.xpose.msra.mxu0 %v2590
      %2635 = vmatprep.subr.bf16.mxu0 0
      %2636 = vmatpush1.bf16.xpose.msra.mxu0 %v2593
      %2637 = vmatprep.subr.bf16.mxu0 0
      %2638 = vmatpush1.bf16.xpose.msra.mxu0 %v2596
      %2639 = vmatprep.subr.bf16.mxu0 0
      %2640 = vmatpush1.bf16.xpose.msra.mxu0 %v2599
      %2641 = vmatprep.subr.bf16.mxu0 0
      %2642 = vmatpush1.bf16.xpose.msra.mxu0 %v2602
      %2643 = vmatprep.subr.bf16.mxu0 0
      %2644 = vmatpush1.bf16.xpose.msra.mxu0 %v2605
      %2645 = vmatprep.subr.bf16.mxu0 0
      %2646 = vmatpush1.bf16.xpose.msra.mxu0 %v2608
      %2647 = vmatprep.subr.bf16.mxu0 0
      %2648 = vmatpush1.bf16.xpose.msra.mxu0 %v2611
      %2649 = vmatprep.subr.bf16.mxu0 0
      %2650 = vmatpush1.bf16.xpose.msra.mxu0 %v2614
      %2651 = vmatprep.subr.bf16.mxu0 0
      %2652 = vmatpush1.bf16.xpose.msra.mxu0 %v2617
      %2653 = vmatprep.subr.bf16.mxu0 0
      %2654 = vmatpush1.bf16.xpose.msra.mxu0 %v2620
      %2655 = vmatprep.subr.bf16.mxu0 0
      %2656 = vmatpush1.bf16.xpose.msra.mxu0 %v2623
      %2657 = vmatprep.mubr.bf16.mxu0 0
      %2658 = vmatmul.mubr.bf16.gmra.mrb[0].mxu0 %v2575
      %v2659 = vpop.f32.mrb[0].mxu0
      %v2660 = vadd.f32 0.0, %v2659
      %v2661 = vpop.f32.mrb[0].mxu0
      %v2662 = vadd.f32 0.0, %v2661
      %v2663 = vpop.f32.mrb[0].mxu0
      %v2664 = vpop.f32.mrb[0].mxu0
      %2665 = vdwg.mxu0
      %v2666 = vadd.f32 %v2454, %v2660
      %v2667 = vadd.f32 %v2455, %v2662
      %v2668 = vld [vmem:[%s2459] sm:$0xf]
      %v2669 = vld [vmem:[%s2459 + $0x4] sm:$0xf]
      %v2670 = vld [vmem:[%s2459 + $0x8] sm:$0x1]
      %v2671 = vld [vmem:[%s2459 + $0xc] sm:$0xf]
      %v2672 = vld [vmem:[%s2459 + $0x10] sm:$0xf]
      %v2673 = vld [vmem:[%s2459 + $0x14] sm:$0x1]
      %v2674 = vld [vmem:[%s2459 + $0x18] sm:$0xf]
      %v2675 = vld [vmem:[%s2459 + $0x1c] sm:$0xf]
      %v2676 = vld [vmem:[%s2459 + $0x20] sm:$0x1]
      %v2677 = vld [vmem:[%s2459 + $0x24] sm:$0xf]
      %v2678 = vld [vmem:[%s2459 + $0x28] sm:$0xf]
      %v2679 = vld [vmem:[%s2459 + $0x2c] sm:$0x1]
      %v2680 = vld [vmem:[%s2459 + $0x30] sm:$0xf]
      %v2681 = vld [vmem:[%s2459 + $0x34] sm:$0xf]
      %v2682 = vld [vmem:[%s2459 + $0x38] sm:$0x1]
      %v2683 = vld [vmem:[%s2459 + $0x3c] sm:$0xf]
      %v2684 = vld [vmem:[%s2459 + $0x40] sm:$0xf]
      %v2685 = vld [vmem:[%s2459 + $0x44] sm:$0x1]
      %v2686 = vld [vmem:[%s2459 + $0x48] sm:$0xf]
      %v2687 = vld [vmem:[%s2459 + $0x4c] sm:$0xf]
      %v2688 = vld [vmem:[%s2459 + $0x50] sm:$0x1]
      %v2689 = vld [vmem:[%s2459 + $0x54] sm:$0xf]
      %v2690 = vld [vmem:[%s2459 + $0x58] sm:$0xf]
      %v2691 = vld [vmem:[%s2459 + $0x5c] sm:$0x1]
      %v2692 = vld [vmem:[%s2459 + $0x60] sm:$0xf]
      %v2693 = vld [vmem:[%s2459 + $0x64] sm:$0xf]
      %v2694 = vld [vmem:[%s2459 + $0x68] sm:$0x1]
      %v2695 = vld [vmem:[%s2459 + $0x6c] sm:$0xf]
      %v2696 = vld [vmem:[%s2459 + $0x70] sm:$0xf]
      %v2697 = vld [vmem:[%s2459 + $0x74] sm:$0x1]
      %v2698 = vld [vmem:[%s2459 + $0x78] sm:$0xf]
      %v2699 = vld [vmem:[%s2459 + $0x7c] sm:$0xf]
      %v2700 = vld [vmem:[%s2459 + $0x80] sm:$0x1]
      %v2701 = vld [vmem:[%s2459 + $0x84] sm:$0xf]
      %v2702 = vld [vmem:[%s2459 + $0x88] sm:$0xf]
      %v2703 = vld [vmem:[%s2459 + $0x8c] sm:$0x1]
      %v2704 = vld [vmem:[%s2459 + $0x90] sm:$0xf]
      %v2705 = vld [vmem:[%s2459 + $0x94] sm:$0xf]
      %v2706 = vld [vmem:[%s2459 + $0x98] sm:$0x1]
      %v2707 = vld [vmem:[%s2459 + $0x9c] sm:$0xf]
      %v2708 = vld [vmem:[%s2459 + $0xa0] sm:$0xf]
      %v2709 = vld [vmem:[%s2459 + $0xa4] sm:$0x1]
      %v2710 = vld [vmem:[%s2459 + $0xa8] sm:$0xf]
      %v2711 = vld [vmem:[%s2459 + $0xac] sm:$0xf]
      %v2712 = vld [vmem:[%s2459 + $0xb0] sm:$0x1]
      %v2713 = vld [vmem:[%s2459 + $0xb4] sm:$0xf]
      %v2714 = vld [vmem:[%s2459 + $0xb8] sm:$0xf]
      %v2715 = vld [vmem:[%s2459 + $0xbc] sm:$0x1]
      %v2717 = vshrl.u32 %v2668, 16
      %v2719 = vrot.slane %v2717, 4
      %v2720 = vshll.u32 %v2668, 16
      %v2722 = vrot.slane %v2720, 5
      %v2723 = vor.u32 %v2719, %v2722
      %v2724 = vrot.slane %v2723, 4
      %v2726 = vshll.u32 %v2669, 16
      %v2728 = vrot.slane %v2726, 5
      %v2729 = vsel %vm341, %v2724, %v2728
      %v2730 = vshrl.u32 %v2669, 16
      %v2732 = vrot.slane %v2730, 4
      %v2733 = vor.u32 %v2732, %v2728
      %v2734 = vrot.slane %v2733, 4
      %v2736 = vshll.u32 %v2670, 16
      %v2738 = vrot.slane %v2736, 5
      %v2739 = vsel %vm341, %v2734, %v2738
      %v2741 = vshrl.u32 %v2671, 16
      %v2743 = vrot.slane %v2741, 4
      %v2744 = vshll.u32 %v2671, 16
      %v2746 = vrot.slane %v2744, 5
      %v2747 = vor.u32 %v2743, %v2746
      %v2748 = vrot.slane %v2747, 4
      %v2750 = vshll.u32 %v2672, 16
      %v2752 = vrot.slane %v2750, 5
      %v2753 = vsel %vm341, %v2748, %v2752
      %v2754 = vshrl.u32 %v2672, 16
      %v2756 = vrot.slane %v2754, 4
      %v2757 = vor.u32 %v2756, %v2752
      %v2758 = vrot.slane %v2757, 4
      %v2760 = vshll.u32 %v2673, 16
      %v2762 = vrot.slane %v2760, 5
      %v2763 = vsel %vm341, %v2758, %v2762
      %v2765 = vshrl.u32 %v2674, 16
      %v2767 = vrot.slane %v2765, 4
      %v2768 = vshll.u32 %v2674, 16
      %v2770 = vrot.slane %v2768, 5
      %v2771 = vor.u32 %v2767, %v2770
      %v2772 = vrot.slane %v2771, 4
      %v2774 = vshll.u32 %v2675, 16
      %v2776 = vrot.slane %v2774, 5
      %v2777 = vsel %vm341, %v2772, %v2776
      %v2778 = vshrl.u32 %v2675, 16
      %v2780 = vrot.slane %v2778, 4
      %v2781 = vor.u32 %v2780, %v2776
      %v2782 = vrot.slane %v2781, 4
      %v2784 = vshll.u32 %v2676, 16
      %v2786 = vrot.slane %v2784, 5
      %v2787 = vsel %vm341, %v2782, %v2786
      %v2789 = vshrl.u32 %v2677, 16
      %v2791 = vrot.slane %v2789, 4
      %v2792 = vshll.u32 %v2677, 16
      %v2794 = vrot.slane %v2792, 5
      %v2795 = vor.u32 %v2791, %v2794
      %v2796 = vrot.slane %v2795, 4
      %v2798 = vshll.u32 %v2678, 16
      %v2800 = vrot.slane %v2798, 5
      %v2801 = vsel %vm341, %v2796, %v2800
      %v2802 = vshrl.u32 %v2678, 16
      %v2804 = vrot.slane %v2802, 4
      %v2805 = vor.u32 %v2804, %v2800
      %v2806 = vrot.slane %v2805, 4
      %v2808 = vshll.u32 %v2679, 16
      %v2810 = vrot.slane %v2808, 5
      %v2811 = vsel %vm341, %v2806, %v2810
      %v2813 = vshrl.u32 %v2680, 16
      %v2815 = vrot.slane %v2813, 4
      %v2816 = vshll.u32 %v2680, 16
      %v2818 = vrot.slane %v2816, 5
      %v2819 = vor.u32 %v2815, %v2818
      %v2820 = vrot.slane %v2819, 4
      %v2822 = vshll.u32 %v2681, 16
      %v2824 = vrot.slane %v2822, 5
      %v2825 = vsel %vm341, %v2820, %v2824
      %v2826 = vshrl.u32 %v2681, 16
      %v2828 = vrot.slane %v2826, 4
      %v2829 = vor.u32 %v2828, %v2824
      %v2830 = vrot.slane %v2829, 4
      %v2832 = vshll.u32 %v2682, 16
      %v2834 = vrot.slane %v2832, 5
      %v2835 = vsel %vm341, %v2830, %v2834
      %v2837 = vshrl.u32 %v2683, 16
      %v2839 = vrot.slane %v2837, 4
      %v2840 = vshll.u32 %v2683, 16
      %v2842 = vrot.slane %v2840, 5
      %v2843 = vor.u32 %v2839, %v2842
      %v2844 = vrot.slane %v2843, 4
      %v2846 = vshll.u32 %v2684, 16
      %v2848 = vrot.slane %v2846, 5
      %v2849 = vsel %vm341, %v2844, %v2848
      %v2850 = vshrl.u32 %v2684, 16
      %v2852 = vrot.slane %v2850, 4
      %v2853 = vor.u32 %v2852, %v2848
      %v2854 = vrot.slane %v2853, 4
      %v2856 = vshll.u32 %v2685, 16
      %v2858 = vrot.slane %v2856, 5
      %v2859 = vsel %vm341, %v2854, %v2858
      %v2861 = vshrl.u32 %v2686, 16
      %v2863 = vrot.slane %v2861, 4
      %v2864 = vshll.u32 %v2686, 16
      %v2866 = vrot.slane %v2864, 5
      %v2867 = vor.u32 %v2863, %v2866
      %v2868 = vrot.slane %v2867, 4
      %v2870 = vshll.u32 %v2687, 16
      %v2872 = vrot.slane %v2870, 5
      %v2873 = vsel %vm341, %v2868, %v2872
      %v2874 = vshrl.u32 %v2687, 16
      %v2876 = vrot.slane %v2874, 4
      %v2877 = vor.u32 %v2876, %v2872
      %v2878 = vrot.slane %v2877, 4
      %v2880 = vshll.u32 %v2688, 16
      %v2882 = vrot.slane %v2880, 5
      %v2883 = vsel %vm341, %v2878, %v2882
      %v2885 = vshrl.u32 %v2689, 16
      %v2887 = vrot.slane %v2885, 4
      %v2888 = vshll.u32 %v2689, 16
      %v2890 = vrot.slane %v2888, 5
      %v2891 = vor.u32 %v2887, %v2890
      %v2892 = vrot.slane %v2891, 4
      %v2894 = vshll.u32 %v2690, 16
      %v2896 = vrot.slane %v2894, 5
      %v2897 = vsel %vm341, %v2892, %v2896
      %v2898 = vshrl.u32 %v2690, 16
      %v2900 = vrot.slane %v2898, 4
      %v2901 = vor.u32 %v2900, %v2896
      %v2902 = vrot.slane %v2901, 4
      %v2904 = vshll.u32 %v2691, 16
      %v2906 = vrot.slane %v2904, 5
      %v2907 = vsel %vm341, %v2902, %v2906
      %v2909 = vshrl.u32 %v2692, 16
      %v2911 = vrot.slane %v2909, 4
      %v2912 = vshll.u32 %v2692, 16
      %v2914 = vrot.slane %v2912, 5
      %v2915 = vor.u32 %v2911, %v2914
      %v2916 = vrot.slane %v2915, 4
      %v2918 = vshll.u32 %v2693, 16
      %v2920 = vrot.slane %v2918, 5
      %v2921 = vsel %vm341, %v2916, %v2920
      %v2922 = vshrl.u32 %v2693, 16
      %v2924 = vrot.slane %v2922, 4
      %v2925 = vor.u32 %v2924, %v2920
      %v2926 = vrot.slane %v2925, 4
      %v2928 = vshll.u32 %v2694, 16
      %v2930 = vrot.slane %v2928, 5
      %v2931 = vsel %vm341, %v2926, %v2930
      %v2933 = vshrl.u32 %v2695, 16
      %v2935 = vrot.slane %v2933, 4
      %v2936 = vshll.u32 %v2695, 16
      %v2938 = vrot.slane %v2936, 5
      %v2939 = vor.u32 %v2935, %v2938
      %v2940 = vrot.slane %v2939, 4
      %v2942 = vshll.u32 %v2696, 16
      %v2944 = vrot.slane %v2942, 5
      %v2945 = vsel %vm341, %v2940, %v2944
      %v2946 = vshrl.u32 %v2696, 16
      %v2948 = vrot.slane %v2946, 4
      %v2949 = vor.u32 %v2948, %v2944
      %v2950 = vrot.slane %v2949, 4
      %v2952 = vshll.u32 %v2697, 16
      %v2954 = vrot.slane %v2952, 5
      %v2955 = vsel %vm341, %v2950, %v2954
      %v2957 = vshrl.u32 %v2698, 16
      %v2959 = vrot.slane %v2957, 4
      %v2960 = vshll.u32 %v2698, 16
      %v2962 = vrot.slane %v2960, 5
      %v2963 = vor.u32 %v2959, %v2962
      %v2964 = vrot.slane %v2963, 4
      %v2966 = vshll.u32 %v2699, 16
      %v2968 = vrot.slane %v2966, 5
      %v2969 = vsel %vm341, %v2964, %v2968
      %v2970 = vshrl.u32 %v2699, 16
      %v2972 = vrot.slane %v2970, 4
      %v2973 = vor.u32 %v2972, %v2968
      %v2974 = vrot.slane %v2973, 4
      %v2976 = vshll.u32 %v2700, 16
      %v2978 = vrot.slane %v2976, 5
      %v2979 = vsel %vm341, %v2974, %v2978
      %v2981 = vshrl.u32 %v2701, 16
      %v2983 = vrot.slane %v2981, 4
      %v2984 = vshll.u32 %v2701, 16
      %v2986 = vrot.slane %v2984, 5
      %v2987 = vor.u32 %v2983, %v2986
      %v2988 = vrot.slane %v2987, 4
      %v2990 = vshll.u32 %v2702, 16
      %v2992 = vrot.slane %v2990, 5
      %v2993 = vsel %vm341, %v2988, %v2992
      %v2994 = vshrl.u32 %v2702, 16
      %v2996 = vrot.slane %v2994, 4
      %v2997 = vor.u32 %v2996, %v2992
      %v2998 = vrot.slane %v2997, 4
      %v3000 = vshll.u32 %v2703, 16
      %v3002 = vrot.slane %v3000, 5
      %v3003 = vsel %vm341, %v2998, %v3002
      %v3005 = vshrl.u32 %v2704, 16
      %v3007 = vrot.slane %v3005, 4
      %v3008 = vshll.u32 %v2704, 16
      %v3010 = vrot.slane %v3008, 5
      %v3011 = vor.u32 %v3007, %v3010
      %v3012 = vrot.slane %v3011, 4
      %v3014 = vshll.u32 %v2705, 16
      %v3016 = vrot.slane %v3014, 5
      %v3017 = vsel %vm341, %v3012, %v3016
      %v3018 = vshrl.u32 %v2705, 16
      %v3020 = vrot.slane %v3018, 4
      %v3021 = vor.u32 %v3020, %v3016
      %v3022 = vrot.slane %v3021, 4
      %v3024 = vshll.u32 %v2706, 16
      %v3026 = vrot.slane %v3024, 5
      %v3027 = vsel %vm341, %v3022, %v3026
      %v3029 = vshrl.u32 %v2707, 16
      %v3031 = vrot.slane %v3029, 4
      %v3032 = vshll.u32 %v2707, 16
      %v3034 = vrot.slane %v3032, 5
      %v3035 = vor.u32 %v3031, %v3034
      %v3036 = vrot.slane %v3035, 4
      %v3038 = vshll.u32 %v2708, 16
      %v3040 = vrot.slane %v3038, 5
      %v3041 = vsel %vm341, %v3036, %v3040
      %v3042 = vshrl.u32 %v2708, 16
      %v3044 = vrot.slane %v3042, 4
      %v3045 = vor.u32 %v3044, %v3040
      %v3046 = vrot.slane %v3045, 4
      %v3048 = vshll.u32 %v2709, 16
      %v3050 = vrot.slane %v3048, 5
      %v3051 = vsel %vm341, %v3046, %v3050
      %v3053 = vshrl.u32 %v2710, 16
      %v3055 = vrot.slane %v3053, 4
      %v3056 = vshll.u32 %v2710, 16
      %v3058 = vrot.slane %v3056, 5
      %v3059 = vor.u32 %v3055, %v3058
      %v3060 = vrot.slane %v3059, 4
      %v3062 = vshll.u32 %v2711, 16
      %v3064 = vrot.slane %v3062, 5
      %v3065 = vsel %vm341, %v3060, %v3064
      %v3066 = vshrl.u32 %v2711, 16
      %v3068 = vrot.slane %v3066, 4
      %v3069 = vor.u32 %v3068, %v3064
      %v3070 = vrot.slane %v3069, 4
      %v3072 = vshll.u32 %v2712, 16
      %v3074 = vrot.slane %v3072, 5
      %v3075 = vsel %vm341, %v3070, %v3074
      %v3077 = vshrl.u32 %v2713, 16
      %v3079 = vrot.slane %v3077, 4
      %v3080 = vshll.u32 %v2713, 16
      %v3082 = vrot.slane %v3080, 5
      %v3083 = vor.u32 %v3079, %v3082
      %v3084 = vrot.slane %v3083, 4
      %v3086 = vshll.u32 %v2714, 16
      %v3088 = vrot.slane %v3086, 5
      %v3089 = vsel %vm341, %v3084, %v3088
      %v3090 = vshrl.u32 %v2714, 16
      %v3092 = vrot.slane %v3090, 4
      %v3093 = vor.u32 %v3092, %v3088
      %v3094 = vrot.slane %v3093, 4
      %v3096 = vshll.u32 %v2715, 16
      %v3098 = vrot.slane %v3096, 5
      %v3099 = vsel %vm341, %v3094, %v3098
      %s3100 = scalar_lea.vmem %s1, 28
      %v3101 = vld [vmem:[%s3100] sm:$0xf]
      %v3102 = vunpack.c.l.b16 %v2729
      %v3103 = vunpack.c.l.b16 %v2739
      %v3104 = vunpack.c.l.b16 %v2753
      %v3105 = vunpack.c.l.b16 %v2763
      %v3106 = vunpack.c.l.b16 %v2777
      %v3107 = vunpack.c.l.b16 %v2787
      %v3108 = vunpack.c.l.b16 %v2801
      %v3109 = vunpack.c.l.b16 %v2811
      %v3110 = vunpack.c.l.b16 %v2825
      %v3111 = vunpack.c.l.b16 %v2835
      %v3112 = vunpack.c.l.b16 %v2849
      %v3113 = vunpack.c.l.b16 %v2859
      %v3114 = vunpack.c.l.b16 %v2873
      %v3115 = vunpack.c.l.b16 %v2883
      %v3116 = vunpack.c.l.b16 %v2897
      %v3117 = vunpack.c.l.b16 %v2907
      %v3118 = vunpack.c.l.b16 %v2921
      %v3119 = vunpack.c.l.b16 %v2931
      %v3120 = vunpack.c.l.b16 %v2945
      %v3121 = vunpack.c.l.b16 %v2955
      %v3122 = vunpack.c.l.b16 %v2969
      %v3123 = vunpack.c.l.b16 %v2979
      %v3124 = vunpack.c.l.b16 %v2993
      %v3125 = vunpack.c.l.b16 %v3003
      %v3126 = vunpack.c.l.b16 %v3017
      %v3127 = vunpack.c.l.b16 %v3027
      %v3128 = vunpack.c.l.b16 %v3041
      %v3129 = vunpack.c.l.b16 %v3051
      %v3130 = vunpack.c.l.b16 %v3065
      %v3131 = vunpack.c.l.b16 %v3075
      %v3132 = vunpack.c.l.b16 %v3089
      %v3133 = vunpack.c.l.b16 %v3099
      %v3134 = vpack.c.b16 %v3103, %v3102
      %v3135 = vpack.c.b16 %v3105, %v3104
      %v3136 = vpack.c.b16 %v3107, %v3106
      %v3137 = vpack.c.b16 %v3109, %v3108
      %v3138 = vpack.c.b16 %v3111, %v3110
      %v3139 = vpack.c.b16 %v3113, %v3112
      %v3140 = vpack.c.b16 %v3115, %v3114
      %v3141 = vpack.c.b16 %v3117, %v3116
      %v3142 = vpack.c.b16 %v3119, %v3118
      %v3143 = vpack.c.b16 %v3121, %v3120
      %v3144 = vpack.c.b16 %v3123, %v3122
      %v3145 = vpack.c.b16 %v3125, %v3124
      %v3146 = vpack.c.b16 %v3127, %v3126
      %v3147 = vpack.c.b16 %v3129, %v3128
      %v3148 = vpack.c.b16 %v3131, %v3130
      %v3149 = vpack.c.b16 %v3133, %v3132
      %v3151 = vsel %vm776, %v3101, 0
      %v3154 = vsel %vm776, %v3134, 0
      %v3157 = vsel %vm776, %v3135, 0
      %v3160 = vsel %vm776, %v3136, 0
      %v3163 = vsel %vm776, %v3137, 0
      %v3166 = vsel %vm776, %v3138, 0
      %v3169 = vsel %vm776, %v3139, 0
      %v3172 = vsel %vm776, %v3140, 0
      %v3175 = vsel %vm776, %v3141, 0
      %v3178 = vsel %vm776, %v3142, 0
      %v3181 = vsel %vm776, %v3143, 0
      %v3184 = vsel %vm776, %v3144, 0
      %v3187 = vsel %vm776, %v3145, 0
      %v3190 = vsel %vm776, %v3146, 0
      %v3193 = vsel %vm776, %v3147, 0
      %v3196 = vsel %vm776, %v3148, 0
      %v3199 = vsel %vm776, %v3149, 0
      %3201 = vmatprep.subr.bf16.mxu0 0
      %3202 = vmatpush1.bf16.xpose.msra.mxu0 %v3154
      %3203 = vmatprep.subr.bf16.mxu0 0
      %3204 = vmatpush1.bf16.xpose.msra.mxu0 %v3157
      %3205 = vmatprep.subr.bf16.mxu0 0
      %3206 = vmatpush1.bf16.xpose.msra.mxu0 %v3160
      %3207 = vmatprep.subr.bf16.mxu0 0
      %3208 = vmatpush1.bf16.xpose.msra.mxu0 %v3163
      %3209 = vmatprep.subr.bf16.mxu0 0
      %3210 = vmatpush1.bf16.xpose.msra.mxu0 %v3166
      %3211 = vmatprep.subr.bf16.mxu0 0
      %3212 = vmatpush1.bf16.xpose.msra.mxu0 %v3169
      %3213 = vmatprep.subr.bf16.mxu0 0
      %3214 = vmatpush1.bf16.xpose.msra.mxu0 %v3172
      %3215 = vmatprep.subr.bf16.mxu0 0
      %3216 = vmatpush1.bf16.xpose.msra.mxu0 %v3175
      %3217 = vmatprep.subr.bf16.mxu0 0
      %3218 = vmatpush1.bf16.xpose.msra.mxu0 %v3178
      %3219 = vmatprep.subr.bf16.mxu0 0
      %3220 = vmatpush1.bf16.xpose.msra.mxu0 %v3181
      %3221 = vmatprep.subr.bf16.mxu0 0
      %3222 = vmatpush1.bf16.xpose.msra.mxu0 %v3184
      %3223 = vmatprep.subr.bf16.mxu0 0
      %3224 = vmatpush1.bf16.xpose.msra.mxu0 %v3187
      %3225 = vmatprep.subr.bf16.mxu0 0
      %3226 = vmatpush1.bf16.xpose.msra.mxu0 %v3190
      %3227 = vmatprep.subr.bf16.mxu0 0
      %3228 = vmatpush1.bf16.xpose.msra.mxu0 %v3193
      %3229 = vmatprep.subr.bf16.mxu0 0
      %3230 = vmatpush1.bf16.xpose.msra.mxu0 %v3196
      %3231 = vmatprep.subr.bf16.mxu0 0
      %3232 = vmatpush1.bf16.xpose.msra.mxu0 %v3199
      %3233 = vmatprep.mubr.bf16.mxu0 0
      %3234 = vmatmul.mubr.bf16.gmra.mrb[0].mxu0 %v3151
      %v3235 = vpop.f32.mrb[0].mxu0
      %v3236 = vadd.f32 0.0, %v3235
      %v3237 = vpop.f32.mrb[0].mxu0
      %v3238 = vadd.f32 0.0, %v3237
      %v3239 = vpop.f32.mrb[0].mxu0
      %v3240 = vpop.f32.mrb[0].mxu0
      %3241 = vdwg.mxu0
      %v3242 = vadd.f32 %v2666, %v3236
      %v3243 = vadd.f32 %v2667, %v3238
      %v3244 = vld [vmem:[%s2459] sm:$0xe]
      %v3245 = vld [vmem:[%s2459 + $0xc] sm:$0xe]
      %v3246 = vld [vmem:[%s2459 + $0x18] sm:$0xe]
      %v3247 = vld [vmem:[%s2459 + $0x24] sm:$0xe]
      %v3248 = vld [vmem:[%s2459 + $0x30] sm:$0xe]
      %v3249 = vld [vmem:[%s2459 + $0x3c] sm:$0xe]
      %v3250 = vld [vmem:[%s2459 + $0x48] sm:$0xe]
      %v3251 = vld [vmem:[%s2459 + $0x54] sm:$0xe]
      %v3252 = vld [vmem:[%s2459 + $0x60] sm:$0xe]
      %v3253 = vld [vmem:[%s2459 + $0x6c] sm:$0xe]
      %v3254 = vld [vmem:[%s2459 + $0x78] sm:$0xe]
      %v3255 = vld [vmem:[%s2459 + $0x84] sm:$0xe]
      %v3256 = vld [vmem:[%s2459 + $0x90] sm:$0xe]
      %v3257 = vld [vmem:[%s2459 + $0x9c] sm:$0xe]
      %v3258 = vld [vmem:[%s2459 + $0xa8] sm:$0xe]
      %v3259 = vld [vmem:[%s2459 + $0xb4] sm:$0xe]
      %v3308 = vrot.slane %v3244, 5
      %v3309 = vrot.slane %v3308, 4
      %v3310 = vrot.slane %v2669, 5
      %v3311 = vsel %vm1091, %v3309, %v3310
      %v3312 = vrot.slane %v3310, 4
      %v3313 = vrot.slane %v2670, 5
      %v3314 = vsel %vm1091, %v3312, %v3313
      %v3315 = vrot.slane %v3245, 5
      %v3316 = vrot.slane %v3315, 4
      %v3317 = vrot.slane %v2672, 5
      %v3318 = vsel %vm1091, %v3316, %v3317
      %v3319 = vrot.slane %v3317, 4
      %v3320 = vrot.slane %v2673, 5
      %v3321 = vsel %vm1091, %v3319, %v3320
      %v3322 = vrot.slane %v3246, 5
      %v3323 = vrot.slane %v3322, 4
      %v3324 = vrot.slane %v2675, 5
      %v3325 = vsel %vm1091, %v3323, %v3324
      %v3326 = vrot.slane %v3324, 4
      %v3327 = vrot.slane %v2676, 5
      %v3328 = vsel %vm1091, %v3326, %v3327
      %v3329 = vrot.slane %v3247, 5
      %v3330 = vrot.slane %v3329, 4
      %v3331 = vrot.slane %v2678, 5
      %v3332 = vsel %vm1091, %v3330, %v3331
      %v3333 = vrot.slane %v3331, 4
      %v3334 = vrot.slane %v2679, 5
      %v3335 = vsel %vm1091, %v3333, %v3334
      %v3336 = vrot.slane %v3248, 5
      %v3337 = vrot.slane %v3336, 4
      %v3338 = vrot.slane %v2681, 5
      %v3339 = vsel %vm1091, %v3337, %v3338
      %v3340 = vrot.slane %v3338, 4
      %v3341 = vrot.slane %v2682, 5
      %v3342 = vsel %vm1091, %v3340, %v3341
      %v3343 = vrot.slane %v3249, 5
      %v3344 = vrot.slane %v3343, 4
      %v3345 = vrot.slane %v2684, 5
      %v3346 = vsel %vm1091, %v3344, %v3345
      %v3347 = vrot.slane %v3345, 4
      %v3348 = vrot.slane %v2685, 5
      %v3349 = vsel %vm1091, %v3347, %v3348
      %v3350 = vrot.slane %v3250, 5
      %v3351 = vrot.slane %v3350, 4
      %v3352 = vrot.slane %v2687, 5
      %v3353 = vsel %vm1091, %v3351, %v3352
      %v3354 = vrot.slane %v3352, 4
      %v3355 = vrot.slane %v2688, 5
      %v3356 = vsel %vm1091, %v3354, %v3355
      %v3357 = vrot.slane %v3251, 5
      %v3358 = vrot.slane %v3357, 4
      %v3359 = vrot.slane %v2690, 5
      %v3360 = vsel %vm1091, %v3358, %v3359
      %v3361 = vrot.slane %v3359, 4
      %v3362 = vrot.slane %v2691, 5
      %v3363 = vsel %vm1091, %v3361, %v3362
      %v3364 = vrot.slane %v3252, 5
      %v3365 = vrot.slane %v3364, 4
      %v3366 = vrot.slane %v2693, 5
      %v3367 = vsel %vm1091, %v3365, %v3366
      %v3368 = vrot.slane %v3366, 4
      %v3369 = vrot.slane %v2694, 5
      %v3370 = vsel %vm1091, %v3368, %v3369
      %v3371 = vrot.slane %v3253, 5
      %v3372 = vrot.slane %v3371, 4
      %v3373 = vrot.slane %v2696, 5
      %v3374 = vsel %vm1091, %v3372, %v3373
      %v3375 = vrot.slane %v3373, 4
      %v3376 = vrot.slane %v2697, 5
      %v3377 = vsel %vm1091, %v3375, %v3376
      %v3378 = vrot.slane %v3254, 5
      %v3379 = vrot.slane %v3378, 4
      %v3380 = vrot.slane %v2699, 5
      %v3381 = vsel %vm1091, %v3379, %v3380
      %v3382 = vrot.slane %v3380, 4
      %v3383 = vrot.slane %v2700, 5
      %v3384 = vsel %vm1091, %v3382, %v3383
      %v3385 = vrot.slane %v3255, 5
      %v3386 = vrot.slane %v3385, 4
      %v3387 = vrot.slane %v2702, 5
      %v3388 = vsel %vm1091, %v3386, %v3387
      %v3389 = vrot.slane %v3387, 4
      %v3390 = vrot.slane %v2703, 5
      %v3391 = vsel %vm1091, %v3389, %v3390
      %v3392 = vrot.slane %v3256, 5
      %v3393 = vrot.slane %v3392, 4
      %v3394 = vrot.slane %v2705, 5
      %v3395 = vsel %vm1091, %v3393, %v3394
      %v3396 = vrot.slane %v3394, 4
      %v3397 = vrot.slane %v2706, 5
      %v3398 = vsel %vm1091, %v3396, %v3397
      %v3399 = vrot.slane %v3257, 5
      %v3400 = vrot.slane %v3399, 4
      %v3401 = vrot.slane %v2708, 5
      %v3402 = vsel %vm1091, %v3400, %v3401
      %v3403 = vrot.slane %v3401, 4
      %v3404 = vrot.slane %v2709, 5
      %v3405 = vsel %vm1091, %v3403, %v3404
      %v3406 = vrot.slane %v3258, 5
      %v3407 = vrot.slane %v3406, 4
      %v3408 = vrot.slane %v2711, 5
      %v3409 = vsel %vm1091, %v3407, %v3408
      %v3410 = vrot.slane %v3408, 4
      %v3411 = vrot.slane %v2712, 5
      %v3412 = vsel %vm1091, %v3410, %v3411
      %v3413 = vrot.slane %v3259, 5
      %v3414 = vrot.slane %v3413, 4
      %v3415 = vrot.slane %v2714, 5
      %v3416 = vsel %vm1091, %v3414, %v3415
      %v3417 = vrot.slane %v3415, 4
      %v3418 = vrot.slane %v2715, 5
      %v3419 = vsel %vm1091, %v3417, %v3418
      %s3420 = scalar_lea.vmem %s1, 32
      %v3421 = vld [vmem:[%s3420] sm:$0xf]
      %v3422 = vunpack.c.l.b16 %v3311
      %v3423 = vunpack.c.l.b16 %v3314
      %v3424 = vunpack.c.l.b16 %v3318
      %v3425 = vunpack.c.l.b16 %v3321
      %v3426 = vunpack.c.l.b16 %v3325
      %v3427 = vunpack.c.l.b16 %v3328
      %v3428 = vunpack.c.l.b16 %v3332
      %v3429 = vunpack.c.l.b16 %v3335
      %v3430 = vunpack.c.l.b16 %v3339
      %v3431 = vunpack.c.l.b16 %v3342
      %v3432 = vunpack.c.l.b16 %v3346
      %v3433 = vunpack.c.l.b16 %v3349
      %v3434 = vunpack.c.l.b16 %v3353
      %v3435 = vunpack.c.l.b16 %v3356
      %v3436 = vunpack.c.l.b16 %v3360
      %v3437 = vunpack.c.l.b16 %v3363
      %v3438 = vunpack.c.l.b16 %v3367
      %v3439 = vunpack.c.l.b16 %v3370
      %v3440 = vunpack.c.l.b16 %v3374
      %v3441 = vunpack.c.l.b16 %v3377
      %v3442 = vunpack.c.l.b16 %v3381
      %v3443 = vunpack.c.l.b16 %v3384
      %v3444 = vunpack.c.l.b16 %v3388
      %v3445 = vunpack.c.l.b16 %v3391
      %v3446 = vunpack.c.l.b16 %v3395
      %v3447 = vunpack.c.l.b16 %v3398
      %v3448 = vunpack.c.l.b16 %v3402
      %v3449 = vunpack.c.l.b16 %v3405
      %v3450 = vunpack.c.l.b16 %v3409
      %v3451 = vunpack.c.l.b16 %v3412
      %v3452 = vunpack.c.l.b16 %v3416
      %v3453 = vunpack.c.l.b16 %v3419
      %v3454 = vpack.c.b16 %v3423, %v3422
      %v3455 = vpack.c.b16 %v3425, %v3424
      %v3456 = vpack.c.b16 %v3427, %v3426
      %v3457 = vpack.c.b16 %v3429, %v3428
      %v3458 = vpack.c.b16 %v3431, %v3430
      %v3459 = vpack.c.b16 %v3433, %v3432
      %v3460 = vpack.c.b16 %v3435, %v3434
      %v3461 = vpack.c.b16 %v3437, %v3436
      %v3462 = vpack.c.b16 %v3439, %v3438
      %v3463 = vpack.c.b16 %v3441, %v3440
      %v3464 = vpack.c.b16 %v3443, %v3442
      %v3465 = vpack.c.b16 %v3445, %v3444
      %v3466 = vpack.c.b16 %v3447, %v3446
      %v3467 = vpack.c.b16 %v3449, %v3448
      %v3468 = vpack.c.b16 %v3451, %v3450
      %v3469 = vpack.c.b16 %v3453, %v3452
      %v3471 = vsel %vm776, %v3421, 0
      %v3474 = vsel %vm776, %v3454, 0
      %v3477 = vsel %vm776, %v3455, 0
      %v3480 = vsel %vm776, %v3456, 0
      %v3483 = vsel %vm776, %v3457, 0
      %v3486 = vsel %vm776, %v3458, 0
      %v3489 = vsel %vm776, %v3459, 0
      %v3492 = vsel %vm776, %v3460, 0
      %v3495 = vsel %vm776, %v3461, 0
      %v3498 = vsel %vm776, %v3462, 0
      %v3501 = vsel %vm776, %v3463, 0
      %v3504 = vsel %vm776, %v3464, 0
      %v3507 = vsel %vm776, %v3465, 0
      %v3510 = vsel %vm776, %v3466, 0
      %v3513 = vsel %vm776, %v3467, 0
      %v3516 = vsel %vm776, %v3468, 0
      %v3519 = vsel %vm776, %v3469, 0
      %3521 = vmatprep.subr.bf16.mxu0 0
      %3522 = vmatpush1.bf16.xpose.msra.mxu0 %v3474
      %3523 = vmatprep.subr.bf16.mxu0 0
      %3524 = vmatpush1.bf16.xpose.msra.mxu0 %v3477
      %3525 = vmatprep.subr.bf16.mxu0 0
      %3526 = vmatpush1.bf16.xpose.msra.mxu0 %v3480
      %3527 = vmatprep.subr.bf16.mxu0 0
      %3528 = vmatpush1.bf16.xpose.msra.mxu0 %v3483
      %3529 = vmatprep.subr.bf16.mxu0 0
      %3530 = vmatpush1.bf16.xpose.msra.mxu0 %v3486
      %3531 = vmatprep.subr.bf16.mxu0 0
      %3532 = vmatpush1.bf16.xpose.msra.mxu0 %v3489
      %3533 = vmatprep.subr.bf16.mxu0 0
      %3534 = vmatpush1.bf16.xpose.msra.mxu0 %v3492
      %3535 = vmatprep.subr.bf16.mxu0 0
      %3536 = vmatpush1.bf16.xpose.msra.mxu0 %v3495
      %3537 = vmatprep.subr.bf16.mxu0 0
      %3538 = vmatpush1.bf16.xpose.msra.mxu0 %v3498
      %3539 = vmatprep.subr.bf16.mxu0 0
      %3540 = vmatpush1.bf16.xpose.msra.mxu0 %v3501
      %3541 = vmatprep.subr.bf16.mxu0 0
      %3542 = vmatpush1.bf16.xpose.msra.mxu0 %v3504
      %3543 = vmatprep.subr.bf16.mxu0 0
      %3544 = vmatpush1.bf16.xpose.msra.mxu0 %v3507
      %3545 = vmatprep.subr.bf16.mxu0 0
      %3546 = vmatpush1.bf16.xpose.msra.mxu0 %v3510
      %3547 = vmatprep.subr.bf16.mxu0 0
      %3548 = vmatpush1.bf16.xpose.msra.mxu0 %v3513
      %3549 = vmatprep.subr.bf16.mxu0 0
      %3550 = vmatpush1.bf16.xpose.msra.mxu0 %v3516
      %3551 = vmatprep.subr.bf16.mxu0 0
      %3552 = vmatpush1.bf16.xpose.msra.mxu0 %v3519
      %3553 = vmatprep.mubr.bf16.mxu0 0
      %3554 = vmatmul.mubr.bf16.gmra.mrb[0].mxu0 %v3471
      %v3555 = vpop.f32.mrb[0].mxu0
      %v3556 = vadd.f32 0.0, %v3555
      %v3557 = vpop.f32.mrb[0].mxu0
      %v3558 = vadd.f32 0.0, %v3557
      %v3559 = vpop.f32.mrb[0].mxu0
      %v3560 = vpop.f32.mrb[0].mxu0
      %3561 = vdwg.mxu0
      %v3562 = vadd.f32 %v3242, %v3556
      %v3563 = vadd.f32 %v3243, %v3558
      %v3564 = vld [vmem:[%s2] sm:$0xff]
      %3566 = vset.pattern.permute.xlu0 0
      %3567 = vperm.xlu0 %3566, %v3564
      %v3568 = vpop.permute.xlu0 %3567
      %v3570 = vadd.f32 %v3562, %v3568
      %v3571 = vadd.f32 %v3563, %v3568
      %v3572 = vmax.f32 %v3570, 0.0
      %v3573 = vmax.f32 %v3571, 0.0
      %3574 = vst [vmem:[%s269] sm:$0xff] %v3572
      %3575 = vst [vmem:[%s269 + $0x8] sm:$0xff] %v3573
      %v3576 = vadd.f32 %v3572, %v3573
      %3577 = vadd.xlane.f32.xlu0 %v3576
      %v3578 = vpop.xlane.xlu0 %3577
      %vm3579 = vcmask 7168
      %3580 = vst.msk [vmem:[%s277] sm:$0xff] %vm3579, %v3578
      %v3581 = vmul.f32 %v3572, %v3572
      %v3582 = vmul.f32 %v3573, %v3573
      %v3583 = vadd.f32 %v3581, %v3582
      %3584 = vadd.xlane.f32.xlu0 %v3583
      %v3585 = vpop.xlane.xlu0 %3584
      %3586 = vst.msk [vmem:[%s284] sm:$0xff] %vm3579, %v3585
      %s3587 = smul.u32 2, %s22
      %p3588 = scmp.lt.s32.totalorder %s21, 1
      %s3589 = scalar_select %p3588, %s21, 1
      %p3590 = scmp.lt.s32.totalorder %s3587, 1
      %s3591 = scalar_select %p3590, %s3587, 1
      %s3592 = smul.addr %s3589, 2
      %s3593 = sadd.s32 %s3591, %s3592
      %s3594 = smul.addr %s3593, 8
      %s3595 = scalar_lea.vmem %s3, %s3594
      %p3596 = scmp.lt.s32.totalorder %s21, 1
      %s3597 = scalar_select %p3596, %s21, 1
      %p3598 = scmp.lt.s32.totalorder %s22, 0
      %s3599 = scalar_select %p3598, %s22, 0
      %s3600 = sadd.s32 %s3599, %s3597
      %s3601 = smul.addr %s3600, 8
      %s3602 = scalar_lea.vmem %s4, %s3601
      %p3603 = scmp.lt.s32.totalorder %s21, 1
      %s3604 = scalar_select %p3603, %s21, 1
      %p3605 = scmp.lt.s32.totalorder %s22, 0
      %s3606 = scalar_select %p3605, %s22, 0
      %s3607 = sadd.s32 %s3606, %s3604
      %s3608 = smul.addr %s3607, 8
      %s3609 = scalar_lea.vmem %s5, %s3608
      // Predicated region
      $region33: #{rbdn_conv_forward.2} parent=31 // pred_check
        %p3610 = pneg %p117
      $region34: #{rbdn_conv_forward.2} parent=31 // pred_check_branch
        %3612 = sbr.rel (%p3610) target = $region36
      $region35: #{rbdn_conv_forward.2} parent=31 // pred_region
        %s3613 = smul.u32 2, %s22
      $region36: #{rbdn_conv_forward.2} parent=31 // pred_fallthru
        _
      // Predicated region
      $region37: #{rbdn_conv_forward.2} parent=31 // pred_check
        %p3614 = pneg %p145
      $region38: #{rbdn_conv_forward.2} parent=31 // pred_check_branch
        %3616 = sbr.rel (%p3614) target = $region40
      $region39: #{rbdn_conv_forward.2} parent=31 // pred_region
        _
      $region40: #{rbdn_conv_forward.2} parent=31 // pred_fallthru
        _
      // Predicated region
      $region41: #{rbdn_conv_forward.2} parent=31 // pred_check
        %p3617 = pneg %p173
      $region42: #{rbdn_conv_forward.2} parent=31 // pred_check_branch
        %3619 = sbr.rel (%p3617) target = $region44
      $region43: #{rbdn_conv_forward.2} parent=31 // pred_region
        _
      $region44: #{rbdn_conv_forward.2} parent=31 // pred_fallthru
        _
    $region32: #{rbdn_conv_forward.2} parent=5 // pred_fallthru
      _
    %p3620 = scmp.le.s32.totalorder 2, %s12
    // Predicated region
    $region45: #{rbdn_conv_forward.2} parent=5 // pred_check
      %p3621 = pneg %p3620
    $region46: #{rbdn_conv_forward.2} parent=5 // pred_check_branch
      %3623 = sbr.rel (%p3621) target = $region48
    $region47: #{rbdn_conv_forward.2} parent=5 // pred_region
      %s3624 = ssub.s32 %s12, 2
      // Predicated region
      $region49: #{rbdn_conv_forward.2} parent=47 // pred_check
        %p3625 = pneg %p123
      $region50: #{rbdn_conv_forward.2} parent=47 // pred_check_branch
        %3627 = sbr.rel (%p3625) target = $region52
      $region51: #{rbdn_conv_forward.2} parent=47 // pred_region
        %s3628 = smul.u32 2, %s24
        %p3629 = scmp.lt.s32.totalorder %s23, 1
        %s3630 = scalar_select %p3629, %s23, 1
        %p3631 = scmp.lt.s32.totalorder %s3628, 1
        %s3632 = scalar_select %p3631, %s3628, 1
        %s3633 = smul.addr %s3630, 2
        %s3634 = sadd.s32 %s3632, %s3633
        %s3635 = smul.addr %s3634, 8
        %s3636 = scalar_lea.vmem %s3, %s3635
      $region52: #{rbdn_conv_forward.2} parent=47 // pred_fallthru
        _
      // Predicated region
      $region53: #{rbdn_conv_forward.2} parent=47 // pred_check
        %p3637 = pneg %p151
      $region54: #{rbdn_conv_forward.2} parent=47 // pred_check_branch
        %3639 = sbr.rel (%p3637) target = $region56
      $region55: #{rbdn_conv_forward.2} parent=47 // pred_region
        %p3640 = scmp.lt.s32.totalorder %s23, 1
        %s3641 = scalar_select %p3640, %s23, 1
        %p3642 = scmp.lt.s32.totalorder %s24, 0
        %s3643 = scalar_select %p3642, %s24, 0
        %s3644 = sadd.s32 %s3643, %s3641
        %s3645 = smul.addr %s3644, 8
        %s3646 = scalar_lea.vmem %s4, %s3645
      $region56: #{rbdn_conv_forward.2} parent=47 // pred_fallthru
        _
      // Predicated region
      $region57: #{rbdn_conv_forward.2} parent=47 // pred_check
        %p3647 = pneg %p179
      $region58: #{rbdn_conv_forward.2} parent=47 // pred_check_branch
        %3649 = sbr.rel (%p3647) target = $region60
      $region59: #{rbdn_conv_forward.2} parent=47 // pred_region
        %p3650 = scmp.lt.s32.totalorder %s23, 1
        %s3651 = scalar_select %p3650, %s23, 1
        %p3652 = scmp.lt.s32.totalorder %s24, 0
        %s3653 = scalar_select %p3652, %s24, 0
        %s3654 = sadd.s32 %s3653, %s3651
        %s3655 = smul.addr %s3654, 8
        %s3656 = scalar_lea.vmem %s5, %s3655
      $region60: #{rbdn_conv_forward.2} parent=47 // pred_fallthru
        _
    $region48: #{rbdn_conv_forward.2} parent=5 // pred_fallthru
      _
  $region6: #{rbdn_conv_forward.2} parent=0 // loop_footer
    %s16 = sadd.s32 1, %s12
  $region7: #{rbdn_conv_forward.2} parent=0 // loop_footer_branch
    %11 = sbr.rel target = $region3
  $region8: #{rbdn_conv_forward.2} parent=0 // loop_exit
    _

</llo_original>
